<compile_context>
chip_gen: v7x
topology: tpu7x:2x2x1
jax: 0.10.0
libtpu: 0.0.40
codegen_flags: <defaults>
</compile_context>

<pallas_src>
import functools
import numpy as np
import jax
import jax.numpy as jnp
from jax.experimental import pallas as pl
from jax.experimental.pallas import tpu as pltpu

BN_EPS = 1e-5
LANE = 128


def _round_up(x, m):
    return (x + m - 1) // m * m


def _smem_spec():
    return pl.BlockSpec(memory_space=pltpu.MemorySpace.SMEM)


def _vmem_spec():
    return pl.BlockSpec(memory_space=pltpu.MemorySpace.VMEM)


# ---------------------------------------------------------------------------
# Fused GNN_node kernel: all layers in one body.
#   per layer:
#     edge_emb = edge_attr @ We + be                    (MXU, lane-dense out)
#     acc[dst[e]] += relu(h[src[e]] + edge_emb[e])      (index gather/scatter)
#     h_in = (1+eps)*h + acc
#     h    = (relu(h_in @ W1' + b1')) @ W2' + b2'       (BN folded into W/b)
#     h    = relu(h)   for all but last layer
# ---------------------------------------------------------------------------
def gnn_node_kernel(num_layer, num_edges,
                    src_ref, dst_ref, scale_ref,                 # SMEM
                    h0_ref, ea_ref,                              # VMEM inputs
                    we_ref, be_ref, w1_ref, b1_ref, w2_ref, b2_ref,  # stacked weights
                    out_ref,                                     # VMEM output
                    h_ref, emsg_ref, acc_ref):                   # VMEM scratch
    h_ref[...] = h0_ref[...]

    for layer in range(num_layer):
        # edge_encoder Linear(7 -> D) on padded [E, Fp] @ [Fp, Dp]
        emsg_ref[...] = jnp.dot(ea_ref[...], we_ref[layer],
                                preferred_element_type=jnp.float32) + be_ref[layer]

        # scatter-add aggregation over edges
        acc_ref[...] = jnp.zeros_like(acc_ref)

        def edge_body(e, carry):
            s = src_ref[e]
            d = dst_ref[e]
            msg = jnp.maximum(h_ref[pl.ds(s, 1), :] + emsg_ref[pl.ds(e, 1), :], 0.0)
            acc_ref[pl.ds(d, 1), :] = acc_ref[pl.ds(d, 1), :] + msg
            return carry

        jax.lax.fori_loop(0, num_edges, edge_body, 0,
                          unroll=bool(num_edges <= 128))

        # (1 + eps) * h + agg, then BN-folded MLP
        h_in = scale_ref[layer] * h_ref[...] + acc_ref[...]
        z1 = jnp.dot(h_in, w1_ref[layer],
                     preferred_element_type=jnp.float32) + b1_ref[layer]
        z1 = jnp.maximum(z1, 0.0)
        h_new = jnp.dot(z1, w2_ref[layer],
                        preferred_element_type=jnp.float32) + b2_ref[layer]
        if layer != num_layer - 1:
            h_new = jnp.maximum(h_new, 0.0)     # outer ReLU on all but last layer
        h_ref[...] = h_new

    out_ref[...] = h_ref[...]


# ---------------------------------------------------------------------------
# Host-side: fold eval-mode BatchNorm into Linear weights, zero-pad to
# lane-dense shapes, stack per-layer weights.
# ---------------------------------------------------------------------------
def fold_and_pad_params(params, Dp, Hp, Fp):
    def pad2(a, rows, cols):
        r, c = a.shape
        return jnp.pad(a, ((0, rows - r), (0, cols - c)))

    we_l, be_l, w1_l, b1_l, w2_l, b2_l, sc_l = [], [], [], [], [], [], []
    for p in params["layers"]:
        s1 = p["bn1_g"] * jax.lax.rsqrt(p["bn1_v"] + BN_EPS)      # (1, 2D)
        w1f = p["w1"] * s1
        b1f = (p["b1"] - p["bn1_m"]) * s1 + p["bn1_b"]
        so = p["bno_g"] * jax.lax.rsqrt(p["bno_v"] + BN_EPS)      # (1, D)
        w2f = p["w2"] * so
        b2f = (p["b2"] - p["bno_m"]) * so + p["bno_b"]

        we_l.append(pad2(p["we"], Fp, Dp))
        be_l.append(pad2(p["be"], 1, Dp))
        w1_l.append(pad2(w1f, Dp, Hp))
        b1_l.append(pad2(b1f, 1, Hp))
        w2_l.append(pad2(w2f, Hp, Dp))
        b2_l.append(pad2(b2f, 1, Dp))
        sc_l.append(1.0 + p["eps"][0, 0])

    return {
        "we": jnp.stack(we_l), "be": jnp.stack(be_l),
        "w1": jnp.stack(w1_l), "b1": jnp.stack(b1_l),
        "w2": jnp.stack(w2_l), "b2": jnp.stack(b2_l),
        "scale": jnp.stack(sc_l).astype(jnp.float32),
    }


# ---------------------------------------------------------------------------
# GNN_node forward (gin, JK='last', residual=False, eval mode)
# ---------------------------------------------------------------------------
def gnn_node_forward(params, x_idx, edge_index, edge_attr):
    N = x_idx.shape[0]
    E = edge_index.shape[1]
    D = params["node_emb"].shape[1]
    F = edge_attr.shape[1]
    L = len(params["layers"])

    Dp = _round_up(D, LANE)        # node / output feature dim -> 128-lane dense
    Hp = _round_up(2 * D, LANE)    # MLP hidden dim            -> 128-lane dense
    Fp = _round_up(F, 8)           # edge feature dim 7 -> 8

    fp = fold_and_pad_params(params, Dp, Hp, Fp)

    src = edge_index[0].astype(jnp.int32)
    dst = edge_index[1].astype(jnp.int32)

    # node_encoder: Embedding(1, D) lookup (host glue), zero-padded to Dp lanes
    h0 = jnp.take(params["node_emb"], x_idx, axis=0)
    h0 = jnp.pad(h0, ((0, 0), (0, Dp - D)))
    ea = jnp.pad(edge_attr, ((0, 0), (0, Fp - F)))

    flops = L * (2 * E * Fp * Dp + 2 * E * Dp + 4 * N * Dp * Hp)
    bytes_accessed = 4 * (2 * N * Dp + E * Fp + 2 * E + L
                          + L * (Fp * Dp + Dp + Dp * Hp + Hp + Hp * Dp + Dp))

    kernel = functools.partial(gnn_node_kernel, L, E)
    out = pl.pallas_call(
        kernel,
        out_shape=jax.ShapeDtypeStruct((N, Dp), jnp.float32),
        in_specs=[_smem_spec(), _smem_spec(), _smem_spec()] + [_vmem_spec()] * 8,
        out_specs=_vmem_spec(),
        scratch_shapes=[
            pltpu.VMEM((N, Dp), jnp.float32),   # h: layer-resident node features
            pltpu.VMEM((E, Dp), jnp.float32),   # per-edge edge embeddings
            pltpu.VMEM((N, Dp), jnp.float32),   # scatter-add accumulator
        ],
        compiler_params=pltpu.CompilerParams(vmem_limit_bytes=32 * 1024 * 1024),
        cost_estimate=pl.CostEstimate(flops=flops, transcendentals=0,
                                      bytes_accessed=bytes_accessed),
    )(src, dst, fp["scale"], h0, ea,
      fp["we"], fp["be"], fp["w1"], fp["b1"], fp["w2"], fp["b2"])

    return out[:, :D]   # drop lane padding
    # TODO(synk): dropout omitted (eval mode => identity)


# ---------------------------------------------------------------------------
# Parameter construction (deterministic, in-script)
# ---------------------------------------------------------------------------
def xavier(key, fan_in, fan_out, shape):
    bound = np.sqrt(6.0 / (fan_in + fan_out))
    return jax.random.uniform(key, shape, jnp.float32, -bound, bound)


def make_params(key, num_layer, emb_dim):
    params = {"node_emb": None, "layers": []}
    key, k = jax.random.split(key)
    params["node_emb"] = jax.random.normal(k, (1, emb_dim), jnp.float32)
    D2 = 2 * emb_dim
    for _ in range(num_layer):
        keys = jax.random.split(key, 15)
        key = keys[0]
        layer = {
            # edge_encoder Linear(7, D): stored as [in, out] so kernel does x@W
            "we": xavier(keys[1], 7, emb_dim, (7, emb_dim)),
            "be": jax.random.normal(keys[2], (1, emb_dim), jnp.float32) * 0.01,
            # mlp Linear(D, 2D)
            "w1": xavier(keys[3], emb_dim, D2, (emb_dim, D2)),
            "b1": jax.random.normal(keys[4], (1, D2), jnp.float32) * 0.01,
            # mlp BatchNorm1d(2D), eval mode (randomized stats exercise BN fold)
            "bn1_g": 1.0 + 0.1 * jax.random.normal(keys[5], (1, D2), jnp.float32),
            "bn1_b": 0.1 * jax.random.normal(keys[6], (1, D2), jnp.float32),
            "bn1_m": 0.1 * jax.random.normal(keys[7], (1, D2), jnp.float32),
            "bn1_v": 1.0 + 0.1 * jnp.abs(jax.random.normal(keys[8], (1, D2), jnp.float32)),
            # mlp Linear(2D, D)
            "w2": xavier(keys[9], D2, emb_dim, (D2, emb_dim)),
            "b2": jax.random.normal(keys[10], (1, emb_dim), jnp.float32) * 0.01,
            # outer BatchNorm1d(D), eval mode
            "bno_g": 1.0 + 0.1 * jax.random.normal(keys[11], (1, emb_dim), jnp.float32),
            "bno_b": 0.1 * jax.random.normal(keys[12], (1, emb_dim), jnp.float32),
            "bno_m": 0.1 * jax.random.normal(keys[13], (1, emb_dim), jnp.float32),
            "bno_v": 1.0 + 0.1 * jnp.abs(jax.random.normal(keys[14], (1, emb_dim), jnp.float32)),
            # GIN eps (torch.Tensor([0]))
            "eps": jnp.zeros((1, 1), jnp.float32),
        }
        params["layers"].append(layer)
    return params


# ---------------------------------------------------------------------------
# Pure-JAX reference (unfolded BN, un-padded) for verification
# ---------------------------------------------------------------------------
def gnn_node_reference(params, x_idx, edge_index, edge_attr):
    N = x_idx.shape[0]
    src, dst = edge_index[0], edge_index[1]
    h = jnp.take(params["node_emb"], x_idx, axis=0)
    num_layer = len(params["layers"])
    for layer, p in enumerate(params["layers"]):
        edge_emb = edge_attr @ p["we"] + p["be"]
        msg = jnp.maximum(h[src] + edge_emb, 0.0)
        agg = jax.ops.segment_sum(msg, dst, num_segments=N)
        h_in = (1.0 + p["eps"][0, 0]) * h + agg
        z1 = h_in @ p["w1"] + p["b1"]
        z1 = p["bn1_g"] * (z1 - p["bn1_m"]) / jnp.sqrt(p["bn1_v"] + BN_EPS) + p["bn1_b"]
        z1 = jnp.maximum(z1, 0.0)
        z2 = z1 @ p["w2"] + p["b2"]
        hh = p["bno_g"] * (z2 - p["bno_m"]) / jnp.sqrt(p["bno_v"] + BN_EPS) + p["bno_b"]
        if layer != num_layer - 1:
            hh = jnp.maximum(hh, 0.0)
        h = hh
    return h


if __name__ == "__main__":
    num_layer = 2
    emb_dim = 32
    N = 16   # nodes
    E = 32   # edges

    key = jax.random.PRNGKey(0)
    kp, ke, ka = jax.random.split(key, 3)

    params = make_params(kp, num_layer, emb_dim)

    # node "features" are indices into Embedding(1, emb_dim) -> all zeros
    x_idx = jnp.zeros((N,), dtype=jnp.int32)
    edge_index = jax.random.randint(ke, (2, E), 0, N, dtype=jnp.int32)
    edge_attr = jax.random.normal(ka, (E, 7), dtype=jnp.float32)

    out = gnn_node_forward(params, x_idx, edge_index, edge_attr)
    out = jax.block_until_ready(out)

    ref = gnn_node_reference(params, x_idx, edge_index, edge_attr)
    assert out.shape == (N, emb_dim)
    np.testing.assert_allclose(np.asarray(out), np.asarray(ref),
                               rtol=1e-4, atol=1e-4)
    print("KERNEL_OK")
</pallas_src>

<mosaic_0001>
module attributes {stable_mosaic.version = 11 : i64} {
  func.func @gnn_node_kernel(%arg0: memref<32xi32, #tpu.memory_space<smem>>, %arg1: memref<32xi32, #tpu.memory_space<smem>>, %arg2: memref<2xf32, #tpu.memory_space<smem>>, %arg3: memref<16x128xf32, #tpu.memory_space<vmem>>, %arg4: memref<32x8xf32, #tpu.memory_space<vmem>>, %arg5: memref<2x8x128xf32, #tpu.memory_space<vmem>>, %arg6: memref<2x1x128xf32, #tpu.memory_space<vmem>>, %arg7: memref<2x128x128xf32, #tpu.memory_space<vmem>>, %arg8: memref<2x1x128xf32, #tpu.memory_space<vmem>>, %arg9: memref<2x128x128xf32, #tpu.memory_space<vmem>>, %arg10: memref<2x1x128xf32, #tpu.memory_space<vmem>>, %arg11: memref<16x128xf32, #tpu.memory_space<vmem>>, %arg12: memref<16x128xf32, #tpu.memory_space<vmem>>, %arg13: memref<32x128xf32, #tpu.memory_space<vmem>>, %arg14: memref<16x128xf32, #tpu.memory_space<vmem>>) attributes {dimension_semantics = [], scalar_prefetch = 0 : i64, scratch_operands = 3 : i64, tpu.core_type = #tpu.core_type<tc>} {
    %c0 = arith.constant 0 : index
    %c0_0 = arith.constant 0 : index
    %0 = vector.load %arg3[%c0, %c0_0] : memref<16x128xf32, #tpu.memory_space<vmem>>, vector<16x128xf32>
    %c0_1 = arith.constant 0 : index
    %c0_2 = arith.constant 0 : index
    %1 = vector.load %arg12[%c0_1, %c0_2] : memref<16x128xf32, #tpu.memory_space<vmem>>, vector<16x128xf32>
    tpu.vector_store %arg12[%c0_1, %c0_2], %0 {strides = array<i32>} : memref<16x128xf32, #tpu.memory_space<vmem>>, vector<16x128xf32>,
    %c0_3 = arith.constant 0 : index
    %c0_4 = arith.constant 0 : index
    %2 = vector.load %arg4[%c0_3, %c0_4] : memref<32x8xf32, #tpu.memory_space<vmem>>, vector<32x8xf32>
    %c0_5 = arith.constant 0 : index
    %c0_6 = arith.constant 0 : index
    %c0_7 = arith.constant 0 : index
    %3 = vector.load %arg5[%c0_5, %c0_6, %c0_7] : memref<2x8x128xf32, #tpu.memory_space<vmem>>, vector<1x8x128xf32>
    %4 = vector.shape_cast %3 : vector<1x8x128xf32> to vector<8x128xf32>
    %cst = arith.constant dense<0.000000e+00> : vector<32x128xf32>
    %5 = tpu.matmul %2, %4, %cst {dimension_numbers = #tpu.dot_dimension_numbers<[1], [0], [0], [1], [0, 0, 1, 1], [], []>} : vector<32x8xf32>, vector<8x128xf32>, vector<32x128xf32> -> vector<32x128xf32>
    %c0_8 = arith.constant 0 : index
    %c0_9 = arith.constant 0 : index
    %c0_10 = arith.constant 0 : index
    %6 = vector.load %arg6[%c0_8, %c0_9, %c0_10] : memref<2x1x128xf32, #tpu.memory_space<vmem>>, vector<1x1x128xf32>
    %7 = vector.shape_cast %6 : vector<1x1x128xf32> to vector<1x128xf32>
    %8 = vector.broadcast %7 : vector<1x128xf32> to vector<32x128xf32>
    %9 = arith.addf %5, %8 : vector<32x128xf32>
    %c0_11 = arith.constant 0 : index
    %c0_12 = arith.constant 0 : index
    %10 = vector.load %arg13[%c0_11, %c0_12] : memref<32x128xf32, #tpu.memory_space<vmem>>, vector<32x128xf32>
    tpu.vector_store %arg13[%c0_11, %c0_12], %9 {strides = array<i32>} : memref<32x128xf32, #tpu.memory_space<vmem>>, vector<32x128xf32>,
    %cst_13 = arith.constant 0.000000e+00 : f32
    %11 = vector.broadcast %cst_13 : f32 to vector<16x128xf32>
    %c0_14 = arith.constant 0 : index
    %c0_15 = arith.constant 0 : index
    %12 = vector.load %arg14[%c0_14, %c0_15] : memref<16x128xf32, #tpu.memory_space<vmem>>, vector<16x128xf32>
    tpu.vector_store %arg14[%c0_14, %c0_15], %11 {strides = array<i32>} : memref<16x128xf32, #tpu.memory_space<vmem>>, vector<16x128xf32>,
    %c0_i32 = arith.constant 0 : i32
    %13 = arith.index_cast %c0_i32 : i32 to index
    %14 = memref.load %arg0[%13] : memref<32xi32, #tpu.memory_space<smem>>
    %15 = arith.index_cast %c0_i32 : i32 to index
    %16 = memref.load %arg1[%15] : memref<32xi32, #tpu.memory_space<smem>>
    %17 = arith.index_cast %14 : i32 to index
    %c0_16 = arith.constant 0 : index
    %18 = vector.load %arg12[%17, %c0_16] : memref<16x128xf32, #tpu.memory_space<vmem>>, vector<1x128xf32>
    %19 = arith.index_cast %c0_i32 : i32 to index
    %c0_17 = arith.constant 0 : index
    %20 = vector.load %arg13[%19, %c0_17] : memref<32x128xf32, #tpu.memory_space<vmem>>, vector<1x128xf32>
    %21 = arith.addf %18, %20 : vector<1x128xf32>
    %cst_18 = arith.constant 0.000000e+00 : f32
    %22 = vector.broadcast %cst_18 : f32 to vector<1x128xf32>
    %23 = arith.maximumf %21, %22 : vector<1x128xf32>
    %24 = arith.index_cast %16 : i32 to index
    %c0_19 = arith.constant 0 : index
    %25 = vector.load %arg14[%24, %c0_19] : memref<16x128xf32, #tpu.memory_space<vmem>>, vector<1x128xf32>
    %26 = arith.addf %25, %23 : vector<1x128xf32>
    %27 = arith.index_cast %16 : i32 to index
    %c0_20 = arith.constant 0 : index
    %28 = vector.load %arg14[%27, %c0_20] : memref<16x128xf32, #tpu.memory_space<vmem>>, vector<1x128xf32>
    tpu.vector_store %arg14[%27, %c0_20], %26 {strides = array<i32>} : memref<16x128xf32, #tpu.memory_space<vmem>>, vector<1x128xf32>,
    %c1_i32 = arith.constant 1 : i32
    %29 = arith.index_cast %c1_i32 : i32 to index
    %30 = memref.load %arg0[%29] : memref<32xi32, #tpu.memory_space<smem>>
    %31 = arith.index_cast %c1_i32 : i32 to index
    %32 = memref.load %arg1[%31] : memref<32xi32, #tpu.memory_space<smem>>
    %33 = arith.index_cast %30 : i32 to index
    %c0_21 = arith.constant 0 : index
    %34 = vector.load %arg12[%33, %c0_21] : memref<16x128xf32, #tpu.memory_space<vmem>>, vector<1x128xf32>
    %35 = arith.index_cast %c1_i32 : i32 to index
    %c0_22 = arith.constant 0 : index
    %36 = vector.load %arg13[%35, %c0_22] : memref<32x128xf32, #tpu.memory_space<vmem>>, vector<1x128xf32>
    %37 = arith.addf %34, %36 : vector<1x128xf32>
    %cst_23 = arith.constant 0.000000e+00 : f32
    %38 = vector.broadcast %cst_23 : f32 to vector<1x128xf32>
    %39 = arith.maximumf %37, %38 : vector<1x128xf32>
    %40 = arith.index_cast %32 : i32 to index
    %c0_24 = arith.constant 0 : index
    %41 = vector.load %arg14[%40, %c0_24] : memref<16x128xf32, #tpu.memory_space<vmem>>, vector<1x128xf32>
    %42 = arith.addf %41, %39 : vector<1x128xf32>
    %43 = arith.index_cast %32 : i32 to index
    %c0_25 = arith.constant 0 : index
    %44 = vector.load %arg14[%43, %c0_25] : memref<16x128xf32, #tpu.memory_space<vmem>>, vector<1x128xf32>
    tpu.vector_store %arg14[%43, %c0_25], %42 {strides = array<i32>} : memref<16x128xf32, #tpu.memory_space<vmem>>, vector<1x128xf32>,
    %c2_i32 = arith.constant 2 : i32
    %45 = arith.index_cast %c2_i32 : i32 to index
    %46 = memref.load %arg0[%45] : memref<32xi32, #tpu.memory_space<smem>>
    %47 = arith.index_cast %c2_i32 : i32 to index
    %48 = memref.load %arg1[%47] : memref<32xi32, #tpu.memory_space<smem>>
    %49 = arith.index_cast %46 : i32 to index
    %c0_26 = arith.constant 0 : index
    %50 = vector.load %arg12[%49, %c0_26] : memref<16x128xf32, #tpu.memory_space<vmem>>, vector<1x128xf32>
    %51 = arith.index_cast %c2_i32 : i32 to index
    %c0_27 = arith.constant 0 : index
    %52 = vector.load %arg13[%51, %c0_27] : memref<32x128xf32, #tpu.memory_space<vmem>>, vector<1x128xf32>
    %53 = arith.addf %50, %52 : vector<1x128xf32>
    %cst_28 = arith.constant 0.000000e+00 : f32
    %54 = vector.broadcast %cst_28 : f32 to vector<1x128xf32>
    %55 = arith.maximumf %53, %54 : vector<1x128xf32>
    %56 = arith.index_cast %48 : i32 to index
    %c0_29 = arith.constant 0 : index
    %57 = vector.load %arg14[%56, %c0_29] : memref<16x128xf32, #tpu.memory_space<vmem>>, vector<1x128xf32>
    %58 = arith.addf %57, %55 : vector<1x128xf32>
    %59 = arith.index_cast %48 : i32 to index
    %c0_30 = arith.constant 0 : index
    %60 = vector.load %arg14[%59, %c0_30] : memref<16x128xf32, #tpu.memory_space<vmem>>, vector<1x128xf32>
    tpu.vector_store %arg14[%59, %c0_30], %58 {strides = array<i32>} : memref<16x128xf32, #tpu.memory_space<vmem>>, vector<1x128xf32>,
    %c3_i32 = arith.constant 3 : i32
    %61 = arith.index_cast %c3_i32 : i32 to index
    %62 = memref.load %arg0[%61] : memref<32xi32, #tpu.memory_space<smem>>
    %63 = arith.index_cast %c3_i32 : i32 to index
    %64 = memref.load %arg1[%63] : memref<32xi32, #tpu.memory_space<smem>>
    %65 = arith.index_cast %62 : i32 to index
    %c0_31 = arith.constant 0 : index
    %66 = vector.load %arg12[%65, %c0_31] : memref<16x128xf32, #tpu.memory_space<vmem>>, vector<1x128xf32>
    %67 = arith.index_cast %c3_i32 : i32 to index
    %c0_32 = arith.constant 0 : index
    %68 = vector.load %arg13[%67, %c0_32] : memref<32x128xf32, #tpu.memory_space<vmem>>, vector<1x128xf32>
    %69 = arith.addf %66, %68 : vector<1x128xf32>
    %cst_33 = arith.constant 0.000000e+00 : f32
    %70 = vector.broadcast %cst_33 : f32 to vector<1x128xf32>
    %71 = arith.maximumf %69, %70 : vector<1x128xf32>
    %72 = arith.index_cast %64 : i32 to index
    %c0_34 = arith.constant 0 : index
    %73 = vector.load %arg14[%72, %c0_34] : memref<16x128xf32, #tpu.memory_space<vmem>>, vector<1x128xf32>
    %74 = arith.addf %73, %71 : vector<1x128xf32>
    %75 = arith.index_cast %64 : i32 to index
    %c0_35 = arith.constant 0 : index
    %76 = vector.load %arg14[%75, %c0_35] : memref<16x128xf32, #tpu.memory_space<vmem>>, vector<1x128xf32>
    tpu.vector_store %arg14[%75, %c0_35], %74 {strides = array<i32>} : memref<16x128xf32, #tpu.memory_space<vmem>>, vector<1x128xf32>,
    %c4_i32 = arith.constant 4 : i32
    %77 = arith.index_cast %c4_i32 : i32 to index
    %78 = memref.load %arg0[%77] : memref<32xi32, #tpu.memory_space<smem>>
    %79 = arith.index_cast %c4_i32 : i32 to index
    %80 = memref.load %arg1[%79] : memref<32xi32, #tpu.memory_space<smem>>
    %81 = arith.index_cast %78 : i32 to index
    %c0_36 = arith.constant 0 : index
    %82 = vector.load %arg12[%81, %c0_36] : memref<16x128xf32, #tpu.memory_space<vmem>>, vector<1x128xf32>
    %83 = arith.index_cast %c4_i32 : i32 to index
    %c0_37 = arith.constant 0 : index
    %84 = vector.load %arg13[%83, %c0_37] : memref<32x128xf32, #tpu.memory_space<vmem>>, vector<1x128xf32>
    %85 = arith.addf %82, %84 : vector<1x128xf32>
    %cst_38 = arith.constant 0.000000e+00 : f32
    %86 = vector.broadcast %cst_38 : f32 to vector<1x128xf32>
    %87 = arith.maximumf %85, %86 : vector<1x128xf32>
    %88 = arith.index_cast %80 : i32 to index
    %c0_39 = arith.constant 0 : index
    %89 = vector.load %arg14[%88, %c0_39] : memref<16x128xf32, #tpu.memory_space<vmem>>, vector<1x128xf32>
    %90 = arith.addf %89, %87 : vector<1x128xf32>
    %91 = arith.index_cast %80 : i32 to index
    %c0_40 = arith.constant 0 : index
    %92 = vector.load %arg14[%91, %c0_40] : memref<16x128xf32, #tpu.memory_space<vmem>>, vector<1x128xf32>
    tpu.vector_store %arg14[%91, %c0_40], %90 {strides = array<i32>} : memref<16x128xf32, #tpu.memory_space<vmem>>, vector<1x128xf32>,
    %c5_i32 = arith.constant 5 : i32
    %93 = arith.index_cast %c5_i32 : i32 to index
    %94 = memref.load %arg0[%93] : memref<32xi32, #tpu.memory_space<smem>>
    %95 = arith.index_cast %c5_i32 : i32 to index
    %96 = memref.load %arg1[%95] : memref<32xi32, #tpu.memory_space<smem>>
    %97 = arith.index_cast %94 : i32 to index
    %c0_41 = arith.constant 0 : index
    %98 = vector.load %arg12[%97, %c0_41] : memref<16x128xf32, #tpu.memory_space<vmem>>, vector<1x128xf32>
    %99 = arith.index_cast %c5_i32 : i32 to index
    %c0_42 = arith.constant 0 : index
    %100 = vector.load %arg13[%99, %c0_42] : memref<32x128xf32, #tpu.memory_space<vmem>>, vector<1x128xf32>
    %101 = arith.addf %98, %100 : vector<1x128xf32>
    %cst_43 = arith.constant 0.000000e+00 : f32
    %102 = vector.broadcast %cst_43 : f32 to vector<1x128xf32>
    %103 = arith.maximumf %101, %102 : vector<1x128xf32>
    %104 = arith.index_cast %96 : i32 to index
    %c0_44 = arith.constant 0 : index
    %105 = vector.load %arg14[%104, %c0_44] : memref<16x128xf32, #tpu.memory_space<vmem>>, vector<1x128xf32>
    %106 = arith.addf %105, %103 : vector<1x128xf32>
    %107 = arith.index_cast %96 : i32 to index
    %c0_45 = arith.constant 0 : index
    %108 = vector.load %arg14[%107, %c0_45] : memref<16x128xf32, #tpu.memory_space<vmem>>, vector<1x128xf32>
    tpu.vector_store %arg14[%107, %c0_45], %106 {strides = array<i32>} : memref<16x128xf32, #tpu.memory_space<vmem>>, vector<1x128xf32>,
    %c6_i32 = arith.constant 6 : i32
    %109 = arith.index_cast %c6_i32 : i32 to index
    %110 = memref.load %arg0[%109] : memref<32xi32, #tpu.memory_space<smem>>
    %111 = arith.index_cast %c6_i32 : i32 to index
    %112 = memref.load %arg1[%111] : memref<32xi32, #tpu.memory_space<smem>>
    %113 = arith.index_cast %110 : i32 to index
    %c0_46 = arith.constant 0 : index
    %114 = vector.load %arg12[%113, %c0_46] : memref<16x128xf32, #tpu.memory_space<vmem>>, vector<1x128xf32>
    %115 = arith.index_cast %c6_i32 : i32 to index
    %c0_47 = arith.constant 0 : index
    %116 = vector.load %arg13[%115, %c0_47] : memref<32x128xf32, #tpu.memory_space<vmem>>, vector<1x128xf32>
    %117 = arith.addf %114, %116 : vector<1x128xf32>
    %cst_48 = arith.constant 0.000000e+00 : f32
    %118 = vector.broadcast %cst_48 : f32 to vector<1x128xf32>
    %119 = arith.maximumf %117, %118 : vector<1x128xf32>
    %120 = arith.index_cast %112 : i32 to index
    %c0_49 = arith.constant 0 : index
    %121 = vector.load %arg14[%120, %c0_49] : memref<16x128xf32, #tpu.memory_space<vmem>>, vector<1x128xf32>
    %122 = arith.addf %121, %119 : vector<1x128xf32>
    %123 = arith.index_cast %112 : i32 to index
    %c0_50 = arith.constant 0 : index
    %124 = vector.load %arg14[%123, %c0_50] : memref<16x128xf32, #tpu.memory_space<vmem>>, vector<1x128xf32>
    tpu.vector_store %arg14[%123, %c0_50], %122 {strides = array<i32>} : memref<16x128xf32, #tpu.memory_space<vmem>>, vector<1x128xf32>,
    %c7_i32 = arith.constant 7 : i32
    %125 = arith.index_cast %c7_i32 : i32 to index
    %126 = memref.load %arg0[%125] : memref<32xi32, #tpu.memory_space<smem>>
    %127 = arith.index_cast %c7_i32 : i32 to index
    %128 = memref.load %arg1[%127] : memref<32xi32, #tpu.memory_space<smem>>
    %129 = arith.index_cast %126 : i32 to index
    %c0_51 = arith.constant 0 : index
    %130 = vector.load %arg12[%129, %c0_51] : memref<16x128xf32, #tpu.memory_space<vmem>>, vector<1x128xf32>
    %131 = arith.index_cast %c7_i32 : i32 to index
    %c0_52 = arith.constant 0 : index
    %132 = vector.load %arg13[%131, %c0_52] : memref<32x128xf32, #tpu.memory_space<vmem>>, vector<1x128xf32>
    %133 = arith.addf %130, %132 : vector<1x128xf32>
    %cst_53 = arith.constant 0.000000e+00 : f32
    %134 = vector.broadcast %cst_53 : f32 to vector<1x128xf32>
    %135 = arith.maximumf %133, %134 : vector<1x128xf32>
    %136 = arith.index_cast %128 : i32 to index
    %c0_54 = arith.constant 0 : index
    %137 = vector.load %arg14[%136, %c0_54] : memref<16x128xf32, #tpu.memory_space<vmem>>, vector<1x128xf32>
    %138 = arith.addf %137, %135 : vector<1x128xf32>
    %139 = arith.index_cast %128 : i32 to index
    %c0_55 = arith.constant 0 : index
    %140 = vector.load %arg14[%139, %c0_55] : memref<16x128xf32, #tpu.memory_space<vmem>>, vector<1x128xf32>
    tpu.vector_store %arg14[%139, %c0_55], %138 {strides = array<i32>} : memref<16x128xf32, #tpu.memory_space<vmem>>, vector<1x128xf32>,
    %c8_i32 = arith.constant 8 : i32
    %141 = arith.index_cast %c8_i32 : i32 to index
    %142 = memref.load %arg0[%141] : memref<32xi32, #tpu.memory_space<smem>>
    %143 = arith.index_cast %c8_i32 : i32 to index
    %144 = memref.load %arg1[%143] : memref<32xi32, #tpu.memory_space<smem>>
    %145 = arith.index_cast %142 : i32 to index
    %c0_56 = arith.constant 0 : index
    %146 = vector.load %arg12[%145, %c0_56] : memref<16x128xf32, #tpu.memory_space<vmem>>, vector<1x128xf32>
    %147 = arith.index_cast %c8_i32 : i32 to index
    %c0_57 = arith.constant 0 : index
    %148 = vector.load %arg13[%147, %c0_57] : memref<32x128xf32, #tpu.memory_space<vmem>>, vector<1x128xf32>
    %149 = arith.addf %146, %148 : vector<1x128xf32>
    %cst_58 = arith.constant 0.000000e+00 : f32
    %150 = vector.broadcast %cst_58 : f32 to vector<1x128xf32>
    %151 = arith.maximumf %149, %150 : vector<1x128xf32>
    %152 = arith.index_cast %144 : i32 to index
    %c0_59 = arith.constant 0 : index
    %153 = vector.load %arg14[%152, %c0_59] : memref<16x128xf32, #tpu.memory_space<vmem>>, vector<1x128xf32>
    %154 = arith.addf %153, %151 : vector<1x128xf32>
    %155 = arith.index_cast %144 : i32 to index
    %c0_60 = arith.constant 0 : index
    %156 = vector.load %arg14[%155, %c0_60] : memref<16x128xf32, #tpu.memory_space<vmem>>, vector<1x128xf32>
    tpu.vector_store %arg14[%155, %c0_60], %154 {strides = array<i32>} : memref<16x128xf32, #tpu.memory_space<vmem>>, vector<1x128xf32>,
    %c9_i32 = arith.constant 9 : i32
    %157 = arith.index_cast %c9_i32 : i32 to index
    %158 = memref.load %arg0[%157] : memref<32xi32, #tpu.memory_space<smem>>
    %159 = arith.index_cast %c9_i32 : i32 to index
    %160 = memref.load %arg1[%159] : memref<32xi32, #tpu.memory_space<smem>>
    %161 = arith.index_cast %158 : i32 to index
    %c0_61 = arith.constant 0 : index
    %162 = vector.load %arg12[%161, %c0_61] : memref<16x128xf32, #tpu.memory_space<vmem>>, vector<1x128xf32>
    %163 = arith.index_cast %c9_i32 : i32 to index
    %c0_62 = arith.constant 0 : index
    %164 = vector.load %arg13[%163, %c0_62] : memref<32x128xf32, #tpu.memory_space<vmem>>, vector<1x128xf32>
    %165 = arith.addf %162, %164 : vector<1x128xf32>
    %cst_63 = arith.constant 0.000000e+00 : f32
    %166 = vector.broadcast %cst_63 : f32 to vector<1x128xf32>
    %167 = arith.maximumf %165, %166 : vector<1x128xf32>
    %168 = arith.index_cast %160 : i32 to index
    %c0_64 = arith.constant 0 : index
    %169 = vector.load %arg14[%168, %c0_64] : memref<16x128xf32, #tpu.memory_space<vmem>>, vector<1x128xf32>
    %170 = arith.addf %169, %167 : vector<1x128xf32>
    %171 = arith.index_cast %160 : i32 to index
    %c0_65 = arith.constant 0 : index
    %172 = vector.load %arg14[%171, %c0_65] : memref<16x128xf32, #tpu.memory_space<vmem>>, vector<1x128xf32>
    tpu.vector_store %arg14[%171, %c0_65], %170 {strides = array<i32>} : memref<16x128xf32, #tpu.memory_space<vmem>>, vector<1x128xf32>,
    %c10_i32 = arith.constant 10 : i32
    %173 = arith.index_cast %c10_i32 : i32 to index
    %174 = memref.load %arg0[%173] : memref<32xi32, #tpu.memory_space<smem>>
    %175 = arith.index_cast %c10_i32 : i32 to index
    %176 = memref.load %arg1[%175] : memref<32xi32, #tpu.memory_space<smem>>
    %177 = arith.index_cast %174 : i32 to index
    %c0_66 = arith.constant 0 : index
    %178 = vector.load %arg12[%177, %c0_66] : memref<16x128xf32, #tpu.memory_space<vmem>>, vector<1x128xf32>
    %179 = arith.index_cast %c10_i32 : i32 to index
    %c0_67 = arith.constant 0 : index
    %180 = vector.load %arg13[%179, %c0_67] : memref<32x128xf32, #tpu.memory_space<vmem>>, vector<1x128xf32>
    %181 = arith.addf %178, %180 : vector<1x128xf32>
    %cst_68 = arith.constant 0.000000e+00 : f32
    %182 = vector.broadcast %cst_68 : f32 to vector<1x128xf32>
    %183 = arith.maximumf %181, %182 : vector<1x128xf32>
    %184 = arith.index_cast %176 : i32 to index
    %c0_69 = arith.constant 0 : index
    %185 = vector.load %arg14[%184, %c0_69] : memref<16x128xf32, #tpu.memory_space<vmem>>, vector<1x128xf32>
    %186 = arith.addf %185, %183 : vector<1x128xf32>
    %187 = arith.index_cast %176 : i32 to index
    %c0_70 = arith.constant 0 : index
    %188 = vector.load %arg14[%187, %c0_70] : memref<16x128xf32, #tpu.memory_space<vmem>>, vector<1x128xf32>
    tpu.vector_store %arg14[%187, %c0_70], %186 {strides = array<i32>} : memref<16x128xf32, #tpu.memory_space<vmem>>, vector<1x128xf32>,
    %c11_i32 = arith.constant 11 : i32
    %189 = arith.index_cast %c11_i32 : i32 to index
    %190 = memref.load %arg0[%189] : memref<32xi32, #tpu.memory_space<smem>>
    %191 = arith.index_cast %c11_i32 : i32 to index
    %192 = memref.load %arg1[%191] : memref<32xi32, #tpu.memory_space<smem>>
    %193 = arith.index_cast %190 : i32 to index
    %c0_71 = arith.constant 0 : index
    %194 = vector.load %arg12[%193, %c0_71] : memref<16x128xf32, #tpu.memory_space<vmem>>, vector<1x128xf32>
    %195 = arith.index_cast %c11_i32 : i32 to index
    %c0_72 = arith.constant 0 : index
    %196 = vector.load %arg13[%195, %c0_72] : memref<32x128xf32, #tpu.memory_space<vmem>>, vector<1x128xf32>
    %197 = arith.addf %194, %196 : vector<1x128xf32>
    %cst_73 = arith.constant 0.000000e+00 : f32
    %198 = vector.broadcast %cst_73 : f32 to vector<1x128xf32>
    %199 = arith.maximumf %197, %198 : vector<1x128xf32>
    %200 = arith.index_cast %192 : i32 to index
    %c0_74 = arith.constant 0 : index
    %201 = vector.load %arg14[%200, %c0_74] : memref<16x128xf32, #tpu.memory_space<vmem>>, vector<1x128xf32>
    %202 = arith.addf %201, %199 : vector<1x128xf32>
    %203 = arith.index_cast %192 : i32 to index
    %c0_75 = arith.constant 0 : index
    %204 = vector.load %arg14[%203, %c0_75] : memref<16x128xf32, #tpu.memory_space<vmem>>, vector<1x128xf32>
    tpu.vector_store %arg14[%203, %c0_75], %202 {strides = array<i32>} : memref<16x128xf32, #tpu.memory_space<vmem>>, vector<1x128xf32>,
    %c12_i32 = arith.constant 12 : i32
    %205 = arith.index_cast %c12_i32 : i32 to index
    %206 = memref.load %arg0[%205] : memref<32xi32, #tpu.memory_space<smem>>
    %207 = arith.index_cast %c12_i32 : i32 to index
    %208 = memref.load %arg1[%207] : memref<32xi32, #tpu.memory_space<smem>>
    %209 = arith.index_cast %206 : i32 to index
    %c0_76 = arith.constant 0 : index
    %210 = vector.load %arg12[%209, %c0_76] : memref<16x128xf32, #tpu.memory_space<vmem>>, vector<1x128xf32>
    %211 = arith.index_cast %c12_i32 : i32 to index
    %c0_77 = arith.constant 0 : index
    %212 = vector.load %arg13[%211, %c0_77] : memref<32x128xf32, #tpu.memory_space<vmem>>, vector<1x128xf32>
    %213 = arith.addf %210, %212 : vector<1x128xf32>
    %cst_78 = arith.constant 0.000000e+00 : f32
    %214 = vector.broadcast %cst_78 : f32 to vector<1x128xf32>
    %215 = arith.maximumf %213, %214 : vector<1x128xf32>
    %216 = arith.index_cast %208 : i32 to index
    %c0_79 = arith.constant 0 : index
    %217 = vector.load %arg14[%216, %c0_79] : memref<16x128xf32, #tpu.memory_space<vmem>>, vector<1x128xf32>
    %218 = arith.addf %217, %215 : vector<1x128xf32>
    %219 = arith.index_cast %208 : i32 to index
    %c0_80 = arith.constant 0 : index
    %220 = vector.load %arg14[%219, %c0_80] : memref<16x128xf32, #tpu.memory_space<vmem>>, vector<1x128xf32>
    tpu.vector_store %arg14[%219, %c0_80], %218 {strides = array<i32>} : memref<16x128xf32, #tpu.memory_space<vmem>>, vector<1x128xf32>,
    %c13_i32 = arith.constant 13 : i32
    %221 = arith.index_cast %c13_i32 : i32 to index
    %222 = memref.load %arg0[%221] : memref<32xi32, #tpu.memory_space<smem>>
    %223 = arith.index_cast %c13_i32 : i32 to index
    %224 = memref.load %arg1[%223] : memref<32xi32, #tpu.memory_space<smem>>
    %225 = arith.index_cast %222 : i32 to index
    %c0_81 = arith.constant 0 : index
    %226 = vector.load %arg12[%225, %c0_81] : memref<16x128xf32, #tpu.memory_space<vmem>>, vector<1x128xf32>
    %227 = arith.index_cast %c13_i32 : i32 to index
    %c0_82 = arith.constant 0 : index
    %228 = vector.load %arg13[%227, %c0_82] : memref<32x128xf32, #tpu.memory_space<vmem>>, vector<1x128xf32>
    %229 = arith.addf %226, %228 : vector<1x128xf32>
    %cst_83 = arith.constant 0.000000e+00 : f32
    %230 = vector.broadcast %cst_83 : f32 to vector<1x128xf32>
    %231 = arith.maximumf %229, %230 : vector<1x128xf32>
    %232 = arith.index_cast %224 : i32 to index
    %c0_84 = arith.constant 0 : index
    %233 = vector.load %arg14[%232, %c0_84] : memref<16x128xf32, #tpu.memory_space<vmem>>, vector<1x128xf32>
    %234 = arith.addf %233, %231 : vector<1x128xf32>
    %235 = arith.index_cast %224 : i32 to index
    %c0_85 = arith.constant 0 : index
    %236 = vector.load %arg14[%235, %c0_85] : memref<16x128xf32, #tpu.memory_space<vmem>>, vector<1x128xf32>
    tpu.vector_store %arg14[%235, %c0_85], %234 {strides = array<i32>} : memref<16x128xf32, #tpu.memory_space<vmem>>, vector<1x128xf32>,
    %c14_i32 = arith.constant 14 : i32
    %237 = arith.index_cast %c14_i32 : i32 to index
    %238 = memref.load %arg0[%237] : memref<32xi32, #tpu.memory_space<smem>>
    %239 = arith.index_cast %c14_i32 : i32 to index
    %240 = memref.load %arg1[%239] : memref<32xi32, #tpu.memory_space<smem>>
    %241 = arith.index_cast %238 : i32 to index
    %c0_86 = arith.constant 0 : index
    %242 = vector.load %arg12[%241, %c0_86] : memref<16x128xf32, #tpu.memory_space<vmem>>, vector<1x128xf32>
    %243 = arith.index_cast %c14_i32 : i32 to index
    %c0_87 = arith.constant 0 : index
    %244 = vector.load %arg13[%243, %c0_87] : memref<32x128xf32, #tpu.memory_space<vmem>>, vector<1x128xf32>
    %245 = arith.addf %242, %244 : vector<1x128xf32>
    %cst_88 = arith.constant 0.000000e+00 : f32
    %246 = vector.broadcast %cst_88 : f32 to vector<1x128xf32>
    %247 = arith.maximumf %245, %246 : vector<1x128xf32>
    %248 = arith.index_cast %240 : i32 to index
    %c0_89 = arith.constant 0 : index
    %249 = vector.load %arg14[%248, %c0_89] : memref<16x128xf32, #tpu.memory_space<vmem>>, vector<1x128xf32>
    %250 = arith.addf %249, %247 : vector<1x128xf32>
    %251 = arith.index_cast %240 : i32 to index
    %c0_90 = arith.constant 0 : index
    %252 = vector.load %arg14[%251, %c0_90] : memref<16x128xf32, #tpu.memory_space<vmem>>, vector<1x128xf32>
    tpu.vector_store %arg14[%251, %c0_90], %250 {strides = array<i32>} : memref<16x128xf32, #tpu.memory_space<vmem>>, vector<1x128xf32>,
    %c15_i32 = arith.constant 15 : i32
    %253 = arith.index_cast %c15_i32 : i32 to index
    %254 = memref.load %arg0[%253] : memref<32xi32, #tpu.memory_space<smem>>
    %255 = arith.index_cast %c15_i32 : i32 to index
    %256 = memref.load %arg1[%255] : memref<32xi32, #tpu.memory_space<smem>>
    %257 = arith.index_cast %254 : i32 to index
    %c0_91 = arith.constant 0 : index
    %258 = vector.load %arg12[%257, %c0_91] : memref<16x128xf32, #tpu.memory_space<vmem>>, vector<1x128xf32>
    %259 = arith.index_cast %c15_i32 : i32 to index
    %c0_92 = arith.constant 0 : index
    %260 = vector.load %arg13[%259, %c0_92] : memref<32x128xf32, #tpu.memory_space<vmem>>, vector<1x128xf32>
    %261 = arith.addf %258, %260 : vector<1x128xf32>
    %cst_93 = arith.constant 0.000000e+00 : f32
    %262 = vector.broadcast %cst_93 : f32 to vector<1x128xf32>
    %263 = arith.maximumf %261, %262 : vector<1x128xf32>
    %264 = arith.index_cast %256 : i32 to index
    %c0_94 = arith.constant 0 : index
    %265 = vector.load %arg14[%264, %c0_94] : memref<16x128xf32, #tpu.memory_space<vmem>>, vector<1x128xf32>
    %266 = arith.addf %265, %263 : vector<1x128xf32>
    %267 = arith.index_cast %256 : i32 to index
    %c0_95 = arith.constant 0 : index
    %268 = vector.load %arg14[%267, %c0_95] : memref<16x128xf32, #tpu.memory_space<vmem>>, vector<1x128xf32>
    tpu.vector_store %arg14[%267, %c0_95], %266 {strides = array<i32>} : memref<16x128xf32, #tpu.memory_space<vmem>>, vector<1x128xf32>,
    %c16_i32 = arith.constant 16 : i32
    %269 = arith.index_cast %c16_i32 : i32 to index
    %270 = memref.load %arg0[%269] : memref<32xi32, #tpu.memory_space<smem>>
    %271 = arith.index_cast %c16_i32 : i32 to index
    %272 = memref.load %arg1[%271] : memref<32xi32, #tpu.memory_space<smem>>
    %273 = arith.index_cast %270 : i32 to index
    %c0_96 = arith.constant 0 : index
    %274 = vector.load %arg12[%273, %c0_96] : memref<16x128xf32, #tpu.memory_space<vmem>>, vector<1x128xf32>
    %275 = arith.index_cast %c16_i32 : i32 to index
    %c0_97 = arith.constant 0 : index
    %276 = vector.load %arg13[%275, %c0_97] : memref<32x128xf32, #tpu.memory_space<vmem>>, vector<1x128xf32>
    %277 = arith.addf %274, %276 : vector<1x128xf32>
    %cst_98 = arith.constant 0.000000e+00 : f32
    %278 = vector.broadcast %cst_98 : f32 to vector<1x128xf32>
    %279 = arith.maximumf %277, %278 : vector<1x128xf32>
    %280 = arith.index_cast %272 : i32 to index
    %c0_99 = arith.constant 0 : index
    %281 = vector.load %arg14[%280, %c0_99] : memref<16x128xf32, #tpu.memory_space<vmem>>, vector<1x128xf32>
    %282 = arith.addf %281, %279 : vector<1x128xf32>
    %283 = arith.index_cast %272 : i32 to index
    %c0_100 = arith.constant 0 : index
    %284 = vector.load %arg14[%283, %c0_100] : memref<16x128xf32, #tpu.memory_space<vmem>>, vector<1x128xf32>
    tpu.vector_store %arg14[%283, %c0_100], %282 {strides = array<i32>} : memref<16x128xf32, #tpu.memory_space<vmem>>, vector<1x128xf32>,
    %c17_i32 = arith.constant 17 : i32
    %285 = arith.index_cast %c17_i32 : i32 to index
    %286 = memref.load %arg0[%285] : memref<32xi32, #tpu.memory_space<smem>>
    %287 = arith.index_cast %c17_i32 : i32 to index
    %288 = memref.load %arg1[%287] : memref<32xi32, #tpu.memory_space<smem>>
    %289 = arith.index_cast %286 : i32 to index
    %c0_101 = arith.constant 0 : index
    %290 = vector.load %arg12[%289, %c0_101] : memref<16x128xf32, #tpu.memory_space<vmem>>, vector<1x128xf32>
    %291 = arith.index_cast %c17_i32 : i32 to index
    %c0_102 = arith.constant 0 : index
    %292 = vector.load %arg13[%291, %c0_102] : memref<32x128xf32, #tpu.memory_space<vmem>>, vector<1x128xf32>
    %293 = arith.addf %290, %292 : vector<1x128xf32>
    %cst_103 = arith.constant 0.000000e+00 : f32
    %294 = vector.broadcast %cst_103 : f32 to vector<1x128xf32>
    %295 = arith.maximumf %293, %294 : vector<1x128xf32>
    %296 = arith.index_cast %288 : i32 to index
    %c0_104 = arith.constant 0 : index
    %297 = vector.load %arg14[%296, %c0_104] : memref<16x128xf32, #tpu.memory_space<vmem>>, vector<1x128xf32>
    %298 = arith.addf %297, %295 : vector<1x128xf32>
    %299 = arith.index_cast %288 : i32 to index
    %c0_105 = arith.constant 0 : index
    %300 = vector.load %arg14[%299, %c0_105] : memref<16x128xf32, #tpu.memory_space<vmem>>, vector<1x128xf32>
    tpu.vector_store %arg14[%299, %c0_105], %298 {strides = array<i32>} : memref<16x128xf32, #tpu.memory_space<vmem>>, vector<1x128xf32>,
    %c18_i32 = arith.constant 18 : i32
    %301 = arith.index_cast %c18_i32 : i32 to index
    %302 = memref.load %arg0[%301] : memref<32xi32, #tpu.memory_space<smem>>
    %303 = arith.index_cast %c18_i32 : i32 to index
    %304 = memref.load %arg1[%303] : memref<32xi32, #tpu.memory_space<smem>>
    %305 = arith.index_cast %302 : i32 to index
    %c0_106 = arith.constant 0 : index
    %306 = vector.load %arg12[%305, %c0_106] : memref<16x128xf32, #tpu.memory_space<vmem>>, vector<1x128xf32>
    %307 = arith.index_cast %c18_i32 : i32 to index
    %c0_107 = arith.constant 0 : index
    %308 = vector.load %arg13[%307, %c0_107] : memref<32x128xf32, #tpu.memory_space<vmem>>, vector<1x128xf32>
    %309 = arith.addf %306, %308 : vector<1x128xf32>
    %cst_108 = arith.constant 0.000000e+00 : f32
    %310 = vector.broadcast %cst_108 : f32 to vector<1x128xf32>
    %311 = arith.maximumf %309, %310 : vector<1x128xf32>
    %312 = arith.index_cast %304 : i32 to index
    %c0_109 = arith.constant 0 : index
    %313 = vector.load %arg14[%312, %c0_109] : memref<16x128xf32, #tpu.memory_space<vmem>>, vector<1x128xf32>
    %314 = arith.addf %313, %311 : vector<1x128xf32>
    %315 = arith.index_cast %304 : i32 to index
    %c0_110 = arith.constant 0 : index
    %316 = vector.load %arg14[%315, %c0_110] : memref<16x128xf32, #tpu.memory_space<vmem>>, vector<1x128xf32>
    tpu.vector_store %arg14[%315, %c0_110], %314 {strides = array<i32>} : memref<16x128xf32, #tpu.memory_space<vmem>>, vector<1x128xf32>,
    %c19_i32 = arith.constant 19 : i32
    %317 = arith.index_cast %c19_i32 : i32 to index
    %318 = memref.load %arg0[%317] : memref<32xi32, #tpu.memory_space<smem>>
    %319 = arith.index_cast %c19_i32 : i32 to index
    %320 = memref.load %arg1[%319] : memref<32xi32, #tpu.memory_space<smem>>
    %321 = arith.index_cast %318 : i32 to index
    %c0_111 = arith.constant 0 : index
    %322 = vector.load %arg12[%321, %c0_111] : memref<16x128xf32, #tpu.memory_space<vmem>>, vector<1x128xf32>
    %323 = arith.index_cast %c19_i32 : i32 to index
    %c0_112 = arith.constant 0 : index
    %324 = vector.load %arg13[%323, %c0_112] : memref<32x128xf32, #tpu.memory_space<vmem>>, vector<1x128xf32>
    %325 = arith.addf %322, %324 : vector<1x128xf32>
    %cst_113 = arith.constant 0.000000e+00 : f32
    %326 = vector.broadcast %cst_113 : f32 to vector<1x128xf32>
    %327 = arith.maximumf %325, %326 : vector<1x128xf32>
    %328 = arith.index_cast %320 : i32 to index
    %c0_114 = arith.constant 0 : index
    %329 = vector.load %arg14[%328, %c0_114] : memref<16x128xf32, #tpu.memory_space<vmem>>, vector<1x128xf32>
    %330 = arith.addf %329, %327 : vector<1x128xf32>
    %331 = arith.index_cast %320 : i32 to index
    %c0_115 = arith.constant 0 : index
    %332 = vector.load %arg14[%331, %c0_115] : memref<16x128xf32, #tpu.memory_space<vmem>>, vector<1x128xf32>
    tpu.vector_store %arg14[%331, %c0_115], %330 {strides = array<i32>} : memref<16x128xf32, #tpu.memory_space<vmem>>, vector<1x128xf32>,
    %c20_i32 = arith.constant 20 : i32
    %333 = arith.index_cast %c20_i32 : i32 to index
    %334 = memref.load %arg0[%333] : memref<32xi32, #tpu.memory_space<smem>>
    %335 = arith.index_cast %c20_i32 : i32 to index
    %336 = memref.load %arg1[%335] : memref<32xi32, #tpu.memory_space<smem>>
    %337 = arith.index_cast %334 : i32 to index
    %c0_116 = arith.constant 0 : index
    %338 = vector.load %arg12[%337, %c0_116] : memref<16x128xf32, #tpu.memory_space<vmem>>, vector<1x128xf32>
    %339 = arith.index_cast %c20_i32 : i32 to index
    %c0_117 = arith.constant 0 : index
    %340 = vector.load %arg13[%339, %c0_117] : memref<32x128xf32, #tpu.memory_space<vmem>>, vector<1x128xf32>
    %341 = arith.addf %338, %340 : vector<1x128xf32>
    %cst_118 = arith.constant 0.000000e+00 : f32
    %342 = vector.broadcast %cst_118 : f32 to vector<1x128xf32>
    %343 = arith.maximumf %341, %342 : vector<1x128xf32>
    %344 = arith.index_cast %336 : i32 to index
    %c0_119 = arith.constant 0 : index
    %345 = vector.load %arg14[%344, %c0_119] : memref<16x128xf32, #tpu.memory_space<vmem>>, vector<1x128xf32>
    %346 = arith.addf %345, %343 : vector<1x128xf32>
    %347 = arith.index_cast %336 : i32 to index
    %c0_120 = arith.constant 0 : index
    %348 = vector.load %arg14[%347, %c0_120] : memref<16x128xf32, #tpu.memory_space<vmem>>, vector<1x128xf32>
    tpu.vector_store %arg14[%347, %c0_120], %346 {strides = array<i32>} : memref<16x128xf32, #tpu.memory_space<vmem>>, vector<1x128xf32>,
    %c21_i32 = arith.constant 21 : i32
    %349 = arith.index_cast %c21_i32 : i32 to index
    %350 = memref.load %arg0[%349] : memref<32xi32, #tpu.memory_space<smem>>
    %351 = arith.index_cast %c21_i32 : i32 to index
    %352 = memref.load %arg1[%351] : memref<32xi32, #tpu.memory_space<smem>>
    %353 = arith.index_cast %350 : i32 to index
    %c0_121 = arith.constant 0 : index
    %354 = vector.load %arg12[%353, %c0_121] : memref<16x128xf32, #tpu.memory_space<vmem>>, vector<1x128xf32>
    %355 = arith.index_cast %c21_i32 : i32 to index
    %c0_122 = arith.constant 0 : index
    %356 = vector.load %arg13[%355, %c0_122] : memref<32x128xf32, #tpu.memory_space<vmem>>, vector<1x128xf32>
    %357 = arith.addf %354, %356 : vector<1x128xf32>
    %cst_123 = arith.constant 0.000000e+00 : f32
    %358 = vector.broadcast %cst_123 : f32 to vector<1x128xf32>
    %359 = arith.maximumf %357, %358 : vector<1x128xf32>
    %360 = arith.index_cast %352 : i32 to index
    %c0_124 = arith.constant 0 : index
    %361 = vector.load %arg14[%360, %c0_124] : memref<16x128xf32, #tpu.memory_space<vmem>>, vector<1x128xf32>
    %362 = arith.addf %361, %359 : vector<1x128xf32>
    %363 = arith.index_cast %352 : i32 to index
    %c0_125 = arith.constant 0 : index
    %364 = vector.load %arg14[%363, %c0_125] : memref<16x128xf32, #tpu.memory_space<vmem>>, vector<1x128xf32>
    tpu.vector_store %arg14[%363, %c0_125], %362 {strides = array<i32>} : memref<16x128xf32, #tpu.memory_space<vmem>>, vector<1x128xf32>,
    %c22_i32 = arith.constant 22 : i32
    %365 = arith.index_cast %c22_i32 : i32 to index
    %366 = memref.load %arg0[%365] : memref<32xi32, #tpu.memory_space<smem>>
    %367 = arith.index_cast %c22_i32 : i32 to index
    %368 = memref.load %arg1[%367] : memref<32xi32, #tpu.memory_space<smem>>
    %369 = arith.index_cast %366 : i32 to index
    %c0_126 = arith.constant 0 : index
    %370 = vector.load %arg12[%369, %c0_126] : memref<16x128xf32, #tpu.memory_space<vmem>>, vector<1x128xf32>
    %371 = arith.index_cast %c22_i32 : i32 to index
    %c0_127 = arith.constant 0 : index
    %372 = vector.load %arg13[%371, %c0_127] : memref<32x128xf32, #tpu.memory_space<vmem>>, vector<1x128xf32>
    %373 = arith.addf %370, %372 : vector<1x128xf32>
    %cst_128 = arith.constant 0.000000e+00 : f32
    %374 = vector.broadcast %cst_128 : f32 to vector<1x128xf32>
    %375 = arith.maximumf %373, %374 : vector<1x128xf32>
    %376 = arith.index_cast %368 : i32 to index
    %c0_129 = arith.constant 0 : index
    %377 = vector.load %arg14[%376, %c0_129] : memref<16x128xf32, #tpu.memory_space<vmem>>, vector<1x128xf32>
    %378 = arith.addf %377, %375 : vector<1x128xf32>
    %379 = arith.index_cast %368 : i32 to index
    %c0_130 = arith.constant 0 : index
    %380 = vector.load %arg14[%379, %c0_130] : memref<16x128xf32, #tpu.memory_space<vmem>>, vector<1x128xf32>
    tpu.vector_store %arg14[%379, %c0_130], %378 {strides = array<i32>} : memref<16x128xf32, #tpu.memory_space<vmem>>, vector<1x128xf32>,
    %c23_i32 = arith.constant 23 : i32
    %381 = arith.index_cast %c23_i32 : i32 to index
    %382 = memref.load %arg0[%381] : memref<32xi32, #tpu.memory_space<smem>>
    %383 = arith.index_cast %c23_i32 : i32 to index
    %384 = memref.load %arg1[%383] : memref<32xi32, #tpu.memory_space<smem>>
    %385 = arith.index_cast %382 : i32 to index
    %c0_131 = arith.constant 0 : index
    %386 = vector.load %arg12[%385, %c0_131] : memref<16x128xf32, #tpu.memory_space<vmem>>, vector<1x128xf32>
    %387 = arith.index_cast %c23_i32 : i32 to index
    %c0_132 = arith.constant 0 : index
    %388 = vector.load %arg13[%387, %c0_132] : memref<32x128xf32, #tpu.memory_space<vmem>>, vector<1x128xf32>
    %389 = arith.addf %386, %388 : vector<1x128xf32>
    %cst_133 = arith.constant 0.000000e+00 : f32
    %390 = vector.broadcast %cst_133 : f32 to vector<1x128xf32>
    %391 = arith.maximumf %389, %390 : vector<1x128xf32>
    %392 = arith.index_cast %384 : i32 to index
    %c0_134 = arith.constant 0 : index
    %393 = vector.load %arg14[%392, %c0_134] : memref<16x128xf32, #tpu.memory_space<vmem>>, vector<1x128xf32>
    %394 = arith.addf %393, %391 : vector<1x128xf32>
    %395 = arith.index_cast %384 : i32 to index
    %c0_135 = arith.constant 0 : index
    %396 = vector.load %arg14[%395, %c0_135] : memref<16x128xf32, #tpu.memory_space<vmem>>, vector<1x128xf32>
    tpu.vector_store %arg14[%395, %c0_135], %394 {strides = array<i32>} : memref<16x128xf32, #tpu.memory_space<vmem>>, vector<1x128xf32>,
    %c24_i32 = arith.constant 24 : i32
    %397 = arith.index_cast %c24_i32 : i32 to index
    %398 = memref.load %arg0[%397] : memref<32xi32, #tpu.memory_space<smem>>
    %399 = arith.index_cast %c24_i32 : i32 to index
    %400 = memref.load %arg1[%399] : memref<32xi32, #tpu.memory_space<smem>>
    %401 = arith.index_cast %398 : i32 to index
    %c0_136 = arith.constant 0 : index
    %402 = vector.load %arg12[%401, %c0_136] : memref<16x128xf32, #tpu.memory_space<vmem>>, vector<1x128xf32>
    %403 = arith.index_cast %c24_i32 : i32 to index
    %c0_137 = arith.constant 0 : index
    %404 = vector.load %arg13[%403, %c0_137] : memref<32x128xf32, #tpu.memory_space<vmem>>, vector<1x128xf32>
    %405 = arith.addf %402, %404 : vector<1x128xf32>
    %cst_138 = arith.constant 0.000000e+00 : f32
    %406 = vector.broadcast %cst_138 : f32 to vector<1x128xf32>
    %407 = arith.maximumf %405, %406 : vector<1x128xf32>
    %408 = arith.index_cast %400 : i32 to index
    %c0_139 = arith.constant 0 : index
    %409 = vector.load %arg14[%408, %c0_139] : memref<16x128xf32, #tpu.memory_space<vmem>>, vector<1x128xf32>
    %410 = arith.addf %409, %407 : vector<1x128xf32>
    %411 = arith.index_cast %400 : i32 to index
    %c0_140 = arith.constant 0 : index
    %412 = vector.load %arg14[%411, %c0_140] : memref<16x128xf32, #tpu.memory_space<vmem>>, vector<1x128xf32>
    tpu.vector_store %arg14[%411, %c0_140], %410 {strides = array<i32>} : memref<16x128xf32, #tpu.memory_space<vmem>>, vector<1x128xf32>,
    %c25_i32 = arith.constant 25 : i32
    %413 = arith.index_cast %c25_i32 : i32 to index
    %414 = memref.load %arg0[%413] : memref<32xi32, #tpu.memory_space<smem>>
    %415 = arith.index_cast %c25_i32 : i32 to index
    %416 = memref.load %arg1[%415] : memref<32xi32, #tpu.memory_space<smem>>
    %417 = arith.index_cast %414 : i32 to index
    %c0_141 = arith.constant 0 : index
    %418 = vector.load %arg12[%417, %c0_141] : memref<16x128xf32, #tpu.memory_space<vmem>>, vector<1x128xf32>
    %419 = arith.index_cast %c25_i32 : i32 to index
    %c0_142 = arith.constant 0 : index
    %420 = vector.load %arg13[%419, %c0_142] : memref<32x128xf32, #tpu.memory_space<vmem>>, vector<1x128xf32>
    %421 = arith.addf %418, %420 : vector<1x128xf32>
    %cst_143 = arith.constant 0.000000e+00 : f32
    %422 = vector.broadcast %cst_143 : f32 to vector<1x128xf32>
    %423 = arith.maximumf %421, %422 : vector<1x128xf32>
    %424 = arith.index_cast %416 : i32 to index
    %c0_144 = arith.constant 0 : index
    %425 = vector.load %arg14[%424, %c0_144] : memref<16x128xf32, #tpu.memory_space<vmem>>, vector<1x128xf32>
    %426 = arith.addf %425, %423 : vector<1x128xf32>
    %427 = arith.index_cast %416 : i32 to index
    %c0_145 = arith.constant 0 : index
    %428 = vector.load %arg14[%427, %c0_145] : memref<16x128xf32, #tpu.memory_space<vmem>>, vector<1x128xf32>
    tpu.vector_store %arg14[%427, %c0_145], %426 {strides = array<i32>} : memref<16x128xf32, #tpu.memory_space<vmem>>, vector<1x128xf32>,
    %c26_i32 = arith.constant 26 : i32
    %429 = arith.index_cast %c26_i32 : i32 to index
    %430 = memref.load %arg0[%429] : memref<32xi32, #tpu.memory_space<smem>>
    %431 = arith.index_cast %c26_i32 : i32 to index
    %432 = memref.load %arg1[%431] : memref<32xi32, #tpu.memory_space<smem>>
    %433 = arith.index_cast %430 : i32 to index
    %c0_146 = arith.constant 0 : index
    %434 = vector.load %arg12[%433, %c0_146] : memref<16x128xf32, #tpu.memory_space<vmem>>, vector<1x128xf32>
    %435 = arith.index_cast %c26_i32 : i32 to index
    %c0_147 = arith.constant 0 : index
    %436 = vector.load %arg13[%435, %c0_147] : memref<32x128xf32, #tpu.memory_space<vmem>>, vector<1x128xf32>
    %437 = arith.addf %434, %436 : vector<1x128xf32>
    %cst_148 = arith.constant 0.000000e+00 : f32
    %438 = vector.broadcast %cst_148 : f32 to vector<1x128xf32>
    %439 = arith.maximumf %437, %438 : vector<1x128xf32>
    %440 = arith.index_cast %432 : i32 to index
    %c0_149 = arith.constant 0 : index
    %441 = vector.load %arg14[%440, %c0_149] : memref<16x128xf32, #tpu.memory_space<vmem>>, vector<1x128xf32>
    %442 = arith.addf %441, %439 : vector<1x128xf32>
    %443 = arith.index_cast %432 : i32 to index
    %c0_150 = arith.constant 0 : index
    %444 = vector.load %arg14[%443, %c0_150] : memref<16x128xf32, #tpu.memory_space<vmem>>, vector<1x128xf32>
    tpu.vector_store %arg14[%443, %c0_150], %442 {strides = array<i32>} : memref<16x128xf32, #tpu.memory_space<vmem>>, vector<1x128xf32>,
    %c27_i32 = arith.constant 27 : i32
    %445 = arith.index_cast %c27_i32 : i32 to index
    %446 = memref.load %arg0[%445] : memref<32xi32, #tpu.memory_space<smem>>
    %447 = arith.index_cast %c27_i32 : i32 to index
    %448 = memref.load %arg1[%447] : memref<32xi32, #tpu.memory_space<smem>>
    %449 = arith.index_cast %446 : i32 to index
    %c0_151 = arith.constant 0 : index
    %450 = vector.load %arg12[%449, %c0_151] : memref<16x128xf32, #tpu.memory_space<vmem>>, vector<1x128xf32>
    %451 = arith.index_cast %c27_i32 : i32 to index
    %c0_152 = arith.constant 0 : index
    %452 = vector.load %arg13[%451, %c0_152] : memref<32x128xf32, #tpu.memory_space<vmem>>, vector<1x128xf32>
    %453 = arith.addf %450, %452 : vector<1x128xf32>
    %cst_153 = arith.constant 0.000000e+00 : f32
    %454 = vector.broadcast %cst_153 : f32 to vector<1x128xf32>
    %455 = arith.maximumf %453, %454 : vector<1x128xf32>
    %456 = arith.index_cast %448 : i32 to index
    %c0_154 = arith.constant 0 : index
    %457 = vector.load %arg14[%456, %c0_154] : memref<16x128xf32, #tpu.memory_space<vmem>>, vector<1x128xf32>
    %458 = arith.addf %457, %455 : vector<1x128xf32>
    %459 = arith.index_cast %448 : i32 to index
    %c0_155 = arith.constant 0 : index
    %460 = vector.load %arg14[%459, %c0_155] : memref<16x128xf32, #tpu.memory_space<vmem>>, vector<1x128xf32>
    tpu.vector_store %arg14[%459, %c0_155], %458 {strides = array<i32>} : memref<16x128xf32, #tpu.memory_space<vmem>>, vector<1x128xf32>,
    %c28_i32 = arith.constant 28 : i32
    %461 = arith.index_cast %c28_i32 : i32 to index
    %462 = memref.load %arg0[%461] : memref<32xi32, #tpu.memory_space<smem>>
    %463 = arith.index_cast %c28_i32 : i32 to index
    %464 = memref.load %arg1[%463] : memref<32xi32, #tpu.memory_space<smem>>
    %465 = arith.index_cast %462 : i32 to index
    %c0_156 = arith.constant 0 : index
    %466 = vector.load %arg12[%465, %c0_156] : memref<16x128xf32, #tpu.memory_space<vmem>>, vector<1x128xf32>
    %467 = arith.index_cast %c28_i32 : i32 to index
    %c0_157 = arith.constant 0 : index
    %468 = vector.load %arg13[%467, %c0_157] : memref<32x128xf32, #tpu.memory_space<vmem>>, vector<1x128xf32>
    %469 = arith.addf %466, %468 : vector<1x128xf32>
    %cst_158 = arith.constant 0.000000e+00 : f32
    %470 = vector.broadcast %cst_158 : f32 to vector<1x128xf32>
    %471 = arith.maximumf %469, %470 : vector<1x128xf32>
    %472 = arith.index_cast %464 : i32 to index
    %c0_159 = arith.constant 0 : index
    %473 = vector.load %arg14[%472, %c0_159] : memref<16x128xf32, #tpu.memory_space<vmem>>, vector<1x128xf32>
    %474 = arith.addf %473, %471 : vector<1x128xf32>
    %475 = arith.index_cast %464 : i32 to index
    %c0_160 = arith.constant 0 : index
    %476 = vector.load %arg14[%475, %c0_160] : memref<16x128xf32, #tpu.memory_space<vmem>>, vector<1x128xf32>
    tpu.vector_store %arg14[%475, %c0_160], %474 {strides = array<i32>} : memref<16x128xf32, #tpu.memory_space<vmem>>, vector<1x128xf32>,
    %c29_i32 = arith.constant 29 : i32
    %477 = arith.index_cast %c29_i32 : i32 to index
    %478 = memref.load %arg0[%477] : memref<32xi32, #tpu.memory_space<smem>>
    %479 = arith.index_cast %c29_i32 : i32 to index
    %480 = memref.load %arg1[%479] : memref<32xi32, #tpu.memory_space<smem>>
    %481 = arith.index_cast %478 : i32 to index
    %c0_161 = arith.constant 0 : index
    %482 = vector.load %arg12[%481, %c0_161] : memref<16x128xf32, #tpu.memory_space<vmem>>, vector<1x128xf32>
    %483 = arith.index_cast %c29_i32 : i32 to index
    %c0_162 = arith.constant 0 : index
    %484 = vector.load %arg13[%483, %c0_162] : memref<32x128xf32, #tpu.memory_space<vmem>>, vector<1x128xf32>
    %485 = arith.addf %482, %484 : vector<1x128xf32>
    %cst_163 = arith.constant 0.000000e+00 : f32
    %486 = vector.broadcast %cst_163 : f32 to vector<1x128xf32>
    %487 = arith.maximumf %485, %486 : vector<1x128xf32>
    %488 = arith.index_cast %480 : i32 to index
    %c0_164 = arith.constant 0 : index
    %489 = vector.load %arg14[%488, %c0_164] : memref<16x128xf32, #tpu.memory_space<vmem>>, vector<1x128xf32>
    %490 = arith.addf %489, %487 : vector<1x128xf32>
    %491 = arith.index_cast %480 : i32 to index
    %c0_165 = arith.constant 0 : index
    %492 = vector.load %arg14[%491, %c0_165] : memref<16x128xf32, #tpu.memory_space<vmem>>, vector<1x128xf32>
    tpu.vector_store %arg14[%491, %c0_165], %490 {strides = array<i32>} : memref<16x128xf32, #tpu.memory_space<vmem>>, vector<1x128xf32>,
    %c30_i32 = arith.constant 30 : i32
    %493 = arith.index_cast %c30_i32 : i32 to index
    %494 = memref.load %arg0[%493] : memref<32xi32, #tpu.memory_space<smem>>
    %495 = arith.index_cast %c30_i32 : i32 to index
    %496 = memref.load %arg1[%495] : memref<32xi32, #tpu.memory_space<smem>>
    %497 = arith.index_cast %494 : i32 to index
    %c0_166 = arith.constant 0 : index
    %498 = vector.load %arg12[%497, %c0_166] : memref<16x128xf32, #tpu.memory_space<vmem>>, vector<1x128xf32>
    %499 = arith.index_cast %c30_i32 : i32 to index
    %c0_167 = arith.constant 0 : index
    %500 = vector.load %arg13[%499, %c0_167] : memref<32x128xf32, #tpu.memory_space<vmem>>, vector<1x128xf32>
    %501 = arith.addf %498, %500 : vector<1x128xf32>
    %cst_168 = arith.constant 0.000000e+00 : f32
    %502 = vector.broadcast %cst_168 : f32 to vector<1x128xf32>
    %503 = arith.maximumf %501, %502 : vector<1x128xf32>
    %504 = arith.index_cast %496 : i32 to index
    %c0_169 = arith.constant 0 : index
    %505 = vector.load %arg14[%504, %c0_169] : memref<16x128xf32, #tpu.memory_space<vmem>>, vector<1x128xf32>
    %506 = arith.addf %505, %503 : vector<1x128xf32>
    %507 = arith.index_cast %496 : i32 to index
    %c0_170 = arith.constant 0 : index
    %508 = vector.load %arg14[%507, %c0_170] : memref<16x128xf32, #tpu.memory_space<vmem>>, vector<1x128xf32>
    tpu.vector_store %arg14[%507, %c0_170], %506 {strides = array<i32>} : memref<16x128xf32, #tpu.memory_space<vmem>>, vector<1x128xf32>,
    %c31_i32 = arith.constant 31 : i32
    %509 = arith.index_cast %c31_i32 : i32 to index
    %510 = memref.load %arg0[%509] : memref<32xi32, #tpu.memory_space<smem>>
    %511 = arith.index_cast %c31_i32 : i32 to index
    %512 = memref.load %arg1[%511] : memref<32xi32, #tpu.memory_space<smem>>
    %513 = arith.index_cast %510 : i32 to index
    %c0_171 = arith.constant 0 : index
    %514 = vector.load %arg12[%513, %c0_171] : memref<16x128xf32, #tpu.memory_space<vmem>>, vector<1x128xf32>
    %515 = arith.index_cast %c31_i32 : i32 to index
    %c0_172 = arith.constant 0 : index
    %516 = vector.load %arg13[%515, %c0_172] : memref<32x128xf32, #tpu.memory_space<vmem>>, vector<1x128xf32>
    %517 = arith.addf %514, %516 : vector<1x128xf32>
    %cst_173 = arith.constant 0.000000e+00 : f32
    %518 = vector.broadcast %cst_173 : f32 to vector<1x128xf32>
    %519 = arith.maximumf %517, %518 : vector<1x128xf32>
    %520 = arith.index_cast %512 : i32 to index
    %c0_174 = arith.constant 0 : index
    %521 = vector.load %arg14[%520, %c0_174] : memref<16x128xf32, #tpu.memory_space<vmem>>, vector<1x128xf32>
    %522 = arith.addf %521, %519 : vector<1x128xf32>
    %523 = arith.index_cast %512 : i32 to index
    %c0_175 = arith.constant 0 : index
    %524 = vector.load %arg14[%523, %c0_175] : memref<16x128xf32, #tpu.memory_space<vmem>>, vector<1x128xf32>
    tpu.vector_store %arg14[%523, %c0_175], %522 {strides = array<i32>} : memref<16x128xf32, #tpu.memory_space<vmem>>, vector<1x128xf32>,
    %c32_i32 = arith.constant 32 : i32
    %c0_176 = arith.constant 0 : index
    %525 = memref.load %arg2[%c0_176] : memref<2xf32, #tpu.memory_space<smem>>
    %c0_177 = arith.constant 0 : index
    %c0_178 = arith.constant 0 : index
    %526 = vector.load %arg12[%c0_177, %c0_178] : memref<16x128xf32, #tpu.memory_space<vmem>>, vector<16x128xf32>
    %527 = vector.broadcast %525 : f32 to vector<16x128xf32>
    %528 = arith.mulf %527, %526 : vector<16x128xf32>
    %c0_179 = arith.constant 0 : index
    %c0_180 = arith.constant 0 : index
    %529 = vector.load %arg14[%c0_179, %c0_180] : memref<16x128xf32, #tpu.memory_space<vmem>>, vector<16x128xf32>
    %530 = arith.addf %528, %529 : vector<16x128xf32>
    %c0_181 = arith.constant 0 : index
    %c0_182 = arith.constant 0 : index
    %c0_183 = arith.constant 0 : index
    %531 = vector.load %arg7[%c0_181, %c0_182, %c0_183] : memref<2x128x128xf32, #tpu.memory_space<vmem>>, vector<1x128x128xf32>
    %532 = vector.shape_cast %531 : vector<1x128x128xf32> to vector<128x128xf32>
    %cst_184 = arith.constant dense<0.000000e+00> : vector<16x128xf32>
    %533 = tpu.matmul %530, %532, %cst_184 {dimension_numbers = #tpu.dot_dimension_numbers<[1], [0], [0], [1], [0, 0, 1, 1], [], []>} : vector<16x128xf32>, vector<128x128xf32>, vector<16x128xf32> -> vector<16x128xf32>
    %c0_185 = arith.constant 0 : index
    %c0_186 = arith.constant 0 : index
    %c0_187 = arith.constant 0 : index
    %534 = vector.load %arg8[%c0_185, %c0_186, %c0_187] : memref<2x1x128xf32, #tpu.memory_space<vmem>>, vector<1x1x128xf32>
    %535 = vector.shape_cast %534 : vector<1x1x128xf32> to vector<1x128xf32>
    %536 = vector.broadcast %535 : vector<1x128xf32> to vector<16x128xf32>
    %537 = arith.addf %533, %536 : vector<16x128xf32>
    %cst_188 = arith.constant 0.000000e+00 : f32
    %538 = vector.broadcast %cst_188 : f32 to vector<16x128xf32>
    %539 = arith.maximumf %537, %538 : vector<16x128xf32>
    %c0_189 = arith.constant 0 : index
    %c0_190 = arith.constant 0 : index
    %c0_191 = arith.constant 0 : index
    %540 = vector.load %arg9[%c0_189, %c0_190, %c0_191] : memref<2x128x128xf32, #tpu.memory_space<vmem>>, vector<1x128x128xf32>
    %541 = vector.shape_cast %540 : vector<1x128x128xf32> to vector<128x128xf32>
    %cst_192 = arith.constant dense<0.000000e+00> : vector<16x128xf32>
    %542 = tpu.matmul %539, %541, %cst_192 {dimension_numbers = #tpu.dot_dimension_numbers<[1], [0], [0], [1], [0, 0, 1, 1], [], []>} : vector<16x128xf32>, vector<128x128xf32>, vector<16x128xf32> -> vector<16x128xf32>
    %c0_193 = arith.constant 0 : index
    %c0_194 = arith.constant 0 : index
    %c0_195 = arith.constant 0 : index
    %543 = vector.load %arg10[%c0_193, %c0_194, %c0_195] : memref<2x1x128xf32, #tpu.memory_space<vmem>>, vector<1x1x128xf32>
    %544 = vector.shape_cast %543 : vector<1x1x128xf32> to vector<1x128xf32>
    %545 = vector.broadcast %544 : vector<1x128xf32> to vector<16x128xf32>
    %546 = arith.addf %542, %545 : vector<16x128xf32>
    %cst_196 = arith.constant 0.000000e+00 : f32
    %547 = vector.broadcast %cst_196 : f32 to vector<16x128xf32>
    %548 = arith.maximumf %546, %547 : vector<16x128xf32>
    %c0_197 = arith.constant 0 : index
    %c0_198 = arith.constant 0 : index
    %549 = vector.load %arg12[%c0_197, %c0_198] : memref<16x128xf32, #tpu.memory_space<vmem>>, vector<16x128xf32>
    tpu.vector_store %arg12[%c0_197, %c0_198], %548 {strides = array<i32>} : memref<16x128xf32, #tpu.memory_space<vmem>>, vector<16x128xf32>,
    %c0_199 = arith.constant 0 : index
    %c0_200 = arith.constant 0 : index
    %550 = vector.load %arg4[%c0_199, %c0_200] : memref<32x8xf32, #tpu.memory_space<vmem>>, vector<32x8xf32>
    %c1 = arith.constant 1 : index
    %c0_201 = arith.constant 0 : index
    %c0_202 = arith.constant 0 : index
    %551 = vector.load %arg5[%c1, %c0_201, %c0_202] : memref<2x8x128xf32, #tpu.memory_space<vmem>>, vector<1x8x128xf32>
    %552 = vector.shape_cast %551 : vector<1x8x128xf32> to vector<8x128xf32>
    %cst_203 = arith.constant dense<0.000000e+00> : vector<32x128xf32>
    %553 = tpu.matmul %550, %552, %cst_203 {dimension_numbers = #tpu.dot_dimension_numbers<[1], [0], [0], [1], [0, 0, 1, 1], [], []>} : vector<32x8xf32>, vector<8x128xf32>, vector<32x128xf32> -> vector<32x128xf32>
    %c1_204 = arith.constant 1 : index
    %c0_205 = arith.constant 0 : index
    %c0_206 = arith.constant 0 : index
    %554 = vector.load %arg6[%c1_204, %c0_205, %c0_206] : memref<2x1x128xf32, #tpu.memory_space<vmem>>, vector<1x1x128xf32>
    %555 = vector.shape_cast %554 : vector<1x1x128xf32> to vector<1x128xf32>
    %556 = vector.broadcast %555 : vector<1x128xf32> to vector<32x128xf32>
    %557 = arith.addf %553, %556 : vector<32x128xf32>
    %c0_207 = arith.constant 0 : index
    %c0_208 = arith.constant 0 : index
    %558 = vector.load %arg13[%c0_207, %c0_208] : memref<32x128xf32, #tpu.memory_space<vmem>>, vector<32x128xf32>
    tpu.vector_store %arg13[%c0_207, %c0_208], %557 {strides = array<i32>} : memref<32x128xf32, #tpu.memory_space<vmem>>, vector<32x128xf32>,
    %cst_209 = arith.constant 0.000000e+00 : f32
    %559 = vector.broadcast %cst_209 : f32 to vector<16x128xf32>
    %c0_210 = arith.constant 0 : index
    %c0_211 = arith.constant 0 : index
    %560 = vector.load %arg14[%c0_210, %c0_211] : memref<16x128xf32, #tpu.memory_space<vmem>>, vector<16x128xf32>
    tpu.vector_store %arg14[%c0_210, %c0_211], %559 {strides = array<i32>} : memref<16x128xf32, #tpu.memory_space<vmem>>, vector<16x128xf32>,
    %c0_i32_212 = arith.constant 0 : i32
    %561 = arith.index_cast %c0_i32_212 : i32 to index
    %562 = memref.load %arg0[%561] : memref<32xi32, #tpu.memory_space<smem>>
    %563 = arith.index_cast %c0_i32_212 : i32 to index
    %564 = memref.load %arg1[%563] : memref<32xi32, #tpu.memory_space<smem>>
    %565 = arith.index_cast %562 : i32 to index
    %c0_213 = arith.constant 0 : index
    %566 = vector.load %arg12[%565, %c0_213] : memref<16x128xf32, #tpu.memory_space<vmem>>, vector<1x128xf32>
    %567 = arith.index_cast %c0_i32_212 : i32 to index
    %c0_214 = arith.constant 0 : index
    %568 = vector.load %arg13[%567, %c0_214] : memref<32x128xf32, #tpu.memory_space<vmem>>, vector<1x128xf32>
    %569 = arith.addf %566, %568 : vector<1x128xf32>
    %cst_215 = arith.constant 0.000000e+00 : f32
    %570 = vector.broadcast %cst_215 : f32 to vector<1x128xf32>
    %571 = arith.maximumf %569, %570 : vector<1x128xf32>
    %572 = arith.index_cast %564 : i32 to index
    %c0_216 = arith.constant 0 : index
    %573 = vector.load %arg14[%572, %c0_216] : memref<16x128xf32, #tpu.memory_space<vmem>>, vector<1x128xf32>
    %574 = arith.addf %573, %571 : vector<1x128xf32>
    %575 = arith.index_cast %564 : i32 to index
    %c0_217 = arith.constant 0 : index
    %576 = vector.load %arg14[%575, %c0_217] : memref<16x128xf32, #tpu.memory_space<vmem>>, vector<1x128xf32>
    tpu.vector_store %arg14[%575, %c0_217], %574 {strides = array<i32>} : memref<16x128xf32, #tpu.memory_space<vmem>>, vector<1x128xf32>,
    %c1_i32_218 = arith.constant 1 : i32
    %577 = arith.index_cast %c1_i32_218 : i32 to index
    %578 = memref.load %arg0[%577] : memref<32xi32, #tpu.memory_space<smem>>
    %579 = arith.index_cast %c1_i32_218 : i32 to index
    %580 = memref.load %arg1[%579] : memref<32xi32, #tpu.memory_space<smem>>
    %581 = arith.index_cast %578 : i32 to index
    %c0_219 = arith.constant 0 : index
    %582 = vector.load %arg12[%581, %c0_219] : memref<16x128xf32, #tpu.memory_space<vmem>>, vector<1x128xf32>
    %583 = arith.index_cast %c1_i32_218 : i32 to index
    %c0_220 = arith.constant 0 : index
    %584 = vector.load %arg13[%583, %c0_220] : memref<32x128xf32, #tpu.memory_space<vmem>>, vector<1x128xf32>
    %585 = arith.addf %582, %584 : vector<1x128xf32>
    %cst_221 = arith.constant 0.000000e+00 : f32
    %586 = vector.broadcast %cst_221 : f32 to vector<1x128xf32>
    %587 = arith.maximumf %585, %586 : vector<1x128xf32>
    %588 = arith.index_cast %580 : i32 to index
    %c0_222 = arith.constant 0 : index
    %589 = vector.load %arg14[%588, %c0_222] : memref<16x128xf32, #tpu.memory_space<vmem>>, vector<1x128xf32>
    %590 = arith.addf %589, %587 : vector<1x128xf32>
    %591 = arith.index_cast %580 : i32 to index
    %c0_223 = arith.constant 0 : index
    %592 = vector.load %arg14[%591, %c0_223] : memref<16x128xf32, #tpu.memory_space<vmem>>, vector<1x128xf32>
    tpu.vector_store %arg14[%591, %c0_223], %590 {strides = array<i32>} : memref<16x128xf32, #tpu.memory_space<vmem>>, vector<1x128xf32>,
    %c2_i32_224 = arith.constant 2 : i32
    %593 = arith.index_cast %c2_i32_224 : i32 to index
    %594 = memref.load %arg0[%593] : memref<32xi32, #tpu.memory_space<smem>>
    %595 = arith.index_cast %c2_i32_224 : i32 to index
    %596 = memref.load %arg1[%595] : memref<32xi32, #tpu.memory_space<smem>>
    %597 = arith.index_cast %594 : i32 to index
    %c0_225 = arith.constant 0 : index
    %598 = vector.load %arg12[%597, %c0_225] : memref<16x128xf32, #tpu.memory_space<vmem>>, vector<1x128xf32>
    %599 = arith.index_cast %c2_i32_224 : i32 to index
    %c0_226 = arith.constant 0 : index
    %600 = vector.load %arg13[%599, %c0_226] : memref<32x128xf32, #tpu.memory_space<vmem>>, vector<1x128xf32>
    %601 = arith.addf %598, %600 : vector<1x128xf32>
    %cst_227 = arith.constant 0.000000e+00 : f32
    %602 = vector.broadcast %cst_227 : f32 to vector<1x128xf32>
    %603 = arith.maximumf %601, %602 : vector<1x128xf32>
    %604 = arith.index_cast %596 : i32 to index
    %c0_228 = arith.constant 0 : index
    %605 = vector.load %arg14[%604, %c0_228] : memref<16x128xf32, #tpu.memory_space<vmem>>, vector<1x128xf32>
    %606 = arith.addf %605, %603 : vector<1x128xf32>
    %607 = arith.index_cast %596 : i32 to index
    %c0_229 = arith.constant 0 : index
    %608 = vector.load %arg14[%607, %c0_229] : memref<16x128xf32, #tpu.memory_space<vmem>>, vector<1x128xf32>
    tpu.vector_store %arg14[%607, %c0_229], %606 {strides = array<i32>} : memref<16x128xf32, #tpu.memory_space<vmem>>, vector<1x128xf32>,
    %c3_i32_230 = arith.constant 3 : i32
    %609 = arith.index_cast %c3_i32_230 : i32 to index
    %610 = memref.load %arg0[%609] : memref<32xi32, #tpu.memory_space<smem>>
    %611 = arith.index_cast %c3_i32_230 : i32 to index
    %612 = memref.load %arg1[%611] : memref<32xi32, #tpu.memory_space<smem>>
    %613 = arith.index_cast %610 : i32 to index
    %c0_231 = arith.constant 0 : index
    %614 = vector.load %arg12[%613, %c0_231] : memref<16x128xf32, #tpu.memory_space<vmem>>, vector<1x128xf32>
    %615 = arith.index_cast %c3_i32_230 : i32 to index
    %c0_232 = arith.constant 0 : index
    %616 = vector.load %arg13[%615, %c0_232] : memref<32x128xf32, #tpu.memory_space<vmem>>, vector<1x128xf32>
    %617 = arith.addf %614, %616 : vector<1x128xf32>
    %cst_233 = arith.constant 0.000000e+00 : f32
    %618 = vector.broadcast %cst_233 : f32 to vector<1x128xf32>
    %619 = arith.maximumf %617, %618 : vector<1x128xf32>
    %620 = arith.index_cast %612 : i32 to index
    %c0_234 = arith.constant 0 : index
    %621 = vector.load %arg14[%620, %c0_234] : memref<16x128xf32, #tpu.memory_space<vmem>>, vector<1x128xf32>
    %622 = arith.addf %621, %619 : vector<1x128xf32>
    %623 = arith.index_cast %612 : i32 to index
    %c0_235 = arith.constant 0 : index
    %624 = vector.load %arg14[%623, %c0_235] : memref<16x128xf32, #tpu.memory_space<vmem>>, vector<1x128xf32>
    tpu.vector_store %arg14[%623, %c0_235], %622 {strides = array<i32>} : memref<16x128xf32, #tpu.memory_space<vmem>>, vector<1x128xf32>,
    %c4_i32_236 = arith.constant 4 : i32
    %625 = arith.index_cast %c4_i32_236 : i32 to index
    %626 = memref.load %arg0[%625] : memref<32xi32, #tpu.memory_space<smem>>
    %627 = arith.index_cast %c4_i32_236 : i32 to index
    %628 = memref.load %arg1[%627] : memref<32xi32, #tpu.memory_space<smem>>
    %629 = arith.index_cast %626 : i32 to index
    %c0_237 = arith.constant 0 : index
    %630 = vector.load %arg12[%629, %c0_237] : memref<16x128xf32, #tpu.memory_space<vmem>>, vector<1x128xf32>
    %631 = arith.index_cast %c4_i32_236 : i32 to index
    %c0_238 = arith.constant 0 : index
    %632 = vector.load %arg13[%631, %c0_238] : memref<32x128xf32, #tpu.memory_space<vmem>>, vector<1x128xf32>
    %633 = arith.addf %630, %632 : vector<1x128xf32>
    %cst_239 = arith.constant 0.000000e+00 : f32
    %634 = vector.broadcast %cst_239 : f32 to vector<1x128xf32>
    %635 = arith.maximumf %633, %634 : vector<1x128xf32>
    %636 = arith.index_cast %628 : i32 to index
    %c0_240 = arith.constant 0 : index
    %637 = vector.load %arg14[%636, %c0_240] : memref<16x128xf32, #tpu.memory_space<vmem>>, vector<1x128xf32>
    %638 = arith.addf %637, %635 : vector<1x128xf32>
    %639 = arith.index_cast %628 : i32 to index
    %c0_241 = arith.constant 0 : index
    %640 = vector.load %arg14[%639, %c0_241] : memref<16x128xf32, #tpu.memory_space<vmem>>, vector<1x128xf32>
    tpu.vector_store %arg14[%639, %c0_241], %638 {strides = array<i32>} : memref<16x128xf32, #tpu.memory_space<vmem>>, vector<1x128xf32>,
    %c5_i32_242 = arith.constant 5 : i32
    %641 = arith.index_cast %c5_i32_242 : i32 to index
    %642 = memref.load %arg0[%641] : memref<32xi32, #tpu.memory_space<smem>>
    %643 = arith.index_cast %c5_i32_242 : i32 to index
    %644 = memref.load %arg1[%643] : memref<32xi32, #tpu.memory_space<smem>>
    %645 = arith.index_cast %642 : i32 to index
    %c0_243 = arith.constant 0 : index
    %646 = vector.load %arg12[%645, %c0_243] : memref<16x128xf32, #tpu.memory_space<vmem>>, vector<1x128xf32>
    %647 = arith.index_cast %c5_i32_242 : i32 to index
    %c0_244 = arith.constant 0 : index
    %648 = vector.load %arg13[%647, %c0_244] : memref<32x128xf32, #tpu.memory_space<vmem>>, vector<1x128xf32>
    %649 = arith.addf %646, %648 : vector<1x128xf32>
    %cst_245 = arith.constant 0.000000e+00 : f32
    %650 = vector.broadcast %cst_245 : f32 to vector<1x128xf32>
    %651 = arith.maximumf %649, %650 : vector<1x128xf32>
    %652 = arith.index_cast %644 : i32 to index
    %c0_246 = arith.constant 0 : index
    %653 = vector.load %arg14[%652, %c0_246] : memref<16x128xf32, #tpu.memory_space<vmem>>, vector<1x128xf32>
    %654 = arith.addf %653, %651 : vector<1x128xf32>
    %655 = arith.index_cast %644 : i32 to index
    %c0_247 = arith.constant 0 : index
    %656 = vector.load %arg14[%655, %c0_247] : memref<16x128xf32, #tpu.memory_space<vmem>>, vector<1x128xf32>
    tpu.vector_store %arg14[%655, %c0_247], %654 {strides = array<i32>} : memref<16x128xf32, #tpu.memory_space<vmem>>, vector<1x128xf32>,
    %c6_i32_248 = arith.constant 6 : i32
    %657 = arith.index_cast %c6_i32_248 : i32 to index
    %658 = memref.load %arg0[%657] : memref<32xi32, #tpu.memory_space<smem>>
    %659 = arith.index_cast %c6_i32_248 : i32 to index
    %660 = memref.load %arg1[%659] : memref<32xi32, #tpu.memory_space<smem>>
    %661 = arith.index_cast %658 : i32 to index
    %c0_249 = arith.constant 0 : index
    %662 = vector.load %arg12[%661, %c0_249] : memref<16x128xf32, #tpu.memory_space<vmem>>, vector<1x128xf32>
    %663 = arith.index_cast %c6_i32_248 : i32 to index
    %c0_250 = arith.constant 0 : index
    %664 = vector.load %arg13[%663, %c0_250] : memref<32x128xf32, #tpu.memory_space<vmem>>, vector<1x128xf32>
    %665 = arith.addf %662, %664 : vector<1x128xf32>
    %cst_251 = arith.constant 0.000000e+00 : f32
    %666 = vector.broadcast %cst_251 : f32 to vector<1x128xf32>
    %667 = arith.maximumf %665, %666 : vector<1x128xf32>
    %668 = arith.index_cast %660 : i32 to index
    %c0_252 = arith.constant 0 : index
    %669 = vector.load %arg14[%668, %c0_252] : memref<16x128xf32, #tpu.memory_space<vmem>>, vector<1x128xf32>
    %670 = arith.addf %669, %667 : vector<1x128xf32>
    %671 = arith.index_cast %660 : i32 to index
    %c0_253 = arith.constant 0 : index
    %672 = vector.load %arg14[%671, %c0_253] : memref<16x128xf32, #tpu.memory_space<vmem>>, vector<1x128xf32>
    tpu.vector_store %arg14[%671, %c0_253], %670 {strides = array<i32>} : memref<16x128xf32, #tpu.memory_space<vmem>>, vector<1x128xf32>,
    %c7_i32_254 = arith.constant 7 : i32
    %673 = arith.index_cast %c7_i32_254 : i32 to index
    %674 = memref.load %arg0[%673] : memref<32xi32, #tpu.memory_space<smem>>
    %675 = arith.index_cast %c7_i32_254 : i32 to index
    %676 = memref.load %arg1[%675] : memref<32xi32, #tpu.memory_space<smem>>
    %677 = arith.index_cast %674 : i32 to index
    %c0_255 = arith.constant 0 : index
    %678 = vector.load %arg12[%677, %c0_255] : memref<16x128xf32, #tpu.memory_space<vmem>>, vector<1x128xf32>
    %679 = arith.index_cast %c7_i32_254 : i32 to index
    %c0_256 = arith.constant 0 : index
    %680 = vector.load %arg13[%679, %c0_256] : memref<32x128xf32, #tpu.memory_space<vmem>>, vector<1x128xf32>
    %681 = arith.addf %678, %680 : vector<1x128xf32>
    %cst_257 = arith.constant 0.000000e+00 : f32
    %682 = vector.broadcast %cst_257 : f32 to vector<1x128xf32>
    %683 = arith.maximumf %681, %682 : vector<1x128xf32>
    %684 = arith.index_cast %676 : i32 to index
    %c0_258 = arith.constant 0 : index
    %685 = vector.load %arg14[%684, %c0_258] : memref<16x128xf32, #tpu.memory_space<vmem>>, vector<1x128xf32>
    %686 = arith.addf %685, %683 : vector<1x128xf32>
    %687 = arith.index_cast %676 : i32 to index
    %c0_259 = arith.constant 0 : index
    %688 = vector.load %arg14[%687, %c0_259] : memref<16x128xf32, #tpu.memory_space<vmem>>, vector<1x128xf32>
    tpu.vector_store %arg14[%687, %c0_259], %686 {strides = array<i32>} : memref<16x128xf32, #tpu.memory_space<vmem>>, vector<1x128xf32>,
    %c8_i32_260 = arith.constant 8 : i32
    %689 = arith.index_cast %c8_i32_260 : i32 to index
    %690 = memref.load %arg0[%689] : memref<32xi32, #tpu.memory_space<smem>>
    %691 = arith.index_cast %c8_i32_260 : i32 to index
    %692 = memref.load %arg1[%691] : memref<32xi32, #tpu.memory_space<smem>>
    %693 = arith.index_cast %690 : i32 to index
    %c0_261 = arith.constant 0 : index
    %694 = vector.load %arg12[%693, %c0_261] : memref<16x128xf32, #tpu.memory_space<vmem>>, vector<1x128xf32>
    %695 = arith.index_cast %c8_i32_260 : i32 to index
    %c0_262 = arith.constant 0 : index
    %696 = vector.load %arg13[%695, %c0_262] : memref<32x128xf32, #tpu.memory_space<vmem>>, vector<1x128xf32>
    %697 = arith.addf %694, %696 : vector<1x128xf32>
    %cst_263 = arith.constant 0.000000e+00 : f32
    %698 = vector.broadcast %cst_263 : f32 to vector<1x128xf32>
    %699 = arith.maximumf %697, %698 : vector<1x128xf32>
    %700 = arith.index_cast %692 : i32 to index
    %c0_264 = arith.constant 0 : index
    %701 = vector.load %arg14[%700, %c0_264] : memref<16x128xf32, #tpu.memory_space<vmem>>, vector<1x128xf32>
    %702 = arith.addf %701, %699 : vector<1x128xf32>
    %703 = arith.index_cast %692 : i32 to index
    %c0_265 = arith.constant 0 : index
    %704 = vector.load %arg14[%703, %c0_265] : memref<16x128xf32, #tpu.memory_space<vmem>>, vector<1x128xf32>
    tpu.vector_store %arg14[%703, %c0_265], %702 {strides = array<i32>} : memref<16x128xf32, #tpu.memory_space<vmem>>, vector<1x128xf32>,
    %c9_i32_266 = arith.constant 9 : i32
    %705 = arith.index_cast %c9_i32_266 : i32 to index
    %706 = memref.load %arg0[%705] : memref<32xi32, #tpu.memory_space<smem>>
    %707 = arith.index_cast %c9_i32_266 : i32 to index
    %708 = memref.load %arg1[%707] : memref<32xi32, #tpu.memory_space<smem>>
    %709 = arith.index_cast %706 : i32 to index
    %c0_267 = arith.constant 0 : index
    %710 = vector.load %arg12[%709, %c0_267] : memref<16x128xf32, #tpu.memory_space<vmem>>, vector<1x128xf32>
    %711 = arith.index_cast %c9_i32_266 : i32 to index
    %c0_268 = arith.constant 0 : index
    %712 = vector.load %arg13[%711, %c0_268] : memref<32x128xf32, #tpu.memory_space<vmem>>, vector<1x128xf32>
    %713 = arith.addf %710, %712 : vector<1x128xf32>
    %cst_269 = arith.constant 0.000000e+00 : f32
    %714 = vector.broadcast %cst_269 : f32 to vector<1x128xf32>
    %715 = arith.maximumf %713, %714 : vector<1x128xf32>
    %716 = arith.index_cast %708 : i32 to index
    %c0_270 = arith.constant 0 : index
    %717 = vector.load %arg14[%716, %c0_270] : memref<16x128xf32, #tpu.memory_space<vmem>>, vector<1x128xf32>
    %718 = arith.addf %717, %715 : vector<1x128xf32>
    %719 = arith.index_cast %708 : i32 to index
    %c0_271 = arith.constant 0 : index
    %720 = vector.load %arg14[%719, %c0_271] : memref<16x128xf32, #tpu.memory_space<vmem>>, vector<1x128xf32>
    tpu.vector_store %arg14[%719, %c0_271], %718 {strides = array<i32>} : memref<16x128xf32, #tpu.memory_space<vmem>>, vector<1x128xf32>,
    %c10_i32_272 = arith.constant 10 : i32
    %721 = arith.index_cast %c10_i32_272 : i32 to index
    %722 = memref.load %arg0[%721] : memref<32xi32, #tpu.memory_space<smem>>
    %723 = arith.index_cast %c10_i32_272 : i32 to index
    %724 = memref.load %arg1[%723] : memref<32xi32, #tpu.memory_space<smem>>
    %725 = arith.index_cast %722 : i32 to index
    %c0_273 = arith.constant 0 : index
    %726 = vector.load %arg12[%725, %c0_273] : memref<16x128xf32, #tpu.memory_space<vmem>>, vector<1x128xf32>
    %727 = arith.index_cast %c10_i32_272 : i32 to index
    %c0_274 = arith.constant 0 : index
    %728 = vector.load %arg13[%727, %c0_274] : memref<32x128xf32, #tpu.memory_space<vmem>>, vector<1x128xf32>
    %729 = arith.addf %726, %728 : vector<1x128xf32>
    %cst_275 = arith.constant 0.000000e+00 : f32
    %730 = vector.broadcast %cst_275 : f32 to vector<1x128xf32>
    %731 = arith.maximumf %729, %730 : vector<1x128xf32>
    %732 = arith.index_cast %724 : i32 to index
    %c0_276 = arith.constant 0 : index
    %733 = vector.load %arg14[%732, %c0_276] : memref<16x128xf32, #tpu.memory_space<vmem>>, vector<1x128xf32>
    %734 = arith.addf %733, %731 : vector<1x128xf32>
    %735 = arith.index_cast %724 : i32 to index
    %c0_277 = arith.constant 0 : index
    %736 = vector.load %arg14[%735, %c0_277] : memref<16x128xf32, #tpu.memory_space<vmem>>, vector<1x128xf32>
    tpu.vector_store %arg14[%735, %c0_277], %734 {strides = array<i32>} : memref<16x128xf32, #tpu.memory_space<vmem>>, vector<1x128xf32>,
    %c11_i32_278 = arith.constant 11 : i32
    %737 = arith.index_cast %c11_i32_278 : i32 to index
    %738 = memref.load %arg0[%737] : memref<32xi32, #tpu.memory_space<smem>>
    %739 = arith.index_cast %c11_i32_278 : i32 to index
    %740 = memref.load %arg1[%739] : memref<32xi32, #tpu.memory_space<smem>>
    %741 = arith.index_cast %738 : i32 to index
    %c0_279 = arith.constant 0 : index
    %742 = vector.load %arg12[%741, %c0_279] : memref<16x128xf32, #tpu.memory_space<vmem>>, vector<1x128xf32>
    %743 = arith.index_cast %c11_i32_278 : i32 to index
    %c0_280 = arith.constant 0 : index
    %744 = vector.load %arg13[%743, %c0_280] : memref<32x128xf32, #tpu.memory_space<vmem>>, vector<1x128xf32>
    %745 = arith.addf %742, %744 : vector<1x128xf32>
    %cst_281 = arith.constant 0.000000e+00 : f32
    %746 = vector.broadcast %cst_281 : f32 to vector<1x128xf32>
    %747 = arith.maximumf %745, %746 : vector<1x128xf32>
    %748 = arith.index_cast %740 : i32 to index
    %c0_282 = arith.constant 0 : index
    %749 = vector.load %arg14[%748, %c0_282] : memref<16x128xf32, #tpu.memory_space<vmem>>, vector<1x128xf32>
    %750 = arith.addf %749, %747 : vector<1x128xf32>
    %751 = arith.index_cast %740 : i32 to index
    %c0_283 = arith.constant 0 : index
    %752 = vector.load %arg14[%751, %c0_283] : memref<16x128xf32, #tpu.memory_space<vmem>>, vector<1x128xf32>
    tpu.vector_store %arg14[%751, %c0_283], %750 {strides = array<i32>} : memref<16x128xf32, #tpu.memory_space<vmem>>, vector<1x128xf32>,
    %c12_i32_284 = arith.constant 12 : i32
    %753 = arith.index_cast %c12_i32_284 : i32 to index
    %754 = memref.load %arg0[%753] : memref<32xi32, #tpu.memory_space<smem>>
    %755 = arith.index_cast %c12_i32_284 : i32 to index
    %756 = memref.load %arg1[%755] : memref<32xi32, #tpu.memory_space<smem>>
    %757 = arith.index_cast %754 : i32 to index
    %c0_285 = arith.constant 0 : index
    %758 = vector.load %arg12[%757, %c0_285] : memref<16x128xf32, #tpu.memory_space<vmem>>, vector<1x128xf32>
    %759 = arith.index_cast %c12_i32_284 : i32 to index
    %c0_286 = arith.constant 0 : index
    %760 = vector.load %arg13[%759, %c0_286] : memref<32x128xf32, #tpu.memory_space<vmem>>, vector<1x128xf32>
    %761 = arith.addf %758, %760 : vector<1x128xf32>
    %cst_287 = arith.constant 0.000000e+00 : f32
    %762 = vector.broadcast %cst_287 : f32 to vector<1x128xf32>
    %763 = arith.maximumf %761, %762 : vector<1x128xf32>
    %764 = arith.index_cast %756 : i32 to index
    %c0_288 = arith.constant 0 : index
    %765 = vector.load %arg14[%764, %c0_288] : memref<16x128xf32, #tpu.memory_space<vmem>>, vector<1x128xf32>
    %766 = arith.addf %765, %763 : vector<1x128xf32>
    %767 = arith.index_cast %756 : i32 to index
    %c0_289 = arith.constant 0 : index
    %768 = vector.load %arg14[%767, %c0_289] : memref<16x128xf32, #tpu.memory_space<vmem>>, vector<1x128xf32>
    tpu.vector_store %arg14[%767, %c0_289], %766 {strides = array<i32>} : memref<16x128xf32, #tpu.memory_space<vmem>>, vector<1x128xf32>,
    %c13_i32_290 = arith.constant 13 : i32
    %769 = arith.index_cast %c13_i32_290 : i32 to index
    %770 = memref.load %arg0[%769] : memref<32xi32, #tpu.memory_space<smem>>
    %771 = arith.index_cast %c13_i32_290 : i32 to index
    %772 = memref.load %arg1[%771] : memref<32xi32, #tpu.memory_space<smem>>
    %773 = arith.index_cast %770 : i32 to index
    %c0_291 = arith.constant 0 : index
    %774 = vector.load %arg12[%773, %c0_291] : memref<16x128xf32, #tpu.memory_space<vmem>>, vector<1x128xf32>
    %775 = arith.index_cast %c13_i32_290 : i32 to index
    %c0_292 = arith.constant 0 : index
    %776 = vector.load %arg13[%775, %c0_292] : memref<32x128xf32, #tpu.memory_space<vmem>>, vector<1x128xf32>
    %777 = arith.addf %774, %776 : vector<1x128xf32>
    %cst_293 = arith.constant 0.000000e+00 : f32
    %778 = vector.broadcast %cst_293 : f32 to vector<1x128xf32>
    %779 = arith.maximumf %777, %778 : vector<1x128xf32>
    %780 = arith.index_cast %772 : i32 to index
    %c0_294 = arith.constant 0 : index
    %781 = vector.load %arg14[%780, %c0_294] : memref<16x128xf32, #tpu.memory_space<vmem>>, vector<1x128xf32>
    %782 = arith.addf %781, %779 : vector<1x128xf32>
    %783 = arith.index_cast %772 : i32 to index
    %c0_295 = arith.constant 0 : index
    %784 = vector.load %arg14[%783, %c0_295] : memref<16x128xf32, #tpu.memory_space<vmem>>, vector<1x128xf32>
    tpu.vector_store %arg14[%783, %c0_295], %782 {strides = array<i32>} : memref<16x128xf32, #tpu.memory_space<vmem>>, vector<1x128xf32>,
    %c14_i32_296 = arith.constant 14 : i32
    %785 = arith.index_cast %c14_i32_296 : i32 to index
    %786 = memref.load %arg0[%785] : memref<32xi32, #tpu.memory_space<smem>>
    %787 = arith.index_cast %c14_i32_296 : i32 to index
    %788 = memref.load %arg1[%787] : memref<32xi32, #tpu.memory_space<smem>>
    %789 = arith.index_cast %786 : i32 to index
    %c0_297 = arith.constant 0 : index
    %790 = vector.load %arg12[%789, %c0_297] : memref<16x128xf32, #tpu.memory_space<vmem>>, vector<1x128xf32>
    %791 = arith.index_cast %c14_i32_296 : i32 to index
    %c0_298 = arith.constant 0 : index
    %792 = vector.load %arg13[%791, %c0_298] : memref<32x128xf32, #tpu.memory_space<vmem>>, vector<1x128xf32>
    %793 = arith.addf %790, %792 : vector<1x128xf32>
    %cst_299 = arith.constant 0.000000e+00 : f32
    %794 = vector.broadcast %cst_299 : f32 to vector<1x128xf32>
    %795 = arith.maximumf %793, %794 : vector<1x128xf32>
    %796 = arith.index_cast %788 : i32 to index
    %c0_300 = arith.constant 0 : index
    %797 = vector.load %arg14[%796, %c0_300] : memref<16x128xf32, #tpu.memory_space<vmem>>, vector<1x128xf32>
    %798 = arith.addf %797, %795 : vector<1x128xf32>
    %799 = arith.index_cast %788 : i32 to index
    %c0_301 = arith.constant 0 : index
    %800 = vector.load %arg14[%799, %c0_301] : memref<16x128xf32, #tpu.memory_space<vmem>>, vector<1x128xf32>
    tpu.vector_store %arg14[%799, %c0_301], %798 {strides = array<i32>} : memref<16x128xf32, #tpu.memory_space<vmem>>, vector<1x128xf32>,
    %c15_i32_302 = arith.constant 15 : i32
    %801 = arith.index_cast %c15_i32_302 : i32 to index
    %802 = memref.load %arg0[%801] : memref<32xi32, #tpu.memory_space<smem>>
    %803 = arith.index_cast %c15_i32_302 : i32 to index
    %804 = memref.load %arg1[%803] : memref<32xi32, #tpu.memory_space<smem>>
    %805 = arith.index_cast %802 : i32 to index
    %c0_303 = arith.constant 0 : index
    %806 = vector.load %arg12[%805, %c0_303] : memref<16x128xf32, #tpu.memory_space<vmem>>, vector<1x128xf32>
    %807 = arith.index_cast %c15_i32_302 : i32 to index
    %c0_304 = arith.constant 0 : index
    %808 = vector.load %arg13[%807, %c0_304] : memref<32x128xf32, #tpu.memory_space<vmem>>, vector<1x128xf32>
    %809 = arith.addf %806, %808 : vector<1x128xf32>
    %cst_305 = arith.constant 0.000000e+00 : f32
    %810 = vector.broadcast %cst_305 : f32 to vector<1x128xf32>
    %811 = arith.maximumf %809, %810 : vector<1x128xf32>
    %812 = arith.index_cast %804 : i32 to index
    %c0_306 = arith.constant 0 : index
    %813 = vector.load %arg14[%812, %c0_306] : memref<16x128xf32, #tpu.memory_space<vmem>>, vector<1x128xf32>
    %814 = arith.addf %813, %811 : vector<1x128xf32>
    %815 = arith.index_cast %804 : i32 to index
    %c0_307 = arith.constant 0 : index
    %816 = vector.load %arg14[%815, %c0_307] : memref<16x128xf32, #tpu.memory_space<vmem>>, vector<1x128xf32>
    tpu.vector_store %arg14[%815, %c0_307], %814 {strides = array<i32>} : memref<16x128xf32, #tpu.memory_space<vmem>>, vector<1x128xf32>,
    %c16_i32_308 = arith.constant 16 : i32
    %817 = arith.index_cast %c16_i32_308 : i32 to index
    %818 = memref.load %arg0[%817] : memref<32xi32, #tpu.memory_space<smem>>
    %819 = arith.index_cast %c16_i32_308 : i32 to index
    %820 = memref.load %arg1[%819] : memref<32xi32, #tpu.memory_space<smem>>
    %821 = arith.index_cast %818 : i32 to index
    %c0_309 = arith.constant 0 : index
    %822 = vector.load %arg12[%821, %c0_309] : memref<16x128xf32, #tpu.memory_space<vmem>>, vector<1x128xf32>
    %823 = arith.index_cast %c16_i32_308 : i32 to index
    %c0_310 = arith.constant 0 : index
    %824 = vector.load %arg13[%823, %c0_310] : memref<32x128xf32, #tpu.memory_space<vmem>>, vector<1x128xf32>
    %825 = arith.addf %822, %824 : vector<1x128xf32>
    %cst_311 = arith.constant 0.000000e+00 : f32
    %826 = vector.broadcast %cst_311 : f32 to vector<1x128xf32>
    %827 = arith.maximumf %825, %826 : vector<1x128xf32>
    %828 = arith.index_cast %820 : i32 to index
    %c0_312 = arith.constant 0 : index
    %829 = vector.load %arg14[%828, %c0_312] : memref<16x128xf32, #tpu.memory_space<vmem>>, vector<1x128xf32>
    %830 = arith.addf %829, %827 : vector<1x128xf32>
    %831 = arith.index_cast %820 : i32 to index
    %c0_313 = arith.constant 0 : index
    %832 = vector.load %arg14[%831, %c0_313] : memref<16x128xf32, #tpu.memory_space<vmem>>, vector<1x128xf32>
    tpu.vector_store %arg14[%831, %c0_313], %830 {strides = array<i32>} : memref<16x128xf32, #tpu.memory_space<vmem>>, vector<1x128xf32>,
    %c17_i32_314 = arith.constant 17 : i32
    %833 = arith.index_cast %c17_i32_314 : i32 to index
    %834 = memref.load %arg0[%833] : memref<32xi32, #tpu.memory_space<smem>>
    %835 = arith.index_cast %c17_i32_314 : i32 to index
    %836 = memref.load %arg1[%835] : memref<32xi32, #tpu.memory_space<smem>>
    %837 = arith.index_cast %834 : i32 to index
    %c0_315 = arith.constant 0 : index
    %838 = vector.load %arg12[%837, %c0_315] : memref<16x128xf32, #tpu.memory_space<vmem>>, vector<1x128xf32>
    %839 = arith.index_cast %c17_i32_314 : i32 to index
    %c0_316 = arith.constant 0 : index
    %840 = vector.load %arg13[%839, %c0_316] : memref<32x128xf32, #tpu.memory_space<vmem>>, vector<1x128xf32>
    %841 = arith.addf %838, %840 : vector<1x128xf32>
    %cst_317 = arith.constant 0.000000e+00 : f32
    %842 = vector.broadcast %cst_317 : f32 to vector<1x128xf32>
    %843 = arith.maximumf %841, %842 : vector<1x128xf32>
    %844 = arith.index_cast %836 : i32 to index
    %c0_318 = arith.constant 0 : index
    %845 = vector.load %arg14[%844, %c0_318] : memref<16x128xf32, #tpu.memory_space<vmem>>, vector<1x128xf32>
    %846 = arith.addf %845, %843 : vector<1x128xf32>
    %847 = arith.index_cast %836 : i32 to index
    %c0_319 = arith.constant 0 : index
    %848 = vector.load %arg14[%847, %c0_319] : memref<16x128xf32, #tpu.memory_space<vmem>>, vector<1x128xf32>
    tpu.vector_store %arg14[%847, %c0_319], %846 {strides = array<i32>} : memref<16x128xf32, #tpu.memory_space<vmem>>, vector<1x128xf32>,
    %c18_i32_320 = arith.constant 18 : i32
    %849 = arith.index_cast %c18_i32_320 : i32 to index
    %850 = memref.load %arg0[%849] : memref<32xi32, #tpu.memory_space<smem>>
    %851 = arith.index_cast %c18_i32_320 : i32 to index
    %852 = memref.load %arg1[%851] : memref<32xi32, #tpu.memory_space<smem>>
    %853 = arith.index_cast %850 : i32 to index
    %c0_321 = arith.constant 0 : index
    %854 = vector.load %arg12[%853, %c0_321] : memref<16x128xf32, #tpu.memory_space<vmem>>, vector<1x128xf32>
    %855 = arith.index_cast %c18_i32_320 : i32 to index
    %c0_322 = arith.constant 0 : index
    %856 = vector.load %arg13[%855, %c0_322] : memref<32x128xf32, #tpu.memory_space<vmem>>, vector<1x128xf32>
    %857 = arith.addf %854, %856 : vector<1x128xf32>
    %cst_323 = arith.constant 0.000000e+00 : f32
    %858 = vector.broadcast %cst_323 : f32 to vector<1x128xf32>
    %859 = arith.maximumf %857, %858 : vector<1x128xf32>
    %860 = arith.index_cast %852 : i32 to index
    %c0_324 = arith.constant 0 : index
    %861 = vector.load %arg14[%860, %c0_324] : memref<16x128xf32, #tpu.memory_space<vmem>>, vector<1x128xf32>
    %862 = arith.addf %861, %859 : vector<1x128xf32>
    %863 = arith.index_cast %852 : i32 to index
    %c0_325 = arith.constant 0 : index
    %864 = vector.load %arg14[%863, %c0_325] : memref<16x128xf32, #tpu.memory_space<vmem>>, vector<1x128xf32>
    tpu.vector_store %arg14[%863, %c0_325], %862 {strides = array<i32>} : memref<16x128xf32, #tpu.memory_space<vmem>>, vector<1x128xf32>,
    %c19_i32_326 = arith.constant 19 : i32
    %865 = arith.index_cast %c19_i32_326 : i32 to index
    %866 = memref.load %arg0[%865] : memref<32xi32, #tpu.memory_space<smem>>
    %867 = arith.index_cast %c19_i32_326 : i32 to index
    %868 = memref.load %arg1[%867] : memref<32xi32, #tpu.memory_space<smem>>
    %869 = arith.index_cast %866 : i32 to index
    %c0_327 = arith.constant 0 : index
    %870 = vector.load %arg12[%869, %c0_327] : memref<16x128xf32, #tpu.memory_space<vmem>>, vector<1x128xf32>
    %871 = arith.index_cast %c19_i32_326 : i32 to index
    %c0_328 = arith.constant 0 : index
    %872 = vector.load %arg13[%871, %c0_328] : memref<32x128xf32, #tpu.memory_space<vmem>>, vector<1x128xf32>
    %873 = arith.addf %870, %872 : vector<1x128xf32>
    %cst_329 = arith.constant 0.000000e+00 : f32
    %874 = vector.broadcast %cst_329 : f32 to vector<1x128xf32>
    %875 = arith.maximumf %873, %874 : vector<1x128xf32>
    %876 = arith.index_cast %868 : i32 to index
    %c0_330 = arith.constant 0 : index
    %877 = vector.load %arg14[%876, %c0_330] : memref<16x128xf32, #tpu.memory_space<vmem>>, vector<1x128xf32>
    %878 = arith.addf %877, %875 : vector<1x128xf32>
    %879 = arith.index_cast %868 : i32 to index
    %c0_331 = arith.constant 0 : index
    %880 = vector.load %arg14[%879, %c0_331] : memref<16x128xf32, #tpu.memory_space<vmem>>, vector<1x128xf32>
    tpu.vector_store %arg14[%879, %c0_331], %878 {strides = array<i32>} : memref<16x128xf32, #tpu.memory_space<vmem>>, vector<1x128xf32>,
    %c20_i32_332 = arith.constant 20 : i32
    %881 = arith.index_cast %c20_i32_332 : i32 to index
    %882 = memref.load %arg0[%881] : memref<32xi32, #tpu.memory_space<smem>>
    %883 = arith.index_cast %c20_i32_332 : i32 to index
    %884 = memref.load %arg1[%883] : memref<32xi32, #tpu.memory_space<smem>>
    %885 = arith.index_cast %882 : i32 to index
    %c0_333 = arith.constant 0 : index
    %886 = vector.load %arg12[%885, %c0_333] : memref<16x128xf32, #tpu.memory_space<vmem>>, vector<1x128xf32>
    %887 = arith.index_cast %c20_i32_332 : i32 to index
    %c0_334 = arith.constant 0 : index
    %888 = vector.load %arg13[%887, %c0_334] : memref<32x128xf32, #tpu.memory_space<vmem>>, vector<1x128xf32>
    %889 = arith.addf %886, %888 : vector<1x128xf32>
    %cst_335 = arith.constant 0.000000e+00 : f32
    %890 = vector.broadcast %cst_335 : f32 to vector<1x128xf32>
    %891 = arith.maximumf %889, %890 : vector<1x128xf32>
    %892 = arith.index_cast %884 : i32 to index
    %c0_336 = arith.constant 0 : index
    %893 = vector.load %arg14[%892, %c0_336] : memref<16x128xf32, #tpu.memory_space<vmem>>, vector<1x128xf32>
    %894 = arith.addf %893, %891 : vector<1x128xf32>
    %895 = arith.index_cast %884 : i32 to index
    %c0_337 = arith.constant 0 : index
    %896 = vector.load %arg14[%895, %c0_337] : memref<16x128xf32, #tpu.memory_space<vmem>>, vector<1x128xf32>
    tpu.vector_store %arg14[%895, %c0_337], %894 {strides = array<i32>} : memref<16x128xf32, #tpu.memory_space<vmem>>, vector<1x128xf32>,
    %c21_i32_338 = arith.constant 21 : i32
    %897 = arith.index_cast %c21_i32_338 : i32 to index
    %898 = memref.load %arg0[%897] : memref<32xi32, #tpu.memory_space<smem>>
    %899 = arith.index_cast %c21_i32_338 : i32 to index
    %900 = memref.load %arg1[%899] : memref<32xi32, #tpu.memory_space<smem>>
    %901 = arith.index_cast %898 : i32 to index
    %c0_339 = arith.constant 0 : index
    %902 = vector.load %arg12[%901, %c0_339] : memref<16x128xf32, #tpu.memory_space<vmem>>, vector<1x128xf32>
    %903 = arith.index_cast %c21_i32_338 : i32 to index
    %c0_340 = arith.constant 0 : index
    %904 = vector.load %arg13[%903, %c0_340] : memref<32x128xf32, #tpu.memory_space<vmem>>, vector<1x128xf32>
    %905 = arith.addf %902, %904 : vector<1x128xf32>
    %cst_341 = arith.constant 0.000000e+00 : f32
    %906 = vector.broadcast %cst_341 : f32 to vector<1x128xf32>
    %907 = arith.maximumf %905, %906 : vector<1x128xf32>
    %908 = arith.index_cast %900 : i32 to index
    %c0_342 = arith.constant 0 : index
    %909 = vector.load %arg14[%908, %c0_342] : memref<16x128xf32, #tpu.memory_space<vmem>>, vector<1x128xf32>
    %910 = arith.addf %909, %907 : vector<1x128xf32>
    %911 = arith.index_cast %900 : i32 to index
    %c0_343 = arith.constant 0 : index
    %912 = vector.load %arg14[%911, %c0_343] : memref<16x128xf32, #tpu.memory_space<vmem>>, vector<1x128xf32>
    tpu.vector_store %arg14[%911, %c0_343], %910 {strides = array<i32>} : memref<16x128xf32, #tpu.memory_space<vmem>>, vector<1x128xf32>,
    %c22_i32_344 = arith.constant 22 : i32
    %913 = arith.index_cast %c22_i32_344 : i32 to index
    %914 = memref.load %arg0[%913] : memref<32xi32, #tpu.memory_space<smem>>
    %915 = arith.index_cast %c22_i32_344 : i32 to index
    %916 = memref.load %arg1[%915] : memref<32xi32, #tpu.memory_space<smem>>
    %917 = arith.index_cast %914 : i32 to index
    %c0_345 = arith.constant 0 : index
    %918 = vector.load %arg12[%917, %c0_345] : memref<16x128xf32, #tpu.memory_space<vmem>>, vector<1x128xf32>
    %919 = arith.index_cast %c22_i32_344 : i32 to index
    %c0_346 = arith.constant 0 : index
    %920 = vector.load %arg13[%919, %c0_346] : memref<32x128xf32, #tpu.memory_space<vmem>>, vector<1x128xf32>
    %921 = arith.addf %918, %920 : vector<1x128xf32>
    %cst_347 = arith.constant 0.000000e+00 : f32
    %922 = vector.broadcast %cst_347 : f32 to vector<1x128xf32>
    %923 = arith.maximumf %921, %922 : vector<1x128xf32>
    %924 = arith.index_cast %916 : i32 to index
    %c0_348 = arith.constant 0 : index
    %925 = vector.load %arg14[%924, %c0_348] : memref<16x128xf32, #tpu.memory_space<vmem>>, vector<1x128xf32>
    %926 = arith.addf %925, %923 : vector<1x128xf32>
    %927 = arith.index_cast %916 : i32 to index
    %c0_349 = arith.constant 0 : index
    %928 = vector.load %arg14[%927, %c0_349] : memref<16x128xf32, #tpu.memory_space<vmem>>, vector<1x128xf32>
    tpu.vector_store %arg14[%927, %c0_349], %926 {strides = array<i32>} : memref<16x128xf32, #tpu.memory_space<vmem>>, vector<1x128xf32>,
    %c23_i32_350 = arith.constant 23 : i32
    %929 = arith.index_cast %c23_i32_350 : i32 to index
    %930 = memref.load %arg0[%929] : memref<32xi32, #tpu.memory_space<smem>>
    %931 = arith.index_cast %c23_i32_350 : i32 to index
    %932 = memref.load %arg1[%931] : memref<32xi32, #tpu.memory_space<smem>>
    %933 = arith.index_cast %930 : i32 to index
    %c0_351 = arith.constant 0 : index
    %934 = vector.load %arg12[%933, %c0_351] : memref<16x128xf32, #tpu.memory_space<vmem>>, vector<1x128xf32>
    %935 = arith.index_cast %c23_i32_350 : i32 to index
    %c0_352 = arith.constant 0 : index
    %936 = vector.load %arg13[%935, %c0_352] : memref<32x128xf32, #tpu.memory_space<vmem>>, vector<1x128xf32>
    %937 = arith.addf %934, %936 : vector<1x128xf32>
    %cst_353 = arith.constant 0.000000e+00 : f32
    %938 = vector.broadcast %cst_353 : f32 to vector<1x128xf32>
    %939 = arith.maximumf %937, %938 : vector<1x128xf32>
    %940 = arith.index_cast %932 : i32 to index
    %c0_354 = arith.constant 0 : index
    %941 = vector.load %arg14[%940, %c0_354] : memref<16x128xf32, #tpu.memory_space<vmem>>, vector<1x128xf32>
    %942 = arith.addf %941, %939 : vector<1x128xf32>
    %943 = arith.index_cast %932 : i32 to index
    %c0_355 = arith.constant 0 : index
    %944 = vector.load %arg14[%943, %c0_355] : memref<16x128xf32, #tpu.memory_space<vmem>>, vector<1x128xf32>
    tpu.vector_store %arg14[%943, %c0_355], %942 {strides = array<i32>} : memref<16x128xf32, #tpu.memory_space<vmem>>, vector<1x128xf32>,
    %c24_i32_356 = arith.constant 24 : i32
    %945 = arith.index_cast %c24_i32_356 : i32 to index
    %946 = memref.load %arg0[%945] : memref<32xi32, #tpu.memory_space<smem>>
    %947 = arith.index_cast %c24_i32_356 : i32 to index
    %948 = memref.load %arg1[%947] : memref<32xi32, #tpu.memory_space<smem>>
    %949 = arith.index_cast %946 : i32 to index
    %c0_357 = arith.constant 0 : index
    %950 = vector.load %arg12[%949, %c0_357] : memref<16x128xf32, #tpu.memory_space<vmem>>, vector<1x128xf32>
    %951 = arith.index_cast %c24_i32_356 : i32 to index
    %c0_358 = arith.constant 0 : index
    %952 = vector.load %arg13[%951, %c0_358] : memref<32x128xf32, #tpu.memory_space<vmem>>, vector<1x128xf32>
    %953 = arith.addf %950, %952 : vector<1x128xf32>
    %cst_359 = arith.constant 0.000000e+00 : f32
    %954 = vector.broadcast %cst_359 : f32 to vector<1x128xf32>
    %955 = arith.maximumf %953, %954 : vector<1x128xf32>
    %956 = arith.index_cast %948 : i32 to index
    %c0_360 = arith.constant 0 : index
    %957 = vector.load %arg14[%956, %c0_360] : memref<16x128xf32, #tpu.memory_space<vmem>>, vector<1x128xf32>
    %958 = arith.addf %957, %955 : vector<1x128xf32>
    %959 = arith.index_cast %948 : i32 to index
    %c0_361 = arith.constant 0 : index
    %960 = vector.load %arg14[%959, %c0_361] : memref<16x128xf32, #tpu.memory_space<vmem>>, vector<1x128xf32>
    tpu.vector_store %arg14[%959, %c0_361], %958 {strides = array<i32>} : memref<16x128xf32, #tpu.memory_space<vmem>>, vector<1x128xf32>,
    %c25_i32_362 = arith.constant 25 : i32
    %961 = arith.index_cast %c25_i32_362 : i32 to index
    %962 = memref.load %arg0[%961] : memref<32xi32, #tpu.memory_space<smem>>
    %963 = arith.index_cast %c25_i32_362 : i32 to index
    %964 = memref.load %arg1[%963] : memref<32xi32, #tpu.memory_space<smem>>
    %965 = arith.index_cast %962 : i32 to index
    %c0_363 = arith.constant 0 : index
    %966 = vector.load %arg12[%965, %c0_363] : memref<16x128xf32, #tpu.memory_space<vmem>>, vector<1x128xf32>
    %967 = arith.index_cast %c25_i32_362 : i32 to index
    %c0_364 = arith.constant 0 : index
    %968 = vector.load %arg13[%967, %c0_364] : memref<32x128xf32, #tpu.memory_space<vmem>>, vector<1x128xf32>
    %969 = arith.addf %966, %968 : vector<1x128xf32>
    %cst_365 = arith.constant 0.000000e+00 : f32
    %970 = vector.broadcast %cst_365 : f32 to vector<1x128xf32>
    %971 = arith.maximumf %969, %970 : vector<1x128xf32>
    %972 = arith.index_cast %964 : i32 to index
    %c0_366 = arith.constant 0 : index
    %973 = vector.load %arg14[%972, %c0_366] : memref<16x128xf32, #tpu.memory_space<vmem>>, vector<1x128xf32>
    %974 = arith.addf %973, %971 : vector<1x128xf32>
    %975 = arith.index_cast %964 : i32 to index
    %c0_367 = arith.constant 0 : index
    %976 = vector.load %arg14[%975, %c0_367] : memref<16x128xf32, #tpu.memory_space<vmem>>, vector<1x128xf32>
    tpu.vector_store %arg14[%975, %c0_367], %974 {strides = array<i32>} : memref<16x128xf32, #tpu.memory_space<vmem>>, vector<1x128xf32>,
    %c26_i32_368 = arith.constant 26 : i32
    %977 = arith.index_cast %c26_i32_368 : i32 to index
    %978 = memref.load %arg0[%977] : memref<32xi32, #tpu.memory_space<smem>>
    %979 = arith.index_cast %c26_i32_368 : i32 to index
    %980 = memref.load %arg1[%979] : memref<32xi32, #tpu.memory_space<smem>>
    %981 = arith.index_cast %978 : i32 to index
    %c0_369 = arith.constant 0 : index
    %982 = vector.load %arg12[%981, %c0_369] : memref<16x128xf32, #tpu.memory_space<vmem>>, vector<1x128xf32>
    %983 = arith.index_cast %c26_i32_368 : i32 to index
    %c0_370 = arith.constant 0 : index
    %984 = vector.load %arg13[%983, %c0_370] : memref<32x128xf32, #tpu.memory_space<vmem>>, vector<1x128xf32>
    %985 = arith.addf %982, %984 : vector<1x128xf32>
    %cst_371 = arith.constant 0.000000e+00 : f32
    %986 = vector.broadcast %cst_371 : f32 to vector<1x128xf32>
    %987 = arith.maximumf %985, %986 : vector<1x128xf32>
    %988 = arith.index_cast %980 : i32 to index
    %c0_372 = arith.constant 0 : index
    %989 = vector.load %arg14[%988, %c0_372] : memref<16x128xf32, #tpu.memory_space<vmem>>, vector<1x128xf32>
    %990 = arith.addf %989, %987 : vector<1x128xf32>
    %991 = arith.index_cast %980 : i32 to index
    %c0_373 = arith.constant 0 : index
    %992 = vector.load %arg14[%991, %c0_373] : memref<16x128xf32, #tpu.memory_space<vmem>>, vector<1x128xf32>
    tpu.vector_store %arg14[%991, %c0_373], %990 {strides = array<i32>} : memref<16x128xf32, #tpu.memory_space<vmem>>, vector<1x128xf32>,
    %c27_i32_374 = arith.constant 27 : i32
    %993 = arith.index_cast %c27_i32_374 : i32 to index
    %994 = memref.load %arg0[%993] : memref<32xi32, #tpu.memory_space<smem>>
    %995 = arith.index_cast %c27_i32_374 : i32 to index
    %996 = memref.load %arg1[%995] : memref<32xi32, #tpu.memory_space<smem>>
    %997 = arith.index_cast %994 : i32 to index
    %c0_375 = arith.constant 0 : index
    %998 = vector.load %arg12[%997, %c0_375] : memref<16x128xf32, #tpu.memory_space<vmem>>, vector<1x128xf32>
    %999 = arith.index_cast %c27_i32_374 : i32 to index
    %c0_376 = arith.constant 0 : index
    %1000 = vector.load %arg13[%999, %c0_376] : memref<32x128xf32, #tpu.memory_space<vmem>>, vector<1x128xf32>
    %1001 = arith.addf %998, %1000 : vector<1x128xf32>
    %cst_377 = arith.constant 0.000000e+00 : f32
    %1002 = vector.broadcast %cst_377 : f32 to vector<1x128xf32>
    %1003 = arith.maximumf %1001, %1002 : vector<1x128xf32>
    %1004 = arith.index_cast %996 : i32 to index
    %c0_378 = arith.constant 0 : index
    %1005 = vector.load %arg14[%1004, %c0_378] : memref<16x128xf32, #tpu.memory_space<vmem>>, vector<1x128xf32>
    %1006 = arith.addf %1005, %1003 : vector<1x128xf32>
    %1007 = arith.index_cast %996 : i32 to index
    %c0_379 = arith.constant 0 : index
    %1008 = vector.load %arg14[%1007, %c0_379] : memref<16x128xf32, #tpu.memory_space<vmem>>, vector<1x128xf32>
    tpu.vector_store %arg14[%1007, %c0_379], %1006 {strides = array<i32>} : memref<16x128xf32, #tpu.memory_space<vmem>>, vector<1x128xf32>,
    %c28_i32_380 = arith.constant 28 : i32
    %1009 = arith.index_cast %c28_i32_380 : i32 to index
    %1010 = memref.load %arg0[%1009] : memref<32xi32, #tpu.memory_space<smem>>
    %1011 = arith.index_cast %c28_i32_380 : i32 to index
    %1012 = memref.load %arg1[%1011] : memref<32xi32, #tpu.memory_space<smem>>
    %1013 = arith.index_cast %1010 : i32 to index
    %c0_381 = arith.constant 0 : index
    %1014 = vector.load %arg12[%1013, %c0_381] : memref<16x128xf32, #tpu.memory_space<vmem>>, vector<1x128xf32>
    %1015 = arith.index_cast %c28_i32_380 : i32 to index
    %c0_382 = arith.constant 0 : index
    %1016 = vector.load %arg13[%1015, %c0_382] : memref<32x128xf32, #tpu.memory_space<vmem>>, vector<1x128xf32>
    %1017 = arith.addf %1014, %1016 : vector<1x128xf32>
    %cst_383 = arith.constant 0.000000e+00 : f32
    %1018 = vector.broadcast %cst_383 : f32 to vector<1x128xf32>
    %1019 = arith.maximumf %1017, %1018 : vector<1x128xf32>
    %1020 = arith.index_cast %1012 : i32 to index
    %c0_384 = arith.constant 0 : index
    %1021 = vector.load %arg14[%1020, %c0_384] : memref<16x128xf32, #tpu.memory_space<vmem>>, vector<1x128xf32>
    %1022 = arith.addf %1021, %1019 : vector<1x128xf32>
    %1023 = arith.index_cast %1012 : i32 to index
    %c0_385 = arith.constant 0 : index
    %1024 = vector.load %arg14[%1023, %c0_385] : memref<16x128xf32, #tpu.memory_space<vmem>>, vector<1x128xf32>
    tpu.vector_store %arg14[%1023, %c0_385], %1022 {strides = array<i32>} : memref<16x128xf32, #tpu.memory_space<vmem>>, vector<1x128xf32>,
    %c29_i32_386 = arith.constant 29 : i32
    %1025 = arith.index_cast %c29_i32_386 : i32 to index
    %1026 = memref.load %arg0[%1025] : memref<32xi32, #tpu.memory_space<smem>>
    %1027 = arith.index_cast %c29_i32_386 : i32 to index
    %1028 = memref.load %arg1[%1027] : memref<32xi32, #tpu.memory_space<smem>>
    %1029 = arith.index_cast %1026 : i32 to index
    %c0_387 = arith.constant 0 : index
    %1030 = vector.load %arg12[%1029, %c0_387] : memref<16x128xf32, #tpu.memory_space<vmem>>, vector<1x128xf32>
    %1031 = arith.index_cast %c29_i32_386 : i32 to index
    %c0_388 = arith.constant 0 : index
    %1032 = vector.load %arg13[%1031, %c0_388] : memref<32x128xf32, #tpu.memory_space<vmem>>, vector<1x128xf32>
    %1033 = arith.addf %1030, %1032 : vector<1x128xf32>
    %cst_389 = arith.constant 0.000000e+00 : f32
    %1034 = vector.broadcast %cst_389 : f32 to vector<1x128xf32>
    %1035 = arith.maximumf %1033, %1034 : vector<1x128xf32>
    %1036 = arith.index_cast %1028 : i32 to index
    %c0_390 = arith.constant 0 : index
    %1037 = vector.load %arg14[%1036, %c0_390] : memref<16x128xf32, #tpu.memory_space<vmem>>, vector<1x128xf32>
    %1038 = arith.addf %1037, %1035 : vector<1x128xf32>
    %1039 = arith.index_cast %1028 : i32 to index
    %c0_391 = arith.constant 0 : index
    %1040 = vector.load %arg14[%1039, %c0_391] : memref<16x128xf32, #tpu.memory_space<vmem>>, vector<1x128xf32>
    tpu.vector_store %arg14[%1039, %c0_391], %1038 {strides = array<i32>} : memref<16x128xf32, #tpu.memory_space<vmem>>, vector<1x128xf32>,
    %c30_i32_392 = arith.constant 30 : i32
    %1041 = arith.index_cast %c30_i32_392 : i32 to index
    %1042 = memref.load %arg0[%1041] : memref<32xi32, #tpu.memory_space<smem>>
    %1043 = arith.index_cast %c30_i32_392 : i32 to index
    %1044 = memref.load %arg1[%1043] : memref<32xi32, #tpu.memory_space<smem>>
    %1045 = arith.index_cast %1042 : i32 to index
    %c0_393 = arith.constant 0 : index
    %1046 = vector.load %arg12[%1045, %c0_393] : memref<16x128xf32, #tpu.memory_space<vmem>>, vector<1x128xf32>
    %1047 = arith.index_cast %c30_i32_392 : i32 to index
    %c0_394 = arith.constant 0 : index
    %1048 = vector.load %arg13[%1047, %c0_394] : memref<32x128xf32, #tpu.memory_space<vmem>>, vector<1x128xf32>
    %1049 = arith.addf %1046, %1048 : vector<1x128xf32>
    %cst_395 = arith.constant 0.000000e+00 : f32
    %1050 = vector.broadcast %cst_395 : f32 to vector<1x128xf32>
    %1051 = arith.maximumf %1049, %1050 : vector<1x128xf32>
    %1052 = arith.index_cast %1044 : i32 to index
    %c0_396 = arith.constant 0 : index
    %1053 = vector.load %arg14[%1052, %c0_396] : memref<16x128xf32, #tpu.memory_space<vmem>>, vector<1x128xf32>
    %1054 = arith.addf %1053, %1051 : vector<1x128xf32>
    %1055 = arith.index_cast %1044 : i32 to index
    %c0_397 = arith.constant 0 : index
    %1056 = vector.load %arg14[%1055, %c0_397] : memref<16x128xf32, #tpu.memory_space<vmem>>, vector<1x128xf32>
    tpu.vector_store %arg14[%1055, %c0_397], %1054 {strides = array<i32>} : memref<16x128xf32, #tpu.memory_space<vmem>>, vector<1x128xf32>,
    %c31_i32_398 = arith.constant 31 : i32
    %1057 = arith.index_cast %c31_i32_398 : i32 to index
    %1058 = memref.load %arg0[%1057] : memref<32xi32, #tpu.memory_space<smem>>
    %1059 = arith.index_cast %c31_i32_398 : i32 to index
    %1060 = memref.load %arg1[%1059] : memref<32xi32, #tpu.memory_space<smem>>
    %1061 = arith.index_cast %1058 : i32 to index
    %c0_399 = arith.constant 0 : index
    %1062 = vector.load %arg12[%1061, %c0_399] : memref<16x128xf32, #tpu.memory_space<vmem>>, vector<1x128xf32>
    %1063 = arith.index_cast %c31_i32_398 : i32 to index
    %c0_400 = arith.constant 0 : index
    %1064 = vector.load %arg13[%1063, %c0_400] : memref<32x128xf32, #tpu.memory_space<vmem>>, vector<1x128xf32>
    %1065 = arith.addf %1062, %1064 : vector<1x128xf32>
    %cst_401 = arith.constant 0.000000e+00 : f32
    %1066 = vector.broadcast %cst_401 : f32 to vector<1x128xf32>
    %1067 = arith.maximumf %1065, %1066 : vector<1x128xf32>
    %1068 = arith.index_cast %1060 : i32 to index
    %c0_402 = arith.constant 0 : index
    %1069 = vector.load %arg14[%1068, %c0_402] : memref<16x128xf32, #tpu.memory_space<vmem>>, vector<1x128xf32>
    %1070 = arith.addf %1069, %1067 : vector<1x128xf32>
    %1071 = arith.index_cast %1060 : i32 to index
    %c0_403 = arith.constant 0 : index
    %1072 = vector.load %arg14[%1071, %c0_403] : memref<16x128xf32, #tpu.memory_space<vmem>>, vector<1x128xf32>
    tpu.vector_store %arg14[%1071, %c0_403], %1070 {strides = array<i32>} : memref<16x128xf32, #tpu.memory_space<vmem>>, vector<1x128xf32>,
    %c32_i32_404 = arith.constant 32 : i32
    %c1_405 = arith.constant 1 : index
    %1073 = memref.load %arg2[%c1_405] : memref<2xf32, #tpu.memory_space<smem>>
    %c0_406 = arith.constant 0 : index
    %c0_407 = arith.constant 0 : index
    %1074 = vector.load %arg12[%c0_406, %c0_407] : memref<16x128xf32, #tpu.memory_space<vmem>>, vector<16x128xf32>
    %1075 = vector.broadcast %1073 : f32 to vector<16x128xf32>
    %1076 = arith.mulf %1075, %1074 : vector<16x128xf32>
    %c0_408 = arith.constant 0 : index
    %c0_409 = arith.constant 0 : index
    %1077 = vector.load %arg14[%c0_408, %c0_409] : memref<16x128xf32, #tpu.memory_space<vmem>>, vector<16x128xf32>
    %1078 = arith.addf %1076, %1077 : vector<16x128xf32>
    %c1_410 = arith.constant 1 : index
    %c0_411 = arith.constant 0 : index
    %c0_412 = arith.constant 0 : index
    %1079 = vector.load %arg7[%c1_410, %c0_411, %c0_412] : memref<2x128x128xf32, #tpu.memory_space<vmem>>, vector<1x128x128xf32>
    %1080 = vector.shape_cast %1079 : vector<1x128x128xf32> to vector<128x128xf32>
    %cst_413 = arith.constant dense<0.000000e+00> : vector<16x128xf32>
    %1081 = tpu.matmul %1078, %1080, %cst_413 {dimension_numbers = #tpu.dot_dimension_numbers<[1], [0], [0], [1], [0, 0, 1, 1], [], []>} : vector<16x128xf32>, vector<128x128xf32>, vector<16x128xf32> -> vector<16x128xf32>
    %c1_414 = arith.constant 1 : index
    %c0_415 = arith.constant 0 : index
    %c0_416 = arith.constant 0 : index
    %1082 = vector.load %arg8[%c1_414, %c0_415, %c0_416] : memref<2x1x128xf32, #tpu.memory_space<vmem>>, vector<1x1x128xf32>
    %1083 = vector.shape_cast %1082 : vector<1x1x128xf32> to vector<1x128xf32>
    %1084 = vector.broadcast %1083 : vector<1x128xf32> to vector<16x128xf32>
    %1085 = arith.addf %1081, %1084 : vector<16x128xf32>
    %cst_417 = arith.constant 0.000000e+00 : f32
    %1086 = vector.broadcast %cst_417 : f32 to vector<16x128xf32>
    %1087 = arith.maximumf %1085, %1086 : vector<16x128xf32>
    %c1_418 = arith.constant 1 : index
    %c0_419 = arith.constant 0 : index
    %c0_420 = arith.constant 0 : index
    %1088 = vector.load %arg9[%c1_418, %c0_419, %c0_420] : memref<2x128x128xf32, #tpu.memory_space<vmem>>, vector<1x128x128xf32>
    %1089 = vector.shape_cast %1088 : vector<1x128x128xf32> to vector<128x128xf32>
    %cst_421 = arith.constant dense<0.000000e+00> : vector<16x128xf32>
    %1090 = tpu.matmul %1087, %1089, %cst_421 {dimension_numbers = #tpu.dot_dimension_numbers<[1], [0], [0], [1], [0, 0, 1, 1], [], []>} : vector<16x128xf32>, vector<128x128xf32>, vector<16x128xf32> -> vector<16x128xf32>
    %c1_422 = arith.constant 1 : index
    %c0_423 = arith.constant 0 : index
    %c0_424 = arith.constant 0 : index
    %1091 = vector.load %arg10[%c1_422, %c0_423, %c0_424] : memref<2x1x128xf32, #tpu.memory_space<vmem>>, vector<1x1x128xf32>
    %1092 = vector.shape_cast %1091 : vector<1x1x128xf32> to vector<1x128xf32>
    %1093 = vector.broadcast %1092 : vector<1x128xf32> to vector<16x128xf32>
    %1094 = arith.addf %1090, %1093 : vector<16x128xf32>
    %c0_425 = arith.constant 0 : index
    %c0_426 = arith.constant 0 : index
    %1095 = vector.load %arg12[%c0_425, %c0_426] : memref<16x128xf32, #tpu.memory_space<vmem>>, vector<16x128xf32>
    tpu.vector_store %arg12[%c0_425, %c0_426], %1094 {strides = array<i32>} : memref<16x128xf32, #tpu.memory_space<vmem>>, vector<16x128xf32>,
    %c0_427 = arith.constant 0 : index
    %c0_428 = arith.constant 0 : index
    %1096 = vector.load %arg12[%c0_427, %c0_428] : memref<16x128xf32, #tpu.memory_space<vmem>>, vector<16x128xf32>
    %c0_429 = arith.constant 0 : index
    %c0_430 = arith.constant 0 : index
    %1097 = vector.load %arg11[%c0_429, %c0_430] : memref<16x128xf32, #tpu.memory_space<vmem>>, vector<16x128xf32>
    tpu.vector_store %arg11[%c0_429, %c0_430], %1096 {strides = array<i32>} : memref<16x128xf32, #tpu.memory_space<vmem>>, vector<16x128xf32>,
    return
  }
}

</mosaic_0001>

<llo_original>
// kernel: tpu_custom_call.1
$region0: #{tpu_custom_call.1}
  #allocation0 [shape = 'u32[]', space=smem, size = 0x4, offset = 0x4, fixed_abs, tag = 'smem constant byte address 0x4 - core index']
  #allocation1 [shape = 'u32[144,128]{1,0:T(1,128)}', space=vmem, size = 0x12000, scoped, tag = 'internal scratch']
  #allocation2 [shape = 'f32[16,128]{1,0:T(8,128)}', space=vmem, size = 0x2000, scoped, tag = 'scratch operand']
  #allocation3 [shape = 'f32[32,128]{1,0:T(8,128)}', space=vmem, size = 0x4000, scoped, tag = 'scratch operand']
  #allocation4 [shape = 'f32[16,128]{1,0:T(8,128)}', space=vmem, size = 0x2000, scoped, tag = 'scratch operand']
  %s0 = inlined_call_operand.vmem [shape: s32[32], index: 0, kind: input, shape index: {}]
  %s1 = inlined_call_operand.vmem [shape: s32[32], index: 1, kind: input, shape index: {}]
  %s2 = inlined_call_operand.vmem [shape: f32[2], index: 2, kind: input, shape index: {}]
  %s3 = inlined_call_operand.vmem [shape: f32[16,128], index: 3, kind: input, shape index: {}]
  %s4 = inlined_call_operand.vmem [shape: f32[32,8], index: 4, kind: input, shape index: {}]
  %s5 = inlined_call_operand.vmem [shape: f32[2,8,128], index: 5, kind: input, shape index: {}]
  %s6 = inlined_call_operand.vmem [shape: f32[2,1,128], index: 6, kind: input, shape index: {}]
  %s7 = inlined_call_operand.hbm [shape: f32[2,128,128], index: 7, kind: input, shape index: {}]
  %s8 = inlined_call_operand.vmem [shape: f32[2,1,128], index: 8, kind: input, shape index: {}]
  %s9 = inlined_call_operand.hbm [shape: f32[2,128,128], index: 9, kind: input, shape index: {}]
  %s10 = inlined_call_operand.vmem [shape: f32[2,1,128], index: 10, kind: input, shape index: {}]
  %s11 = inlined_call_operand.hbm [shape: f32[16,128], index: 11, kind: output, shape index: {}]
  %s12 = sld [smem:[#allocation0]]
  $region74: #{tpu_custom_call.1} parent=0
    _
  %s14 = ssub.s32 1, %s12
  %s15 = scalar_select 0, %s14, %s12
  $region1: #{tpu_custom_call.1} parent=0
    #allocation5 [shape = 'u8[512]{0}', space=smem, size = 0x200, scoped, tag = 'input window, operand 0, single buffered']
    #allocation6 [shape = 's32[1]{0}', space=sflag, size = 0x4, scoped, tag = 'scoped memory for tpu_custom_call.1']
    #allocation7 [shape = 's32[1]{0}', space=sflag, size = 0x4, scoped, tag = 'scoped memory for tpu_custom_call.1']
    #allocation8 [shape = 's32[1]{0}', space=sflag, size = 0x4, scoped, tag = 'scoped memory for tpu_custom_call.1']
    #allocation9 [shape = 'u8[512]{0}', space=smem, size = 0x200, scoped, tag = 'input window, operand 1, single buffered']
    #allocation10 [shape = 's32[1]{0}', space=sflag, size = 0x4, scoped, tag = 'scoped memory for tpu_custom_call.1']
    #allocation11 [shape = 'u8[512]{0}', space=smem, size = 0x200, scoped, tag = 'input window, operand 2, single buffered']
    #allocation12 [shape = 'u8[131072]{0}', space=vmem, size = 0x20000, scoped, tag = 'input window, operand 7, single buffered']
    #allocation13 [shape = 'u8[131072]{0}', space=vmem, size = 0x20000, scoped, tag = 'input window, operand 9, single buffered']
    #allocation14 [shape = 's32[1]{0}', space=sflag, size = 0x4, scoped, tag = 'scoped memory for tpu_custom_call.1']
    #allocation15 [shape = 'u8[8192]{0}', space=vmem, size = 0x2000, scoped, tag = 'output window, operand 0, single buffered']
    %16 = vsyncpa [#allocation8], 0
    %17 = vsyncpa [#allocation10], 0
    %18 = vsyncpa [#allocation6], 0
    %19 = vsyncpa [#allocation14], 0
    %20 = vsyncpa [#allocation7], 0
    // Predicated region
    $region2: #{tpu_custom_call.1} parent=1 // pred_check
      _
    $region3: #{tpu_custom_call.1} parent=1 // pred_check_branch
      %22 = sbr.rel (0) target = $region5
    $region4: #{tpu_custom_call.1} parent=1 // pred_region
      %s24 = ssub.s32 16, 16
      %25 = vsyncadd [#allocation8], %s24
      %s27 = sshll.u32 %s0, 4
      %s28 = int_to_ptr.vmem [resolvable:$true] %s27
      %30 = dma.vmem_to_smem %s28, 16, [#allocation5], [#allocation8]
    $region5: #{tpu_custom_call.1} parent=1 // pred_fallthru
      _
    // Predicated region
    $region6: #{tpu_custom_call.1} parent=1 // pred_check
      _
    $region7: #{tpu_custom_call.1} parent=1 // pred_check_branch
      %32 = sbr.rel (0) target = $region9
    $region8: #{tpu_custom_call.1} parent=1 // pred_region
      %s34 = ssub.s32 16, 16
      %35 = vsyncadd [#allocation10], %s34
      %s37 = sshll.u32 %s1, 4
      %s38 = int_to_ptr.vmem [resolvable:$true] %s37
      %40 = dma.vmem_to_smem %s38, 16, [#allocation9], [#allocation10]
    $region9: #{tpu_custom_call.1} parent=1 // pred_fallthru
      _
    // Predicated region
    $region10: #{tpu_custom_call.1} parent=1 // pred_check
      _
    $region11: #{tpu_custom_call.1} parent=1 // pred_check_branch
      %42 = sbr.rel (0) target = $region13
    $region12: #{tpu_custom_call.1} parent=1 // pred_region
      %s44 = ssub.s32 16, 16
      %45 = vsyncadd [#allocation10], %s44
      %s47 = sshll.u32 %s2, 4
      %s48 = int_to_ptr.vmem [resolvable:$true] %s47
      %50 = dma.vmem_to_smem %s48, 16, [#allocation11], [#allocation10]
    $region13: #{tpu_custom_call.1} parent=1 // pred_fallthru
      _
    // Predicated region
    $region14: #{tpu_custom_call.1} parent=1 // pred_check
      _
    $region15: #{tpu_custom_call.1} parent=1 // pred_check_branch
      %52 = sbr.rel (0) target = $region17
    $region16: #{tpu_custom_call.1} parent=1 // pred_region
      _
    $region17: #{tpu_custom_call.1} parent=1 // pred_fallthru
      _
    // Predicated region
    $region18: #{tpu_custom_call.1} parent=1 // pred_check
      _
    $region19: #{tpu_custom_call.1} parent=1 // pred_check_branch
      %54 = sbr.rel (0) target = $region21
    $region20: #{tpu_custom_call.1} parent=1 // pred_region
      _
    $region21: #{tpu_custom_call.1} parent=1 // pred_fallthru
      _
    // Predicated region
    $region22: #{tpu_custom_call.1} parent=1 // pred_check
      _
    $region23: #{tpu_custom_call.1} parent=1 // pred_check_branch
      %56 = sbr.rel (0) target = $region25
    $region24: #{tpu_custom_call.1} parent=1 // pred_region
      _
    $region25: #{tpu_custom_call.1} parent=1 // pred_fallthru
      _
    // Predicated region
    $region26: #{tpu_custom_call.1} parent=1 // pred_check
      _
    $region27: #{tpu_custom_call.1} parent=1 // pred_check_branch
      %58 = sbr.rel (0) target = $region29
    $region28: #{tpu_custom_call.1} parent=1 // pred_region
      _
    $region29: #{tpu_custom_call.1} parent=1 // pred_fallthru
      _
    // Predicated region
    $region30: #{tpu_custom_call.1} parent=1 // pred_check
      _
    $region31: #{tpu_custom_call.1} parent=1 // pred_check_branch
      %60 = sbr.rel (0) target = $region33
    $region32: #{tpu_custom_call.1} parent=1 // pred_region
      %s62 = ssub.s32 4096, 4096
      %63 = vsyncadd [#allocation6], %s62
      %s64 = sshll.u32 [#allocation12], 4
      %s65 = int_to_ptr.vmem [resolvable:$true] %s64
      %70 = dma.hbm_to_vmem [thread:$0]  %s7, 4096, %s65, [#allocation6], 128, 128, 8
    $region33: #{tpu_custom_call.1} parent=1 // pred_fallthru
      _
    // Predicated region
    $region34: #{tpu_custom_call.1} parent=1 // pred_check
      _
    $region35: #{tpu_custom_call.1} parent=1 // pred_check_branch
      %72 = sbr.rel (0) target = $region37
    $region36: #{tpu_custom_call.1} parent=1 // pred_region
      _
    $region37: #{tpu_custom_call.1} parent=1 // pred_fallthru
      _
    // Predicated region
    $region38: #{tpu_custom_call.1} parent=1 // pred_check
      _
    $region39: #{tpu_custom_call.1} parent=1 // pred_check_branch
      %74 = sbr.rel (0) target = $region41
    $region40: #{tpu_custom_call.1} parent=1 // pred_region
      %s76 = ssub.s32 4096, 4096
      %77 = vsyncadd [#allocation14], %s76
      %s78 = sshll.u32 [#allocation13], 4
      %s79 = int_to_ptr.vmem [resolvable:$true] %s78
      %84 = dma.hbm_to_vmem [thread:$0]  %s9, 4096, %s79, [#allocation14], 128, 128, 8
    $region41: #{tpu_custom_call.1} parent=1 // pred_fallthru
      _
    // Predicated region
    $region42: #{tpu_custom_call.1} parent=1 // pred_check
      _
    $region43: #{tpu_custom_call.1} parent=1 // pred_check_branch
      %86 = sbr.rel (0) target = $region45
    $region44: #{tpu_custom_call.1} parent=1 // pred_region
      _
    $region45: #{tpu_custom_call.1} parent=1 // pred_fallthru
      _
    // Predicated region
    $region46: #{tpu_custom_call.1} parent=1 // pred_check
      _
    $region47: #{tpu_custom_call.1} parent=1 // pred_check_branch
      %88 = sbr.rel (0) target = $region49
    $region48: #{tpu_custom_call.1} parent=1 // pred_region
      %89 = dma.done [#allocation8], 16
    $region49: #{tpu_custom_call.1} parent=1 // pred_fallthru
      _
    // Predicated region
    $region50: #{tpu_custom_call.1} parent=1 // pred_check
      _
    $region51: #{tpu_custom_call.1} parent=1 // pred_check_branch
      %91 = sbr.rel (0) target = $region53
    $region52: #{tpu_custom_call.1} parent=1 // pred_region
      %92 = dma.done [#allocation10], 16
    $region53: #{tpu_custom_call.1} parent=1 // pred_fallthru
      _
    // Predicated region
    $region54: #{tpu_custom_call.1} parent=1 // pred_check
      _
    $region55: #{tpu_custom_call.1} parent=1 // pred_check_branch
      %94 = sbr.rel (0) target = $region57
    $region56: #{tpu_custom_call.1} parent=1 // pred_region
      %95 = dma.done [#allocation10], 16
    $region57: #{tpu_custom_call.1} parent=1 // pred_fallthru
      _
    // Predicated region
    $region58: #{tpu_custom_call.1} parent=1 // pred_check
      _
    $region59: #{tpu_custom_call.1} parent=1 // pred_check_branch
      %97 = sbr.rel (0) target = $region61
    $region60: #{tpu_custom_call.1} parent=1 // pred_region
      %98 = dma.done [#allocation6], 4096
    $region61: #{tpu_custom_call.1} parent=1 // pred_fallthru
      _
    // Predicated region
    $region62: #{tpu_custom_call.1} parent=1 // pred_check
      _
    $region63: #{tpu_custom_call.1} parent=1 // pred_check_branch
      %100 = sbr.rel (0) target = $region65
    $region64: #{tpu_custom_call.1} parent=1 // pred_region
      %101 = dma.done [#allocation14], 4096
    $region65: #{tpu_custom_call.1} parent=1 // pred_fallthru
      _
    %102 = sfence
    %v103 = vld [vmem:[%s3] sm:$0xff]
    %v104 = vld [vmem:[%s3 + $0x8] sm:$0xff]
    %105 = vst [vmem:[#allocation2] sm:$0xff] %v103
    %106 = vst [vmem:[#allocation2 + $0x8] sm:$0xff] %v104
    %v107 = vld [vmem:[%s4] sm:$0xff]
    %v108 = vld [vmem:[%s4 + $0x8] sm:$0xff]
    %v109 = vld [vmem:[%s4 + $0x10] sm:$0xff]
    %v110 = vld [vmem:[%s4 + $0x18] sm:$0xff]
    %v111 = vld [vmem:[%s5] sm:$0xff]
    %v112 = vld [vmem:[%s6] sm:$0x1]
    %v114 = vlaneseq
    %v115 = vshrl.u32 %v114, 7
    %v116 = vsub.s32 0, %v115
    %v117 = vrot.slane %v112, %v116
    %vm119 = vcmask 64512
    %v121 = vsel %vm119, %v107, 0
    %v124 = vsel %vm119, %v108, 0
    %v127 = vsel %vm119, %v109, 0
    %v130 = vsel %vm119, %v110, 0
    %132 = vmatprep.subr.mxu0 0.0
    %133 = vmatpush1.msra.mxu0 %v111
    %134 = vmatprep.subr.mxu0 0.0
    %135 = vmatpush1.msra.mxu0 0.0
    %136 = vmatprep.subr.mxu0 0.0
    %137 = vmatpush1.msra.mxu0 0.0
    %138 = vmatprep.subr.mxu0 0.0
    %139 = vmatpush1.msra.mxu0 0.0
    %140 = vmatprep.subr.mxu0 0.0
    %141 = vmatpush1.msra.mxu0 0.0
    %142 = vmatprep.subr.mxu0 0.0
    %143 = vmatpush1.msra.mxu0 0.0
    %144 = vmatprep.subr.mxu0 0.0
    %145 = vmatpush1.msra.mxu0 0.0
    %146 = vmatprep.subr.mxu0 0.0
    %147 = vmatpush1.msra.mxu0 0.0
    %148 = vmatprep.subr.mxu0 0.0
    %149 = vmatpush1.msra.mxu0 0.0
    %150 = vmatprep.subr.mxu0 0.0
    %151 = vmatpush1.msra.mxu0 0.0
    %152 = vmatprep.subr.mxu0 0.0
    %153 = vmatpush1.msra.mxu0 0.0
    %154 = vmatprep.subr.mxu0 0.0
    %155 = vmatpush1.msra.mxu0 0.0
    %156 = vmatprep.subr.mxu0 0.0
    %157 = vmatpush1.msra.mxu0 0.0
    %158 = vmatprep.subr.mxu0 0.0
    %159 = vmatpush1.msra.mxu0 0.0
    %160 = vmatprep.subr.mxu0 0.0
    %161 = vmatpush1.msra.mxu0 0.0
    %162 = vmatprep.subr.mxu0 0.0
    %163 = vmatpush1.msra.mxu0 0.0
    %164 = vmatprep.subr.mxu0 0.0
    %165 = vmatpush1.msra.mxu0 0.0
    %166 = vmatprep.subr.mxu0 0.0
    %167 = vmatpush1.msra.mxu0 0.0
    %168 = vmatprep.subr.mxu0 0.0
    %169 = vmatpush1.msra.mxu0 0.0
    %170 = vmatprep.subr.mxu0 0.0
    %171 = vmatpush1.msra.mxu0 0.0
    %172 = vmatprep.subr.mxu0 0.0
    %173 = vmatpush1.msra.mxu0 0.0
    %174 = vmatprep.subr.mxu0 0.0
    %175 = vmatpush1.msra.mxu0 0.0
    %176 = vmatprep.subr.mxu0 0.0
    %177 = vmatpush1.msra.mxu0 0.0
    %178 = vmatprep.subr.mxu0 0.0
    %179 = vmatpush1.msra.mxu0 0.0
    %180 = vmatprep.subr.mxu0 0.0
    %181 = vmatpush1.msra.mxu0 0.0
    %182 = vmatprep.subr.mxu0 0.0
    %183 = vmatpush1.msra.mxu0 0.0
    %184 = vmatprep.subr.mxu0 0.0
    %185 = vmatpush1.msra.mxu0 0.0
    %186 = vmatprep.subr.mxu0 0.0
    %187 = vmatpush1.msra.mxu0 0.0
    %188 = vmatprep.subr.mxu0 0.0
    %189 = vmatpush1.msra.mxu0 0.0
    %190 = vmatprep.subr.mxu0 0.0
    %191 = vmatpush1.msra.mxu0 0.0
    %192 = vmatprep.subr.mxu0 0.0
    %193 = vmatpush1.msra.mxu0 0.0
    %194 = vmatprep.subr.mxu0 0.0
    %195 = vmatpush1.msra.mxu0 0.0
    %196 = vmatprep.mubr.f32.mxu0 0.0
    %197 = vmatmul.mubr.f32.gmra.mrb[0].mxu0 %v121
    %v198 = vpop.f32.mrb[0].mxu0
    %v199 = vadd.f32 %v117, %v198
    %v200 = vpop.f32.mrb[0].mxu0
    %201 = vmatprep.mubr.f32.mxu0 0.0
    %202 = vmatmul.mubr.f32.gmra.mrb[0].mxu0 %v124
    %v203 = vpop.f32.mrb[0].mxu0
    %v204 = vadd.f32 %v117, %v203
    %v205 = vpop.f32.mrb[0].mxu0
    %206 = vmatprep.mubr.f32.mxu0 0.0
    %207 = vmatmul.mubr.f32.gmra.mrb[0].mxu0 %v127
    %v208 = vpop.f32.mrb[0].mxu0
    %v209 = vadd.f32 %v117, %v208
    %v210 = vpop.f32.mrb[0].mxu0
    %211 = vmatprep.mubr.f32.mxu0 0.0
    %212 = vmatmul.mubr.f32.gmra.mrb[0].mxu0 %v130
    %v213 = vpop.f32.mrb[0].mxu0
    %v214 = vadd.f32 %v117, %v213
    %v215 = vpop.f32.mrb[0].mxu0
    %216 = vdwg.mxu0
    %217 = vst [vmem:[#allocation3] sm:$0xff] %v199
    %218 = vst [vmem:[#allocation3 + $0x8] sm:$0xff] %v204
    %219 = vst [vmem:[#allocation3 + $0x10] sm:$0xff] %v209
    %220 = vst [vmem:[#allocation3 + $0x18] sm:$0xff] %v214
    %221 = vst [vmem:[#allocation4] sm:$0xff] 0.0
    %222 = vst [vmem:[#allocation4 + $0x8] sm:$0xff] 0.0
    %s223 = sld [smem:[#allocation5]]
    %s224 = sld [smem:[#allocation9]]
    %s225 = scalar_lea.vmem [#allocation2], %s223
    %v226 = vld [vmem:[%s225] sm:$0x1]
    %v227 = vld [vmem:[#allocation3] sm:$0x1]
    %v228 = vadd.f32 %v226, %v227
    %v229 = vmax.f32 %v228, 0.0
    %s230 = scalar_lea.vmem [#allocation4], %s224
    %v231 = vld [vmem:[%s230] sm:$0x1]
    %v232 = vadd.f32 %v231, %v229
    %233 = vst [vmem:[%s230] sm:$0x1] %v232
    %s234 = sld [smem:[#allocation5 + $0x1]]
    %s235 = sld [smem:[#allocation9 + $0x1]]
    %s236 = scalar_lea.vmem [#allocation2], %s234
    %v237 = vld [vmem:[%s236] sm:$0x1]
    %v238 = vld [vmem:[#allocation3 + $0x1] sm:$0x1]
    %v239 = vadd.f32 %v237, %v238
    %v240 = vmax.f32 %v239, 0.0
    %s241 = scalar_lea.vmem [#allocation4], %s235
    %v242 = vld [vmem:[%s241] sm:$0x1]
    %v243 = vadd.f32 %v242, %v240
    %244 = vst [vmem:[%s241] sm:$0x1] %v243
    %s245 = sld [smem:[#allocation5 + $0x2]]
    %s246 = sld [smem:[#allocation9 + $0x2]]
    %s247 = scalar_lea.vmem [#allocation2], %s245
    %v248 = vld [vmem:[%s247] sm:$0x1]
    %v249 = vld [vmem:[#allocation3 + $0x2] sm:$0x1]
    %v250 = vadd.f32 %v248, %v249
    %v251 = vmax.f32 %v250, 0.0
    %s252 = scalar_lea.vmem [#allocation4], %s246
    %v253 = vld [vmem:[%s252] sm:$0x1]
    %v254 = vadd.f32 %v253, %v251
    %255 = vst [vmem:[%s252] sm:$0x1] %v254
    %s256 = sld [smem:[#allocation5 + $0x3]]
    %s257 = sld [smem:[#allocation9 + $0x3]]
    %s258 = scalar_lea.vmem [#allocation2], %s256
    %v259 = vld [vmem:[%s258] sm:$0x1]
    %v260 = vld [vmem:[#allocation3 + $0x3] sm:$0x1]
    %v261 = vadd.f32 %v259, %v260
    %v262 = vmax.f32 %v261, 0.0
    %s263 = scalar_lea.vmem [#allocation4], %s257
    %v264 = vld [vmem:[%s263] sm:$0x1]
    %v265 = vadd.f32 %v264, %v262
    %266 = vst [vmem:[%s263] sm:$0x1] %v265
    %s267 = sld [smem:[#allocation5 + $0x4]]
    %s268 = sld [smem:[#allocation9 + $0x4]]
    %s269 = scalar_lea.vmem [#allocation2], %s267
    %v270 = vld [vmem:[%s269] sm:$0x1]
    %v271 = vld [vmem:[#allocation3 + $0x4] sm:$0x1]
    %v272 = vadd.f32 %v270, %v271
    %v273 = vmax.f32 %v272, 0.0
    %s274 = scalar_lea.vmem [#allocation4], %s268
    %v275 = vld [vmem:[%s274] sm:$0x1]
    %v276 = vadd.f32 %v275, %v273
    %277 = vst [vmem:[%s274] sm:$0x1] %v276
    %s278 = sld [smem:[#allocation5 + $0x5]]
    %s279 = sld [smem:[#allocation9 + $0x5]]
    %s280 = scalar_lea.vmem [#allocation2], %s278
    %v281 = vld [vmem:[%s280] sm:$0x1]
    %v282 = vld [vmem:[#allocation3 + $0x5] sm:$0x1]
    %v283 = vadd.f32 %v281, %v282
    %v284 = vmax.f32 %v283, 0.0
    %s285 = scalar_lea.vmem [#allocation4], %s279
    %v286 = vld [vmem:[%s285] sm:$0x1]
    %v287 = vadd.f32 %v286, %v284
    %288 = vst [vmem:[%s285] sm:$0x1] %v287
    %s289 = sld [smem:[#allocation5 + $0x6]]
    %s290 = sld [smem:[#allocation9 + $0x6]]
    %s291 = scalar_lea.vmem [#allocation2], %s289
    %v292 = vld [vmem:[%s291] sm:$0x1]
    %v293 = vld [vmem:[#allocation3 + $0x6] sm:$0x1]
    %v294 = vadd.f32 %v292, %v293
    %v295 = vmax.f32 %v294, 0.0
    %s296 = scalar_lea.vmem [#allocation4], %s290
    %v297 = vld [vmem:[%s296] sm:$0x1]
    %v298 = vadd.f32 %v297, %v295
    %299 = vst [vmem:[%s296] sm:$0x1] %v298
    %s300 = sld [smem:[#allocation5 + $0x7]]
    %s301 = sld [smem:[#allocation9 + $0x7]]
    %s302 = scalar_lea.vmem [#allocation2], %s300
    %v303 = vld [vmem:[%s302] sm:$0x1]
    %v304 = vld [vmem:[#allocation3 + $0x7] sm:$0x1]
    %v305 = vadd.f32 %v303, %v304
    %v306 = vmax.f32 %v305, 0.0
    %s307 = scalar_lea.vmem [#allocation4], %s301
    %v308 = vld [vmem:[%s307] sm:$0x1]
    %v309 = vadd.f32 %v308, %v306
    %310 = vst [vmem:[%s307] sm:$0x1] %v309
    %s311 = sld [smem:[#allocation5 + $0x8]]
    %s312 = sld [smem:[#allocation9 + $0x8]]
    %s313 = scalar_lea.vmem [#allocation2], %s311
    %v314 = vld [vmem:[%s313] sm:$0x1]
    %v315 = vld [vmem:[#allocation3 + $0x8] sm:$0x1]
    %v316 = vadd.f32 %v314, %v315
    %v317 = vmax.f32 %v316, 0.0
    %s318 = scalar_lea.vmem [#allocation4], %s312
    %v319 = vld [vmem:[%s318] sm:$0x1]
    %v320 = vadd.f32 %v319, %v317
    %321 = vst [vmem:[%s318] sm:$0x1] %v320
    %s322 = sld [smem:[#allocation5 + $0x9]]
    %s323 = sld [smem:[#allocation9 + $0x9]]
    %s324 = scalar_lea.vmem [#allocation2], %s322
    %v325 = vld [vmem:[%s324] sm:$0x1]
    %v326 = vld [vmem:[#allocation3 + $0x9] sm:$0x1]
    %v327 = vadd.f32 %v325, %v326
    %v328 = vmax.f32 %v327, 0.0
    %s329 = scalar_lea.vmem [#allocation4], %s323
    %v330 = vld [vmem:[%s329] sm:$0x1]
    %v331 = vadd.f32 %v330, %v328
    %332 = vst [vmem:[%s329] sm:$0x1] %v331
    %s333 = sld [smem:[#allocation5 + $0xa]]
    %s334 = sld [smem:[#allocation9 + $0xa]]
    %s335 = scalar_lea.vmem [#allocation2], %s333
    %v336 = vld [vmem:[%s335] sm:$0x1]
    %v337 = vld [vmem:[#allocation3 + $0xa] sm:$0x1]
    %v338 = vadd.f32 %v336, %v337
    %v339 = vmax.f32 %v338, 0.0
    %s340 = scalar_lea.vmem [#allocation4], %s334
    %v341 = vld [vmem:[%s340] sm:$0x1]
    %v342 = vadd.f32 %v341, %v339
    %343 = vst [vmem:[%s340] sm:$0x1] %v342
    %s344 = sld [smem:[#allocation5 + $0xb]]
    %s345 = sld [smem:[#allocation9 + $0xb]]
    %s346 = scalar_lea.vmem [#allocation2], %s344
    %v347 = vld [vmem:[%s346] sm:$0x1]
    %v348 = vld [vmem:[#allocation3 + $0xb] sm:$0x1]
    %v349 = vadd.f32 %v347, %v348
    %v350 = vmax.f32 %v349, 0.0
    %s351 = scalar_lea.vmem [#allocation4], %s345
    %v352 = vld [vmem:[%s351] sm:$0x1]
    %v353 = vadd.f32 %v352, %v350
    %354 = vst [vmem:[%s351] sm:$0x1] %v353
    %s355 = sld [smem:[#allocation5 + $0xc]]
    %s356 = sld [smem:[#allocation9 + $0xc]]
    %s357 = scalar_lea.vmem [#allocation2], %s355
    %v358 = vld [vmem:[%s357] sm:$0x1]
    %v359 = vld [vmem:[#allocation3 + $0xc] sm:$0x1]
    %v360 = vadd.f32 %v358, %v359
    %v361 = vmax.f32 %v360, 0.0
    %s362 = scalar_lea.vmem [#allocation4], %s356
    %v363 = vld [vmem:[%s362] sm:$0x1]
    %v364 = vadd.f32 %v363, %v361
    %365 = vst [vmem:[%s362] sm:$0x1] %v364
    %s366 = sld [smem:[#allocation5 + $0xd]]
    %s367 = sld [smem:[#allocation9 + $0xd]]
    %s368 = scalar_lea.vmem [#allocation2], %s366
    %v369 = vld [vmem:[%s368] sm:$0x1]
    %v370 = vld [vmem:[#allocation3 + $0xd] sm:$0x1]
    %v371 = vadd.f32 %v369, %v370
    %v372 = vmax.f32 %v371, 0.0
    %s373 = scalar_lea.vmem [#allocation4], %s367
    %v374 = vld [vmem:[%s373] sm:$0x1]
    %v375 = vadd.f32 %v374, %v372
    %376 = vst [vmem:[%s373] sm:$0x1] %v375
    %s377 = sld [smem:[#allocation5 + $0xe]]
    %s378 = sld [smem:[#allocation9 + $0xe]]
    %s379 = scalar_lea.vmem [#allocation2], %s377
    %v380 = vld [vmem:[%s379] sm:$0x1]
    %v381 = vld [vmem:[#allocation3 + $0xe] sm:$0x1]
    %v382 = vadd.f32 %v380, %v381
    %v383 = vmax.f32 %v382, 0.0
    %s384 = scalar_lea.vmem [#allocation4], %s378
    %v385 = vld [vmem:[%s384] sm:$0x1]
    %v386 = vadd.f32 %v385, %v383
    %387 = vst [vmem:[%s384] sm:$0x1] %v386
    %s388 = sld [smem:[#allocation5 + $0xf]]
    %s389 = sld [smem:[#allocation9 + $0xf]]
    %s390 = scalar_lea.vmem [#allocation2], %s388
    %v391 = vld [vmem:[%s390] sm:$0x1]
    %v392 = vld [vmem:[#allocation3 + $0xf] sm:$0x1]
    %v393 = vadd.f32 %v391, %v392
    %v394 = vmax.f32 %v393, 0.0
    %s395 = scalar_lea.vmem [#allocation4], %s389
    %v396 = vld [vmem:[%s395] sm:$0x1]
    %v397 = vadd.f32 %v396, %v394
    %398 = vst [vmem:[%s395] sm:$0x1] %v397
    %s399 = sld [smem:[#allocation5 + $0x10]]
    %s400 = sld [smem:[#allocation9 + $0x10]]
    %s401 = scalar_lea.vmem [#allocation2], %s399
    %v402 = vld [vmem:[%s401] sm:$0x1]
    %v403 = vld [vmem:[#allocation3 + $0x10] sm:$0x1]
    %v404 = vadd.f32 %v402, %v403
    %v405 = vmax.f32 %v404, 0.0
    %s406 = scalar_lea.vmem [#allocation4], %s400
    %v407 = vld [vmem:[%s406] sm:$0x1]
    %v408 = vadd.f32 %v407, %v405
    %409 = vst [vmem:[%s406] sm:$0x1] %v408
    %s410 = sld [smem:[#allocation5 + $0x11]]
    %s411 = sld [smem:[#allocation9 + $0x11]]
    %s412 = scalar_lea.vmem [#allocation2], %s410
    %v413 = vld [vmem:[%s412] sm:$0x1]
    %v414 = vld [vmem:[#allocation3 + $0x11] sm:$0x1]
    %v415 = vadd.f32 %v413, %v414
    %v416 = vmax.f32 %v415, 0.0
    %s417 = scalar_lea.vmem [#allocation4], %s411
    %v418 = vld [vmem:[%s417] sm:$0x1]
    %v419 = vadd.f32 %v418, %v416
    %420 = vst [vmem:[%s417] sm:$0x1] %v419
    %s421 = sld [smem:[#allocation5 + $0x12]]
    %s422 = sld [smem:[#allocation9 + $0x12]]
    %s423 = scalar_lea.vmem [#allocation2], %s421
    %v424 = vld [vmem:[%s423] sm:$0x1]
    %v425 = vld [vmem:[#allocation3 + $0x12] sm:$0x1]
    %v426 = vadd.f32 %v424, %v425
    %v427 = vmax.f32 %v426, 0.0
    %s428 = scalar_lea.vmem [#allocation4], %s422
    %v429 = vld [vmem:[%s428] sm:$0x1]
    %v430 = vadd.f32 %v429, %v427
    %431 = vst [vmem:[%s428] sm:$0x1] %v430
    %s432 = sld [smem:[#allocation5 + $0x13]]
    %s433 = sld [smem:[#allocation9 + $0x13]]
    %s434 = scalar_lea.vmem [#allocation2], %s432
    %v435 = vld [vmem:[%s434] sm:$0x1]
    %v436 = vld [vmem:[#allocation3 + $0x13] sm:$0x1]
    %v437 = vadd.f32 %v435, %v436
    %v438 = vmax.f32 %v437, 0.0
    %s439 = scalar_lea.vmem [#allocation4], %s433
    %v440 = vld [vmem:[%s439] sm:$0x1]
    %v441 = vadd.f32 %v440, %v438
    %442 = vst [vmem:[%s439] sm:$0x1] %v441
    %s443 = sld [smem:[#allocation5 + $0x14]]
    %s444 = sld [smem:[#allocation9 + $0x14]]
    %s445 = scalar_lea.vmem [#allocation2], %s443
    %v446 = vld [vmem:[%s445] sm:$0x1]
    %v447 = vld [vmem:[#allocation3 + $0x14] sm:$0x1]
    %v448 = vadd.f32 %v446, %v447
    %v449 = vmax.f32 %v448, 0.0
    %s450 = scalar_lea.vmem [#allocation4], %s444
    %v451 = vld [vmem:[%s450] sm:$0x1]
    %v452 = vadd.f32 %v451, %v449
    %453 = vst [vmem:[%s450] sm:$0x1] %v452
    %s454 = sld [smem:[#allocation5 + $0x15]]
    %s455 = sld [smem:[#allocation9 + $0x15]]
    %s456 = scalar_lea.vmem [#allocation2], %s454
    %v457 = vld [vmem:[%s456] sm:$0x1]
    %v458 = vld [vmem:[#allocation3 + $0x15] sm:$0x1]
    %v459 = vadd.f32 %v457, %v458
    %v460 = vmax.f32 %v459, 0.0
    %s461 = scalar_lea.vmem [#allocation4], %s455
    %v462 = vld [vmem:[%s461] sm:$0x1]
    %v463 = vadd.f32 %v462, %v460
    %464 = vst [vmem:[%s461] sm:$0x1] %v463
    %s465 = sld [smem:[#allocation5 + $0x16]]
    %s466 = sld [smem:[#allocation9 + $0x16]]
    %s467 = scalar_lea.vmem [#allocation2], %s465
    %v468 = vld [vmem:[%s467] sm:$0x1]
    %v469 = vld [vmem:[#allocation3 + $0x16] sm:$0x1]
    %v470 = vadd.f32 %v468, %v469
    %v471 = vmax.f32 %v470, 0.0
    %s472 = scalar_lea.vmem [#allocation4], %s466
    %v473 = vld [vmem:[%s472] sm:$0x1]
    %v474 = vadd.f32 %v473, %v471
    %475 = vst [vmem:[%s472] sm:$0x1] %v474
    %s476 = sld [smem:[#allocation5 + $0x17]]
    %s477 = sld [smem:[#allocation9 + $0x17]]
    %s478 = scalar_lea.vmem [#allocation2], %s476
    %v479 = vld [vmem:[%s478] sm:$0x1]
    %v480 = vld [vmem:[#allocation3 + $0x17] sm:$0x1]
    %v481 = vadd.f32 %v479, %v480
    %v482 = vmax.f32 %v481, 0.0
    %s483 = scalar_lea.vmem [#allocation4], %s477
    %v484 = vld [vmem:[%s483] sm:$0x1]
    %v485 = vadd.f32 %v484, %v482
    %486 = vst [vmem:[%s483] sm:$0x1] %v485
    %s487 = sld [smem:[#allocation5 + $0x18]]
    %s488 = sld [smem:[#allocation9 + $0x18]]
    %s489 = scalar_lea.vmem [#allocation2], %s487
    %v490 = vld [vmem:[%s489] sm:$0x1]
    %v491 = vld [vmem:[#allocation3 + $0x18] sm:$0x1]
    %v492 = vadd.f32 %v490, %v491
    %v493 = vmax.f32 %v492, 0.0
    %s494 = scalar_lea.vmem [#allocation4], %s488
    %v495 = vld [vmem:[%s494] sm:$0x1]
    %v496 = vadd.f32 %v495, %v493
    %497 = vst [vmem:[%s494] sm:$0x1] %v496
    %s498 = sld [smem:[#allocation5 + $0x19]]
    %s499 = sld [smem:[#allocation9 + $0x19]]
    %s500 = scalar_lea.vmem [#allocation2], %s498
    %v501 = vld [vmem:[%s500] sm:$0x1]
    %v502 = vld [vmem:[#allocation3 + $0x19] sm:$0x1]
    %v503 = vadd.f32 %v501, %v502
    %v504 = vmax.f32 %v503, 0.0
    %s505 = scalar_lea.vmem [#allocation4], %s499
    %v506 = vld [vmem:[%s505] sm:$0x1]
    %v507 = vadd.f32 %v506, %v504
    %508 = vst [vmem:[%s505] sm:$0x1] %v507
    %s509 = sld [smem:[#allocation5 + $0x1a]]
    %s510 = sld [smem:[#allocation9 + $0x1a]]
    %s511 = scalar_lea.vmem [#allocation2], %s509
    %v512 = vld [vmem:[%s511] sm:$0x1]
    %v513 = vld [vmem:[#allocation3 + $0x1a] sm:$0x1]
    %v514 = vadd.f32 %v512, %v513
    %v515 = vmax.f32 %v514, 0.0
    %s516 = scalar_lea.vmem [#allocation4], %s510
    %v517 = vld [vmem:[%s516] sm:$0x1]
    %v518 = vadd.f32 %v517, %v515
    %519 = vst [vmem:[%s516] sm:$0x1] %v518
    %s520 = sld [smem:[#allocation5 + $0x1b]]
    %s521 = sld [smem:[#allocation9 + $0x1b]]
    %s522 = scalar_lea.vmem [#allocation2], %s520
    %v523 = vld [vmem:[%s522] sm:$0x1]
    %v524 = vld [vmem:[#allocation3 + $0x1b] sm:$0x1]
    %v525 = vadd.f32 %v523, %v524
    %v526 = vmax.f32 %v525, 0.0
    %s527 = scalar_lea.vmem [#allocation4], %s521
    %v528 = vld [vmem:[%s527] sm:$0x1]
    %v529 = vadd.f32 %v528, %v526
    %530 = vst [vmem:[%s527] sm:$0x1] %v529
    %s531 = sld [smem:[#allocation5 + $0x1c]]
    %s532 = sld [smem:[#allocation9 + $0x1c]]
    %s533 = scalar_lea.vmem [#allocation2], %s531
    %v534 = vld [vmem:[%s533] sm:$0x1]
    %v535 = vld [vmem:[#allocation3 + $0x1c] sm:$0x1]
    %v536 = vadd.f32 %v534, %v535
    %v537 = vmax.f32 %v536, 0.0
    %s538 = scalar_lea.vmem [#allocation4], %s532
    %v539 = vld [vmem:[%s538] sm:$0x1]
    %v540 = vadd.f32 %v539, %v537
    %541 = vst [vmem:[%s538] sm:$0x1] %v540
    %s542 = sld [smem:[#allocation5 + $0x1d]]
    %s543 = sld [smem:[#allocation9 + $0x1d]]
    %s544 = scalar_lea.vmem [#allocation2], %s542
    %v545 = vld [vmem:[%s544] sm:$0x1]
    %v546 = vld [vmem:[#allocation3 + $0x1d] sm:$0x1]
    %v547 = vadd.f32 %v545, %v546
    %v548 = vmax.f32 %v547, 0.0
    %s549 = scalar_lea.vmem [#allocation4], %s543
    %v550 = vld [vmem:[%s549] sm:$0x1]
    %v551 = vadd.f32 %v550, %v548
    %552 = vst [vmem:[%s549] sm:$0x1] %v551
    %s553 = sld [smem:[#allocation5 + $0x1e]]
    %s554 = sld [smem:[#allocation9 + $0x1e]]
    %s555 = scalar_lea.vmem [#allocation2], %s553
    %v556 = vld [vmem:[%s555] sm:$0x1]
    %v557 = vld [vmem:[#allocation3 + $0x1e] sm:$0x1]
    %v558 = vadd.f32 %v556, %v557
    %v559 = vmax.f32 %v558, 0.0
    %s560 = scalar_lea.vmem [#allocation4], %s554
    %v561 = vld [vmem:[%s560] sm:$0x1]
    %v562 = vadd.f32 %v561, %v559
    %563 = vst [vmem:[%s560] sm:$0x1] %v562
    %s564 = sld [smem:[#allocation5 + $0x1f]]
    %s565 = sld [smem:[#allocation9 + $0x1f]]
    %s566 = scalar_lea.vmem [#allocation2], %s564
    %v567 = vld [vmem:[%s566] sm:$0x1]
    %v568 = vld [vmem:[#allocation3 + $0x1f] sm:$0x1]
    %v569 = vadd.f32 %v567, %v568
    %v570 = vmax.f32 %v569, 0.0
    %s571 = scalar_lea.vmem [#allocation4], %s565
    %v572 = vld [vmem:[%s571] sm:$0x1]
    %v573 = vadd.f32 %v572, %v570
    %574 = vst [vmem:[%s571] sm:$0x1] %v573
    %s575 = sld [smem:[#allocation11]]
    %v576 = vld [vmem:[#allocation2] sm:$0xff]
    %v577 = vld [vmem:[#allocation2 + $0x8] sm:$0xff]
    %v578 = vstv %s575
    %v579 = vmul.f32 %v578, %v576
    %v580 = vmul.f32 %v578, %v577
    %v581 = vld [vmem:[#allocation4] sm:$0xff]
    %v582 = vld [vmem:[#allocation4 + $0x8] sm:$0xff]
    %v583 = vadd.f32 %v579, %v581
    %v584 = vadd.f32 %v580, %v582
    %v585 = vld [vmem:[#allocation12] sm:$0xff]
    %v586 = vld [vmem:[#allocation12 + $0x8] sm:$0xff]
    %v587 = vld [vmem:[#allocation12 + $0x10] sm:$0xff]
    %v588 = vld [vmem:[#allocation12 + $0x18] sm:$0xff]
    %v589 = vld [vmem:[#allocation12 + $0x20] sm:$0xff]
    %v590 = vld [vmem:[#allocation12 + $0x28] sm:$0xff]
    %v591 = vld [vmem:[#allocation12 + $0x30] sm:$0xff]
    %v592 = vld [vmem:[#allocation12 + $0x38] sm:$0xff]
    %v593 = vld [vmem:[#allocation12 + $0x40] sm:$0xff]
    %v594 = vld [vmem:[#allocation12 + $0x48] sm:$0xff]
    %v595 = vld [vmem:[#allocation12 + $0x50] sm:$0xff]
    %v596 = vld [vmem:[#allocation12 + $0x58] sm:$0xff]
    %v597 = vld [vmem:[#allocation12 + $0x60] sm:$0xff]
    %v598 = vld [vmem:[#allocation12 + $0x68] sm:$0xff]
    %v599 = vld [vmem:[#allocation12 + $0x70] sm:$0xff]
    %v600 = vld [vmem:[#allocation12 + $0x78] sm:$0xff]
    %v601 = vld [vmem:[%s8] sm:$0x1]
    %v603 = vlaneseq
    %v604 = vshrl.u32 %v603, 7
    %v605 = vsub.s32 0, %v604
    %v606 = vrot.slane %v601, %v605
    %608 = vmatprep.subr.mxu0 0.0
    %609 = vmatpush1.msra.mxu0 %v585
    %610 = vmatprep.subr.mxu0 0.0
    %611 = vmatpush1.msra.mxu0 %v586
    %612 = vmatprep.subr.mxu0 0.0
    %613 = vmatpush1.msra.mxu0 %v587
    %614 = vmatprep.subr.mxu0 0.0
    %615 = vmatpush1.msra.mxu0 %v588
    %616 = vmatprep.subr.mxu0 0.0
    %617 = vmatpush1.msra.mxu0 %v589
    %618 = vmatprep.subr.mxu0 0.0
    %619 = vmatpush1.msra.mxu0 %v590
    %620 = vmatprep.subr.mxu0 0.0
    %621 = vmatpush1.msra.mxu0 %v591
    %622 = vmatprep.subr.mxu0 0.0
    %623 = vmatpush1.msra.mxu0 %v592
    %624 = vmatprep.subr.mxu0 0.0
    %625 = vmatpush1.msra.mxu0 %v593
    %626 = vmatprep.subr.mxu0 0.0
    %627 = vmatpush1.msra.mxu0 %v594
    %628 = vmatprep.subr.mxu0 0.0
    %629 = vmatpush1.msra.mxu0 %v595
    %630 = vmatprep.subr.mxu0 0.0
    %631 = vmatpush1.msra.mxu0 %v596
    %632 = vmatprep.subr.mxu0 0.0
    %633 = vmatpush1.msra.mxu0 %v597
    %634 = vmatprep.subr.mxu0 0.0
    %635 = vmatpush1.msra.mxu0 %v598
    %636 = vmatprep.subr.mxu0 0.0
    %637 = vmatpush1.msra.mxu0 %v599
    %638 = vmatprep.subr.mxu0 0.0
    %639 = vmatpush1.msra.mxu0 %v600
    %640 = vmatprep.subr.mxu0 0.0
    %641 = vmatpush1.msra.mxu0 0.0
    %642 = vmatprep.subr.mxu0 0.0
    %643 = vmatpush1.msra.mxu0 0.0
    %644 = vmatprep.subr.mxu0 0.0
    %645 = vmatpush1.msra.mxu0 0.0
    %646 = vmatprep.subr.mxu0 0.0
    %647 = vmatpush1.msra.mxu0 0.0
    %648 = vmatprep.subr.mxu0 0.0
    %649 = vmatpush1.msra.mxu0 0.0
    %650 = vmatprep.subr.mxu0 0.0
    %651 = vmatpush1.msra.mxu0 0.0
    %652 = vmatprep.subr.mxu0 0.0
    %653 = vmatpush1.msra.mxu0 0.0
    %654 = vmatprep.subr.mxu0 0.0
    %655 = vmatpush1.msra.mxu0 0.0
    %656 = vmatprep.subr.mxu0 0.0
    %657 = vmatpush1.msra.mxu0 0.0
    %658 = vmatprep.subr.mxu0 0.0
    %659 = vmatpush1.msra.mxu0 0.0
    %660 = vmatprep.subr.mxu0 0.0
    %661 = vmatpush1.msra.mxu0 0.0
    %662 = vmatprep.subr.mxu0 0.0
    %663 = vmatpush1.msra.mxu0 0.0
    %664 = vmatprep.subr.mxu0 0.0
    %665 = vmatpush1.msra.mxu0 0.0
    %666 = vmatprep.subr.mxu0 0.0
    %667 = vmatpush1.msra.mxu0 0.0
    %668 = vmatprep.subr.mxu0 0.0
    %669 = vmatpush1.msra.mxu0 0.0
    %670 = vmatprep.subr.mxu0 0.0
    %671 = vmatpush1.msra.mxu0 0.0
    %672 = vmatprep.mubr.f32.mxu0 0.0
    %673 = vmatmul.mubr.f32.gmra.mrb[0].mxu0 %v583
    %v674 = vpop.f32.mrb[0].mxu0
    %v675 = vadd.f32 %v606, %v674
    %v676 = vpop.f32.mrb[0].mxu0
    %677 = vmatprep.mubr.f32.mxu0 0.0
    %678 = vmatmul.mubr.f32.gmra.mrb[0].mxu0 %v584
    %v679 = vpop.f32.mrb[0].mxu0
    %v680 = vadd.f32 %v606, %v679
    %v681 = vpop.f32.mrb[0].mxu0
    %682 = vdwg.mxu0
    %v683 = vmax.f32 %v675, 0.0
    %v684 = vmax.f32 %v680, 0.0
    %v685 = vld [vmem:[#allocation13] sm:$0xff]
    %v686 = vld [vmem:[#allocation13 + $0x8] sm:$0xff]
    %v687 = vld [vmem:[#allocation13 + $0x10] sm:$0xff]
    %v688 = vld [vmem:[#allocation13 + $0x18] sm:$0xff]
    %v689 = vld [vmem:[#allocation13 + $0x20] sm:$0xff]
    %v690 = vld [vmem:[#allocation13 + $0x28] sm:$0xff]
    %v691 = vld [vmem:[#allocation13 + $0x30] sm:$0xff]
    %v692 = vld [vmem:[#allocation13 + $0x38] sm:$0xff]
    %v693 = vld [vmem:[#allocation13 + $0x40] sm:$0xff]
    %v694 = vld [vmem:[#allocation13 + $0x48] sm:$0xff]
    %v695 = vld [vmem:[#allocation13 + $0x50] sm:$0xff]
    %v696 = vld [vmem:[#allocation13 + $0x58] sm:$0xff]
    %v697 = vld [vmem:[#allocation13 + $0x60] sm:$0xff]
    %v698 = vld [vmem:[#allocation13 + $0x68] sm:$0xff]
    %v699 = vld [vmem:[#allocation13 + $0x70] sm:$0xff]
    %v700 = vld [vmem:[#allocation13 + $0x78] sm:$0xff]
    %v701 = vld [vmem:[%s10] sm:$0x1]
    %v703 = vlaneseq
    %v704 = vshrl.u32 %v703, 7
    %v705 = vsub.s32 0, %v704
    %v706 = vrot.slane %v701, %v705
    %708 = vmatprep.subr.mxu0 0.0
    %709 = vmatpush1.msra.mxu0 %v685
    %710 = vmatprep.subr.mxu0 0.0
    %711 = vmatpush1.msra.mxu0 %v686
    %712 = vmatprep.subr.mxu0 0.0
    %713 = vmatpush1.msra.mxu0 %v687
    %714 = vmatprep.subr.mxu0 0.0
    %715 = vmatpush1.msra.mxu0 %v688
    %716 = vmatprep.subr.mxu0 0.0
    %717 = vmatpush1.msra.mxu0 %v689
    %718 = vmatprep.subr.mxu0 0.0
    %719 = vmatpush1.msra.mxu0 %v690
    %720 = vmatprep.subr.mxu0 0.0
    %721 = vmatpush1.msra.mxu0 %v691
    %722 = vmatprep.subr.mxu0 0.0
    %723 = vmatpush1.msra.mxu0 %v692
    %724 = vmatprep.subr.mxu0 0.0
    %725 = vmatpush1.msra.mxu0 %v693
    %726 = vmatprep.subr.mxu0 0.0
    %727 = vmatpush1.msra.mxu0 %v694
    %728 = vmatprep.subr.mxu0 0.0
    %729 = vmatpush1.msra.mxu0 %v695
    %730 = vmatprep.subr.mxu0 0.0
    %731 = vmatpush1.msra.mxu0 %v696
    %732 = vmatprep.subr.mxu0 0.0
    %733 = vmatpush1.msra.mxu0 %v697
    %734 = vmatprep.subr.mxu0 0.0
    %735 = vmatpush1.msra.mxu0 %v698
    %736 = vmatprep.subr.mxu0 0.0
    %737 = vmatpush1.msra.mxu0 %v699
    %738 = vmatprep.subr.mxu0 0.0
    %739 = vmatpush1.msra.mxu0 %v700
    %740 = vmatprep.subr.mxu0 0.0
    %741 = vmatpush1.msra.mxu0 0.0
    %742 = vmatprep.subr.mxu0 0.0
    %743 = vmatpush1.msra.mxu0 0.0
    %744 = vmatprep.subr.mxu0 0.0
    %745 = vmatpush1.msra.mxu0 0.0
    %746 = vmatprep.subr.mxu0 0.0
    %747 = vmatpush1.msra.mxu0 0.0
    %748 = vmatprep.subr.mxu0 0.0
    %749 = vmatpush1.msra.mxu0 0.0
    %750 = vmatprep.subr.mxu0 0.0
    %751 = vmatpush1.msra.mxu0 0.0
    %752 = vmatprep.subr.mxu0 0.0
    %753 = vmatpush1.msra.mxu0 0.0
    %754 = vmatprep.subr.mxu0 0.0
    %755 = vmatpush1.msra.mxu0 0.0
    %756 = vmatprep.subr.mxu0 0.0
    %757 = vmatpush1.msra.mxu0 0.0
    %758 = vmatprep.subr.mxu0 0.0
    %759 = vmatpush1.msra.mxu0 0.0
    %760 = vmatprep.subr.mxu0 0.0
    %761 = vmatpush1.msra.mxu0 0.0
    %762 = vmatprep.subr.mxu0 0.0
    %763 = vmatpush1.msra.mxu0 0.0
    %764 = vmatprep.subr.mxu0 0.0
    %765 = vmatpush1.msra.mxu0 0.0
    %766 = vmatprep.subr.mxu0 0.0
    %767 = vmatpush1.msra.mxu0 0.0
    %768 = vmatprep.subr.mxu0 0.0
    %769 = vmatpush1.msra.mxu0 0.0
    %770 = vmatprep.subr.mxu0 0.0
    %771 = vmatpush1.msra.mxu0 0.0
    %772 = vmatprep.mubr.f32.mxu0 0.0
    %773 = vmatmul.mubr.f32.gmra.mrb[0].mxu0 %v683
    %v774 = vpop.f32.mrb[0].mxu0
    %v775 = vadd.f32 %v706, %v774
    %v776 = vpop.f32.mrb[0].mxu0
    %777 = vmatprep.mubr.f32.mxu0 0.0
    %778 = vmatmul.mubr.f32.gmra.mrb[0].mxu0 %v684
    %v779 = vpop.f32.mrb[0].mxu0
    %v780 = vadd.f32 %v706, %v779
    %v781 = vpop.f32.mrb[0].mxu0
    %782 = vdwg.mxu0
    %v783 = vmax.f32 %v775, 0.0
    %v784 = vmax.f32 %v780, 0.0
    %785 = vst [vmem:[#allocation2] sm:$0xff] %v783
    %786 = vst [vmem:[#allocation2 + $0x8] sm:$0xff] %v784
    %v787 = vld [vmem:[%s4] sm:$0xff]
    %v788 = vld [vmem:[%s4 + $0x8] sm:$0xff]
    %v789 = vld [vmem:[%s4 + $0x10] sm:$0xff]
    %v790 = vld [vmem:[%s4 + $0x18] sm:$0xff]
    %s791 = scalar_lea.vmem %s5, 8
    %v792 = vld [vmem:[%s791] sm:$0xff]
    %s793 = scalar_lea.vmem %s6, 1
    %v794 = vld [vmem:[%s793] sm:$0x1]
    %v796 = vlaneseq
    %v797 = vshrl.u32 %v796, 7
    %v798 = vsub.s32 0, %v797
    %v799 = vrot.slane %v794, %v798
    %v802 = vsel %vm119, %v787, 0
    %v805 = vsel %vm119, %v788, 0
    %v808 = vsel %vm119, %v789, 0
    %v811 = vsel %vm119, %v790, 0
    %813 = vmatprep.subr.mxu0 0.0
    %814 = vmatpush1.msra.mxu0 %v792
    %815 = vmatprep.subr.mxu0 0.0
    %816 = vmatpush1.msra.mxu0 0.0
    %817 = vmatprep.subr.mxu0 0.0
    %818 = vmatpush1.msra.mxu0 0.0
    %819 = vmatprep.subr.mxu0 0.0
    %820 = vmatpush1.msra.mxu0 0.0
    %821 = vmatprep.subr.mxu0 0.0
    %822 = vmatpush1.msra.mxu0 0.0
    %823 = vmatprep.subr.mxu0 0.0
    %824 = vmatpush1.msra.mxu0 0.0
    %825 = vmatprep.subr.mxu0 0.0
    %826 = vmatpush1.msra.mxu0 0.0
    %827 = vmatprep.subr.mxu0 0.0
    %828 = vmatpush1.msra.mxu0 0.0
    %829 = vmatprep.subr.mxu0 0.0
    %830 = vmatpush1.msra.mxu0 0.0
    %831 = vmatprep.subr.mxu0 0.0
    %832 = vmatpush1.msra.mxu0 0.0
    %833 = vmatprep.subr.mxu0 0.0
    %834 = vmatpush1.msra.mxu0 0.0
    %835 = vmatprep.subr.mxu0 0.0
    %836 = vmatpush1.msra.mxu0 0.0
    %837 = vmatprep.subr.mxu0 0.0
    %838 = vmatpush1.msra.mxu0 0.0
    %839 = vmatprep.subr.mxu0 0.0
    %840 = vmatpush1.msra.mxu0 0.0
    %841 = vmatprep.subr.mxu0 0.0
    %842 = vmatpush1.msra.mxu0 0.0
    %843 = vmatprep.subr.mxu0 0.0
    %844 = vmatpush1.msra.mxu0 0.0
    %845 = vmatprep.subr.mxu0 0.0
    %846 = vmatpush1.msra.mxu0 0.0
    %847 = vmatprep.subr.mxu0 0.0
    %848 = vmatpush1.msra.mxu0 0.0
    %849 = vmatprep.subr.mxu0 0.0
    %850 = vmatpush1.msra.mxu0 0.0
    %851 = vmatprep.subr.mxu0 0.0
    %852 = vmatpush1.msra.mxu0 0.0
    %853 = vmatprep.subr.mxu0 0.0
    %854 = vmatpush1.msra.mxu0 0.0
    %855 = vmatprep.subr.mxu0 0.0
    %856 = vmatpush1.msra.mxu0 0.0
    %857 = vmatprep.subr.mxu0 0.0
    %858 = vmatpush1.msra.mxu0 0.0
    %859 = vmatprep.subr.mxu0 0.0
    %860 = vmatpush1.msra.mxu0 0.0
    %861 = vmatprep.subr.mxu0 0.0
    %862 = vmatpush1.msra.mxu0 0.0
    %863 = vmatprep.subr.mxu0 0.0
    %864 = vmatpush1.msra.mxu0 0.0
    %865 = vmatprep.subr.mxu0 0.0
    %866 = vmatpush1.msra.mxu0 0.0
    %867 = vmatprep.subr.mxu0 0.0
    %868 = vmatpush1.msra.mxu0 0.0
    %869 = vmatprep.subr.mxu0 0.0
    %870 = vmatpush1.msra.mxu0 0.0
    %871 = vmatprep.subr.mxu0 0.0
    %872 = vmatpush1.msra.mxu0 0.0
    %873 = vmatprep.subr.mxu0 0.0
    %874 = vmatpush1.msra.mxu0 0.0
    %875 = vmatprep.subr.mxu0 0.0
    %876 = vmatpush1.msra.mxu0 0.0
    %877 = vmatprep.mubr.f32.mxu0 0.0
    %878 = vmatmul.mubr.f32.gmra.mrb[0].mxu0 %v802
    %v879 = vpop.f32.mrb[0].mxu0
    %v880 = vadd.f32 %v799, %v879
    %v881 = vpop.f32.mrb[0].mxu0
    %882 = vmatprep.mubr.f32.mxu0 0.0
    %883 = vmatmul.mubr.f32.gmra.mrb[0].mxu0 %v805
    %v884 = vpop.f32.mrb[0].mxu0
    %v885 = vadd.f32 %v799, %v884
    %v886 = vpop.f32.mrb[0].mxu0
    %887 = vmatprep.mubr.f32.mxu0 0.0
    %888 = vmatmul.mubr.f32.gmra.mrb[0].mxu0 %v808
    %v889 = vpop.f32.mrb[0].mxu0
    %v890 = vadd.f32 %v799, %v889
    %v891 = vpop.f32.mrb[0].mxu0
    %892 = vmatprep.mubr.f32.mxu0 0.0
    %893 = vmatmul.mubr.f32.gmra.mrb[0].mxu0 %v811
    %v894 = vpop.f32.mrb[0].mxu0
    %v895 = vadd.f32 %v799, %v894
    %v896 = vpop.f32.mrb[0].mxu0
    %897 = vdwg.mxu0
    %898 = vst [vmem:[#allocation3] sm:$0xff] %v880
    %899 = vst [vmem:[#allocation3 + $0x8] sm:$0xff] %v885
    %900 = vst [vmem:[#allocation3 + $0x10] sm:$0xff] %v890
    %901 = vst [vmem:[#allocation3 + $0x18] sm:$0xff] %v895
    %902 = vst [vmem:[#allocation4] sm:$0xff] 0.0
    %903 = vst [vmem:[#allocation4 + $0x8] sm:$0xff] 0.0
    %s904 = sld [smem:[#allocation5]]
    %s905 = sld [smem:[#allocation9]]
    %s906 = scalar_lea.vmem [#allocation2], %s904
    %v907 = vld [vmem:[%s906] sm:$0x1]
    %v908 = vld [vmem:[#allocation3] sm:$0x1]
    %v909 = vadd.f32 %v907, %v908
    %v910 = vmax.f32 %v909, 0.0
    %s911 = scalar_lea.vmem [#allocation4], %s905
    %v912 = vld [vmem:[%s911] sm:$0x1]
    %v913 = vadd.f32 %v912, %v910
    %914 = vst [vmem:[%s911] sm:$0x1] %v913
    %s915 = sld [smem:[#allocation5 + $0x1]]
    %s916 = sld [smem:[#allocation9 + $0x1]]
    %s917 = scalar_lea.vmem [#allocation2], %s915
    %v918 = vld [vmem:[%s917] sm:$0x1]
    %v919 = vld [vmem:[#allocation3 + $0x1] sm:$0x1]
    %v920 = vadd.f32 %v918, %v919
    %v921 = vmax.f32 %v920, 0.0
    %s922 = scalar_lea.vmem [#allocation4], %s916
    %v923 = vld [vmem:[%s922] sm:$0x1]
    %v924 = vadd.f32 %v923, %v921
    %925 = vst [vmem:[%s922] sm:$0x1] %v924
    %s926 = sld [smem:[#allocation5 + $0x2]]
    %s927 = sld [smem:[#allocation9 + $0x2]]
    %s928 = scalar_lea.vmem [#allocation2], %s926
    %v929 = vld [vmem:[%s928] sm:$0x1]
    %v930 = vld [vmem:[#allocation3 + $0x2] sm:$0x1]
    %v931 = vadd.f32 %v929, %v930
    %v932 = vmax.f32 %v931, 0.0
    %s933 = scalar_lea.vmem [#allocation4], %s927
    %v934 = vld [vmem:[%s933] sm:$0x1]
    %v935 = vadd.f32 %v934, %v932
    %936 = vst [vmem:[%s933] sm:$0x1] %v935
    %s937 = sld [smem:[#allocation5 + $0x3]]
    %s938 = sld [smem:[#allocation9 + $0x3]]
    %s939 = scalar_lea.vmem [#allocation2], %s937
    %v940 = vld [vmem:[%s939] sm:$0x1]
    %v941 = vld [vmem:[#allocation3 + $0x3] sm:$0x1]
    %v942 = vadd.f32 %v940, %v941
    %v943 = vmax.f32 %v942, 0.0
    %s944 = scalar_lea.vmem [#allocation4], %s938
    %v945 = vld [vmem:[%s944] sm:$0x1]
    %v946 = vadd.f32 %v945, %v943
    %947 = vst [vmem:[%s944] sm:$0x1] %v946
    %s948 = sld [smem:[#allocation5 + $0x4]]
    %s949 = sld [smem:[#allocation9 + $0x4]]
    %s950 = scalar_lea.vmem [#allocation2], %s948
    %v951 = vld [vmem:[%s950] sm:$0x1]
    %v952 = vld [vmem:[#allocation3 + $0x4] sm:$0x1]
    %v953 = vadd.f32 %v951, %v952
    %v954 = vmax.f32 %v953, 0.0
    %s955 = scalar_lea.vmem [#allocation4], %s949
    %v956 = vld [vmem:[%s955] sm:$0x1]
    %v957 = vadd.f32 %v956, %v954
    %958 = vst [vmem:[%s955] sm:$0x1] %v957
    %s959 = sld [smem:[#allocation5 + $0x5]]
    %s960 = sld [smem:[#allocation9 + $0x5]]
    %s961 = scalar_lea.vmem [#allocation2], %s959
    %v962 = vld [vmem:[%s961] sm:$0x1]
    %v963 = vld [vmem:[#allocation3 + $0x5] sm:$0x1]
    %v964 = vadd.f32 %v962, %v963
    %v965 = vmax.f32 %v964, 0.0
    %s966 = scalar_lea.vmem [#allocation4], %s960
    %v967 = vld [vmem:[%s966] sm:$0x1]
    %v968 = vadd.f32 %v967, %v965
    %969 = vst [vmem:[%s966] sm:$0x1] %v968
    %s970 = sld [smem:[#allocation5 + $0x6]]
    %s971 = sld [smem:[#allocation9 + $0x6]]
    %s972 = scalar_lea.vmem [#allocation2], %s970
    %v973 = vld [vmem:[%s972] sm:$0x1]
    %v974 = vld [vmem:[#allocation3 + $0x6] sm:$0x1]
    %v975 = vadd.f32 %v973, %v974
    %v976 = vmax.f32 %v975, 0.0
    %s977 = scalar_lea.vmem [#allocation4], %s971
    %v978 = vld [vmem:[%s977] sm:$0x1]
    %v979 = vadd.f32 %v978, %v976
    %980 = vst [vmem:[%s977] sm:$0x1] %v979
    %s981 = sld [smem:[#allocation5 + $0x7]]
    %s982 = sld [smem:[#allocation9 + $0x7]]
    %s983 = scalar_lea.vmem [#allocation2], %s981
    %v984 = vld [vmem:[%s983] sm:$0x1]
    %v985 = vld [vmem:[#allocation3 + $0x7] sm:$0x1]
    %v986 = vadd.f32 %v984, %v985
    %v987 = vmax.f32 %v986, 0.0
    %s988 = scalar_lea.vmem [#allocation4], %s982
    %v989 = vld [vmem:[%s988] sm:$0x1]
    %v990 = vadd.f32 %v989, %v987
    %991 = vst [vmem:[%s988] sm:$0x1] %v990
    %s992 = sld [smem:[#allocation5 + $0x8]]
    %s993 = sld [smem:[#allocation9 + $0x8]]
    %s994 = scalar_lea.vmem [#allocation2], %s992
    %v995 = vld [vmem:[%s994] sm:$0x1]
    %v996 = vld [vmem:[#allocation3 + $0x8] sm:$0x1]
    %v997 = vadd.f32 %v995, %v996
    %v998 = vmax.f32 %v997, 0.0
    %s999 = scalar_lea.vmem [#allocation4], %s993
    %v1000 = vld [vmem:[%s999] sm:$0x1]
    %v1001 = vadd.f32 %v1000, %v998
    %1002 = vst [vmem:[%s999] sm:$0x1] %v1001
    %s1003 = sld [smem:[#allocation5 + $0x9]]
    %s1004 = sld [smem:[#allocation9 + $0x9]]
    %s1005 = scalar_lea.vmem [#allocation2], %s1003
    %v1006 = vld [vmem:[%s1005] sm:$0x1]
    %v1007 = vld [vmem:[#allocation3 + $0x9] sm:$0x1]
    %v1008 = vadd.f32 %v1006, %v1007
    %v1009 = vmax.f32 %v1008, 0.0
    %s1010 = scalar_lea.vmem [#allocation4], %s1004
    %v1011 = vld [vmem:[%s1010] sm:$0x1]
    %v1012 = vadd.f32 %v1011, %v1009
    %1013 = vst [vmem:[%s1010] sm:$0x1] %v1012
    %s1014 = sld [smem:[#allocation5 + $0xa]]
    %s1015 = sld [smem:[#allocation9 + $0xa]]
    %s1016 = scalar_lea.vmem [#allocation2], %s1014
    %v1017 = vld [vmem:[%s1016] sm:$0x1]
    %v1018 = vld [vmem:[#allocation3 + $0xa] sm:$0x1]
    %v1019 = vadd.f32 %v1017, %v1018
    %v1020 = vmax.f32 %v1019, 0.0
    %s1021 = scalar_lea.vmem [#allocation4], %s1015
    %v1022 = vld [vmem:[%s1021] sm:$0x1]
    %v1023 = vadd.f32 %v1022, %v1020
    %1024 = vst [vmem:[%s1021] sm:$0x1] %v1023
    %s1025 = sld [smem:[#allocation5 + $0xb]]
    %s1026 = sld [smem:[#allocation9 + $0xb]]
    %s1027 = scalar_lea.vmem [#allocation2], %s1025
    %v1028 = vld [vmem:[%s1027] sm:$0x1]
    %v1029 = vld [vmem:[#allocation3 + $0xb] sm:$0x1]
    %v1030 = vadd.f32 %v1028, %v1029
    %v1031 = vmax.f32 %v1030, 0.0
    %s1032 = scalar_lea.vmem [#allocation4], %s1026
    %v1033 = vld [vmem:[%s1032] sm:$0x1]
    %v1034 = vadd.f32 %v1033, %v1031
    %1035 = vst [vmem:[%s1032] sm:$0x1] %v1034
    %s1036 = sld [smem:[#allocation5 + $0xc]]
    %s1037 = sld [smem:[#allocation9 + $0xc]]
    %s1038 = scalar_lea.vmem [#allocation2], %s1036
    %v1039 = vld [vmem:[%s1038] sm:$0x1]
    %v1040 = vld [vmem:[#allocation3 + $0xc] sm:$0x1]
    %v1041 = vadd.f32 %v1039, %v1040
    %v1042 = vmax.f32 %v1041, 0.0
    %s1043 = scalar_lea.vmem [#allocation4], %s1037
    %v1044 = vld [vmem:[%s1043] sm:$0x1]
    %v1045 = vadd.f32 %v1044, %v1042
    %1046 = vst [vmem:[%s1043] sm:$0x1] %v1045
    %s1047 = sld [smem:[#allocation5 + $0xd]]
    %s1048 = sld [smem:[#allocation9 + $0xd]]
    %s1049 = scalar_lea.vmem [#allocation2], %s1047
    %v1050 = vld [vmem:[%s1049] sm:$0x1]
    %v1051 = vld [vmem:[#allocation3 + $0xd] sm:$0x1]
    %v1052 = vadd.f32 %v1050, %v1051
    %v1053 = vmax.f32 %v1052, 0.0
    %s1054 = scalar_lea.vmem [#allocation4], %s1048
    %v1055 = vld [vmem:[%s1054] sm:$0x1]
    %v1056 = vadd.f32 %v1055, %v1053
    %1057 = vst [vmem:[%s1054] sm:$0x1] %v1056
    %s1058 = sld [smem:[#allocation5 + $0xe]]
    %s1059 = sld [smem:[#allocation9 + $0xe]]
    %s1060 = scalar_lea.vmem [#allocation2], %s1058
    %v1061 = vld [vmem:[%s1060] sm:$0x1]
    %v1062 = vld [vmem:[#allocation3 + $0xe] sm:$0x1]
    %v1063 = vadd.f32 %v1061, %v1062
    %v1064 = vmax.f32 %v1063, 0.0
    %s1065 = scalar_lea.vmem [#allocation4], %s1059
    %v1066 = vld [vmem:[%s1065] sm:$0x1]
    %v1067 = vadd.f32 %v1066, %v1064
    %1068 = vst [vmem:[%s1065] sm:$0x1] %v1067
    %s1069 = sld [smem:[#allocation5 + $0xf]]
    %s1070 = sld [smem:[#allocation9 + $0xf]]
    %s1071 = scalar_lea.vmem [#allocation2], %s1069
    %v1072 = vld [vmem:[%s1071] sm:$0x1]
    %v1073 = vld [vmem:[#allocation3 + $0xf] sm:$0x1]
    %v1074 = vadd.f32 %v1072, %v1073
    %v1075 = vmax.f32 %v1074, 0.0
    %s1076 = scalar_lea.vmem [#allocation4], %s1070
    %v1077 = vld [vmem:[%s1076] sm:$0x1]
    %v1078 = vadd.f32 %v1077, %v1075
    %1079 = vst [vmem:[%s1076] sm:$0x1] %v1078
    %s1080 = sld [smem:[#allocation5 + $0x10]]
    %s1081 = sld [smem:[#allocation9 + $0x10]]
    %s1082 = scalar_lea.vmem [#allocation2], %s1080
    %v1083 = vld [vmem:[%s1082] sm:$0x1]
    %v1084 = vld [vmem:[#allocation3 + $0x10] sm:$0x1]
    %v1085 = vadd.f32 %v1083, %v1084
    %v1086 = vmax.f32 %v1085, 0.0
    %s1087 = scalar_lea.vmem [#allocation4], %s1081
    %v1088 = vld [vmem:[%s1087] sm:$0x1]
    %v1089 = vadd.f32 %v1088, %v1086
    %1090 = vst [vmem:[%s1087] sm:$0x1] %v1089
    %s1091 = sld [smem:[#allocation5 + $0x11]]
    %s1092 = sld [smem:[#allocation9 + $0x11]]
    %s1093 = scalar_lea.vmem [#allocation2], %s1091
    %v1094 = vld [vmem:[%s1093] sm:$0x1]
    %v1095 = vld [vmem:[#allocation3 + $0x11] sm:$0x1]
    %v1096 = vadd.f32 %v1094, %v1095
    %v1097 = vmax.f32 %v1096, 0.0
    %s1098 = scalar_lea.vmem [#allocation4], %s1092
    %v1099 = vld [vmem:[%s1098] sm:$0x1]
    %v1100 = vadd.f32 %v1099, %v1097
    %1101 = vst [vmem:[%s1098] sm:$0x1] %v1100
    %s1102 = sld [smem:[#allocation5 + $0x12]]
    %s1103 = sld [smem:[#allocation9 + $0x12]]
    %s1104 = scalar_lea.vmem [#allocation2], %s1102
    %v1105 = vld [vmem:[%s1104] sm:$0x1]
    %v1106 = vld [vmem:[#allocation3 + $0x12] sm:$0x1]
    %v1107 = vadd.f32 %v1105, %v1106
    %v1108 = vmax.f32 %v1107, 0.0
    %s1109 = scalar_lea.vmem [#allocation4], %s1103
    %v1110 = vld [vmem:[%s1109] sm:$0x1]
    %v1111 = vadd.f32 %v1110, %v1108
    %1112 = vst [vmem:[%s1109] sm:$0x1] %v1111
    %s1113 = sld [smem:[#allocation5 + $0x13]]
    %s1114 = sld [smem:[#allocation9 + $0x13]]
    %s1115 = scalar_lea.vmem [#allocation2], %s1113
    %v1116 = vld [vmem:[%s1115] sm:$0x1]
    %v1117 = vld [vmem:[#allocation3 + $0x13] sm:$0x1]
    %v1118 = vadd.f32 %v1116, %v1117
    %v1119 = vmax.f32 %v1118, 0.0
    %s1120 = scalar_lea.vmem [#allocation4], %s1114
    %v1121 = vld [vmem:[%s1120] sm:$0x1]
    %v1122 = vadd.f32 %v1121, %v1119
    %1123 = vst [vmem:[%s1120] sm:$0x1] %v1122
    %s1124 = sld [smem:[#allocation5 + $0x14]]
    %s1125 = sld [smem:[#allocation9 + $0x14]]
    %s1126 = scalar_lea.vmem [#allocation2], %s1124
    %v1127 = vld [vmem:[%s1126] sm:$0x1]
    %v1128 = vld [vmem:[#allocation3 + $0x14] sm:$0x1]
    %v1129 = vadd.f32 %v1127, %v1128
    %v1130 = vmax.f32 %v1129, 0.0
    %s1131 = scalar_lea.vmem [#allocation4], %s1125
    %v1132 = vld [vmem:[%s1131] sm:$0x1]
    %v1133 = vadd.f32 %v1132, %v1130
    %1134 = vst [vmem:[%s1131] sm:$0x1] %v1133
    %s1135 = sld [smem:[#allocation5 + $0x15]]
    %s1136 = sld [smem:[#allocation9 + $0x15]]
    %s1137 = scalar_lea.vmem [#allocation2], %s1135
    %v1138 = vld [vmem:[%s1137] sm:$0x1]
    %v1139 = vld [vmem:[#allocation3 + $0x15] sm:$0x1]
    %v1140 = vadd.f32 %v1138, %v1139
    %v1141 = vmax.f32 %v1140, 0.0
    %s1142 = scalar_lea.vmem [#allocation4], %s1136
    %v1143 = vld [vmem:[%s1142] sm:$0x1]
    %v1144 = vadd.f32 %v1143, %v1141
    %1145 = vst [vmem:[%s1142] sm:$0x1] %v1144
    %s1146 = sld [smem:[#allocation5 + $0x16]]
    %s1147 = sld [smem:[#allocation9 + $0x16]]
    %s1148 = scalar_lea.vmem [#allocation2], %s1146
    %v1149 = vld [vmem:[%s1148] sm:$0x1]
    %v1150 = vld [vmem:[#allocation3 + $0x16] sm:$0x1]
    %v1151 = vadd.f32 %v1149, %v1150
    %v1152 = vmax.f32 %v1151, 0.0
    %s1153 = scalar_lea.vmem [#allocation4], %s1147
    %v1154 = vld [vmem:[%s1153] sm:$0x1]
    %v1155 = vadd.f32 %v1154, %v1152
    %1156 = vst [vmem:[%s1153] sm:$0x1] %v1155
    %s1157 = sld [smem:[#allocation5 + $0x17]]
    %s1158 = sld [smem:[#allocation9 + $0x17]]
    %s1159 = scalar_lea.vmem [#allocation2], %s1157
    %v1160 = vld [vmem:[%s1159] sm:$0x1]
    %v1161 = vld [vmem:[#allocation3 + $0x17] sm:$0x1]
    %v1162 = vadd.f32 %v1160, %v1161
    %v1163 = vmax.f32 %v1162, 0.0
    %s1164 = scalar_lea.vmem [#allocation4], %s1158
    %v1165 = vld [vmem:[%s1164] sm:$0x1]
    %v1166 = vadd.f32 %v1165, %v1163
    %1167 = vst [vmem:[%s1164] sm:$0x1] %v1166
    %s1168 = sld [smem:[#allocation5 + $0x18]]
    %s1169 = sld [smem:[#allocation9 + $0x18]]
    %s1170 = scalar_lea.vmem [#allocation2], %s1168
    %v1171 = vld [vmem:[%s1170] sm:$0x1]
    %v1172 = vld [vmem:[#allocation3 + $0x18] sm:$0x1]
    %v1173 = vadd.f32 %v1171, %v1172
    %v1174 = vmax.f32 %v1173, 0.0
    %s1175 = scalar_lea.vmem [#allocation4], %s1169
    %v1176 = vld [vmem:[%s1175] sm:$0x1]
    %v1177 = vadd.f32 %v1176, %v1174
    %1178 = vst [vmem:[%s1175] sm:$0x1] %v1177
    %s1179 = sld [smem:[#allocation5 + $0x19]]
    %s1180 = sld [smem:[#allocation9 + $0x19]]
    %s1181 = scalar_lea.vmem [#allocation2], %s1179
    %v1182 = vld [vmem:[%s1181] sm:$0x1]
    %v1183 = vld [vmem:[#allocation3 + $0x19] sm:$0x1]
    %v1184 = vadd.f32 %v1182, %v1183
    %v1185 = vmax.f32 %v1184, 0.0
    %s1186 = scalar_lea.vmem [#allocation4], %s1180
    %v1187 = vld [vmem:[%s1186] sm:$0x1]
    %v1188 = vadd.f32 %v1187, %v1185
    %1189 = vst [vmem:[%s1186] sm:$0x1] %v1188
    %s1190 = sld [smem:[#allocation5 + $0x1a]]
    %s1191 = sld [smem:[#allocation9 + $0x1a]]
    %s1192 = scalar_lea.vmem [#allocation2], %s1190
    %v1193 = vld [vmem:[%s1192] sm:$0x1]
    %v1194 = vld [vmem:[#allocation3 + $0x1a] sm:$0x1]
    %v1195 = vadd.f32 %v1193, %v1194
    %v1196 = vmax.f32 %v1195, 0.0
    %s1197 = scalar_lea.vmem [#allocation4], %s1191
    %v1198 = vld [vmem:[%s1197] sm:$0x1]
    %v1199 = vadd.f32 %v1198, %v1196
    %1200 = vst [vmem:[%s1197] sm:$0x1] %v1199
    %s1201 = sld [smem:[#allocation5 + $0x1b]]
    %s1202 = sld [smem:[#allocation9 + $0x1b]]
    %s1203 = scalar_lea.vmem [#allocation2], %s1201
    %v1204 = vld [vmem:[%s1203] sm:$0x1]
    %v1205 = vld [vmem:[#allocation3 + $0x1b] sm:$0x1]
    %v1206 = vadd.f32 %v1204, %v1205
    %v1207 = vmax.f32 %v1206, 0.0
    %s1208 = scalar_lea.vmem [#allocation4], %s1202
    %v1209 = vld [vmem:[%s1208] sm:$0x1]
    %v1210 = vadd.f32 %v1209, %v1207
    %1211 = vst [vmem:[%s1208] sm:$0x1] %v1210
    %s1212 = sld [smem:[#allocation5 + $0x1c]]
    %s1213 = sld [smem:[#allocation9 + $0x1c]]
    %s1214 = scalar_lea.vmem [#allocation2], %s1212
    %v1215 = vld [vmem:[%s1214] sm:$0x1]
    %v1216 = vld [vmem:[#allocation3 + $0x1c] sm:$0x1]
    %v1217 = vadd.f32 %v1215, %v1216
    %v1218 = vmax.f32 %v1217, 0.0
    %s1219 = scalar_lea.vmem [#allocation4], %s1213
    %v1220 = vld [vmem:[%s1219] sm:$0x1]
    %v1221 = vadd.f32 %v1220, %v1218
    %1222 = vst [vmem:[%s1219] sm:$0x1] %v1221
    %s1223 = sld [smem:[#allocation5 + $0x1d]]
    %s1224 = sld [smem:[#allocation9 + $0x1d]]
    %s1225 = scalar_lea.vmem [#allocation2], %s1223
    %v1226 = vld [vmem:[%s1225] sm:$0x1]
    %v1227 = vld [vmem:[#allocation3 + $0x1d] sm:$0x1]
    %v1228 = vadd.f32 %v1226, %v1227
    %v1229 = vmax.f32 %v1228, 0.0
    %s1230 = scalar_lea.vmem [#allocation4], %s1224
    %v1231 = vld [vmem:[%s1230] sm:$0x1]
    %v1232 = vadd.f32 %v1231, %v1229
    %1233 = vst [vmem:[%s1230] sm:$0x1] %v1232
    %s1234 = sld [smem:[#allocation5 + $0x1e]]
    %s1235 = sld [smem:[#allocation9 + $0x1e]]
    %s1236 = scalar_lea.vmem [#allocation2], %s1234
    %v1237 = vld [vmem:[%s1236] sm:$0x1]
    %v1238 = vld [vmem:[#allocation3 + $0x1e] sm:$0x1]
    %v1239 = vadd.f32 %v1237, %v1238
    %v1240 = vmax.f32 %v1239, 0.0
    %s1241 = scalar_lea.vmem [#allocation4], %s1235
    %v1242 = vld [vmem:[%s1241] sm:$0x1]
    %v1243 = vadd.f32 %v1242, %v1240
    %1244 = vst [vmem:[%s1241] sm:$0x1] %v1243
    %s1245 = sld [smem:[#allocation5 + $0x1f]]
    %s1246 = sld [smem:[#allocation9 + $0x1f]]
    %s1247 = scalar_lea.vmem [#allocation2], %s1245
    %v1248 = vld [vmem:[%s1247] sm:$0x1]
    %v1249 = vld [vmem:[#allocation3 + $0x1f] sm:$0x1]
    %v1250 = vadd.f32 %v1248, %v1249
    %v1251 = vmax.f32 %v1250, 0.0
    %s1252 = scalar_lea.vmem [#allocation4], %s1246
    %v1253 = vld [vmem:[%s1252] sm:$0x1]
    %v1254 = vadd.f32 %v1253, %v1251
    %1255 = vst [vmem:[%s1252] sm:$0x1] %v1254
    %s1256 = sld [smem:[#allocation11 + $0x1]]
    %v1257 = vld [vmem:[#allocation2] sm:$0xff]
    %v1258 = vld [vmem:[#allocation2 + $0x8] sm:$0xff]
    %v1259 = vstv %s1256
    %v1260 = vmul.f32 %v1259, %v1257
    %v1261 = vmul.f32 %v1259, %v1258
    %v1262 = vld [vmem:[#allocation4] sm:$0xff]
    %v1263 = vld [vmem:[#allocation4 + $0x8] sm:$0xff]
    %v1264 = vadd.f32 %v1260, %v1262
    %v1265 = vadd.f32 %v1261, %v1263
    %s1266 = scalar_lea.vmem [#allocation12], 128
    %v1267 = vld [vmem:[%s1266] sm:$0xff]
    %v1268 = vld [vmem:[%s1266 + $0x8] sm:$0xff]
    %v1269 = vld [vmem:[%s1266 + $0x10] sm:$0xff]
    %v1270 = vld [vmem:[%s1266 + $0x18] sm:$0xff]
    %v1271 = vld [vmem:[%s1266 + $0x20] sm:$0xff]
    %v1272 = vld [vmem:[%s1266 + $0x28] sm:$0xff]
    %v1273 = vld [vmem:[%s1266 + $0x30] sm:$0xff]
    %v1274 = vld [vmem:[%s1266 + $0x38] sm:$0xff]
    %v1275 = vld [vmem:[%s1266 + $0x40] sm:$0xff]
    %v1276 = vld [vmem:[%s1266 + $0x48] sm:$0xff]
    %v1277 = vld [vmem:[%s1266 + $0x50] sm:$0xff]
    %v1278 = vld [vmem:[%s1266 + $0x58] sm:$0xff]
    %v1279 = vld [vmem:[%s1266 + $0x60] sm:$0xff]
    %v1280 = vld [vmem:[%s1266 + $0x68] sm:$0xff]
    %v1281 = vld [vmem:[%s1266 + $0x70] sm:$0xff]
    %v1282 = vld [vmem:[%s1266 + $0x78] sm:$0xff]
    %s1283 = scalar_lea.vmem %s8, 1
    %v1284 = vld [vmem:[%s1283] sm:$0x1]
    %v1286 = vlaneseq
    %v1287 = vshrl.u32 %v1286, 7
    %v1288 = vsub.s32 0, %v1287
    %v1289 = vrot.slane %v1284, %v1288
    %1291 = vmatprep.subr.mxu0 0.0
    %1292 = vmatpush1.msra.mxu0 %v1267
    %1293 = vmatprep.subr.mxu0 0.0
    %1294 = vmatpush1.msra.mxu0 %v1268
    %1295 = vmatprep.subr.mxu0 0.0
    %1296 = vmatpush1.msra.mxu0 %v1269
    %1297 = vmatprep.subr.mxu0 0.0
    %1298 = vmatpush1.msra.mxu0 %v1270
    %1299 = vmatprep.subr.mxu0 0.0
    %1300 = vmatpush1.msra.mxu0 %v1271
    %1301 = vmatprep.subr.mxu0 0.0
    %1302 = vmatpush1.msra.mxu0 %v1272
    %1303 = vmatprep.subr.mxu0 0.0
    %1304 = vmatpush1.msra.mxu0 %v1273
    %1305 = vmatprep.subr.mxu0 0.0
    %1306 = vmatpush1.msra.mxu0 %v1274
    %1307 = vmatprep.subr.mxu0 0.0
    %1308 = vmatpush1.msra.mxu0 %v1275
    %1309 = vmatprep.subr.mxu0 0.0
    %1310 = vmatpush1.msra.mxu0 %v1276
    %1311 = vmatprep.subr.mxu0 0.0
    %1312 = vmatpush1.msra.mxu0 %v1277
    %1313 = vmatprep.subr.mxu0 0.0
    %1314 = vmatpush1.msra.mxu0 %v1278
    %1315 = vmatprep.subr.mxu0 0.0
    %1316 = vmatpush1.msra.mxu0 %v1279
    %1317 = vmatprep.subr.mxu0 0.0
    %1318 = vmatpush1.msra.mxu0 %v1280
    %1319 = vmatprep.subr.mxu0 0.0
    %1320 = vmatpush1.msra.mxu0 %v1281
    %1321 = vmatprep.subr.mxu0 0.0
    %1322 = vmatpush1.msra.mxu0 %v1282
    %1323 = vmatprep.subr.mxu0 0.0
    %1324 = vmatpush1.msra.mxu0 0.0
    %1325 = vmatprep.subr.mxu0 0.0
    %1326 = vmatpush1.msra.mxu0 0.0
    %1327 = vmatprep.subr.mxu0 0.0
    %1328 = vmatpush1.msra.mxu0 0.0
    %1329 = vmatprep.subr.mxu0 0.0
    %1330 = vmatpush1.msra.mxu0 0.0
    %1331 = vmatprep.subr.mxu0 0.0
    %1332 = vmatpush1.msra.mxu0 0.0
    %1333 = vmatprep.subr.mxu0 0.0
    %1334 = vmatpush1.msra.mxu0 0.0
    %1335 = vmatprep.subr.mxu0 0.0
    %1336 = vmatpush1.msra.mxu0 0.0
    %1337 = vmatprep.subr.mxu0 0.0
    %1338 = vmatpush1.msra.mxu0 0.0
    %1339 = vmatprep.subr.mxu0 0.0
    %1340 = vmatpush1.msra.mxu0 0.0
    %1341 = vmatprep.subr.mxu0 0.0
    %1342 = vmatpush1.msra.mxu0 0.0
    %1343 = vmatprep.subr.mxu0 0.0
    %1344 = vmatpush1.msra.mxu0 0.0
    %1345 = vmatprep.subr.mxu0 0.0
    %1346 = vmatpush1.msra.mxu0 0.0
    %1347 = vmatprep.subr.mxu0 0.0
    %1348 = vmatpush1.msra.mxu0 0.0
    %1349 = vmatprep.subr.mxu0 0.0
    %1350 = vmatpush1.msra.mxu0 0.0
    %1351 = vmatprep.subr.mxu0 0.0
    %1352 = vmatpush1.msra.mxu0 0.0
    %1353 = vmatprep.subr.mxu0 0.0
    %1354 = vmatpush1.msra.mxu0 0.0
    %1355 = vmatprep.mubr.f32.mxu0 0.0
    %1356 = vmatmul.mubr.f32.gmra.mrb[0].mxu0 %v1264
    %v1357 = vpop.f32.mrb[0].mxu0
    %v1358 = vadd.f32 %v1289, %v1357
    %v1359 = vpop.f32.mrb[0].mxu0
    %1360 = vmatprep.mubr.f32.mxu0 0.0
    %1361 = vmatmul.mubr.f32.gmra.mrb[0].mxu0 %v1265
    %v1362 = vpop.f32.mrb[0].mxu0
    %v1363 = vadd.f32 %v1289, %v1362
    %v1364 = vpop.f32.mrb[0].mxu0
    %1365 = vdwg.mxu0
    %v1366 = vmax.f32 %v1358, 0.0
    %v1367 = vmax.f32 %v1363, 0.0
    %s1368 = scalar_lea.vmem [#allocation13], 128
    %v1369 = vld [vmem:[%s1368] sm:$0xff]
    %v1370 = vld [vmem:[%s1368 + $0x8] sm:$0xff]
    %v1371 = vld [vmem:[%s1368 + $0x10] sm:$0xff]
    %v1372 = vld [vmem:[%s1368 + $0x18] sm:$0xff]
    %v1373 = vld [vmem:[%s1368 + $0x20] sm:$0xff]
    %v1374 = vld [vmem:[%s1368 + $0x28] sm:$0xff]
    %v1375 = vld [vmem:[%s1368 + $0x30] sm:$0xff]
    %v1376 = vld [vmem:[%s1368 + $0x38] sm:$0xff]
    %v1377 = vld [vmem:[%s1368 + $0x40] sm:$0xff]
    %v1378 = vld [vmem:[%s1368 + $0x48] sm:$0xff]
    %v1379 = vld [vmem:[%s1368 + $0x50] sm:$0xff]
    %v1380 = vld [vmem:[%s1368 + $0x58] sm:$0xff]
    %v1381 = vld [vmem:[%s1368 + $0x60] sm:$0xff]
    %v1382 = vld [vmem:[%s1368 + $0x68] sm:$0xff]
    %v1383 = vld [vmem:[%s1368 + $0x70] sm:$0xff]
    %v1384 = vld [vmem:[%s1368 + $0x78] sm:$0xff]
    %s1385 = scalar_lea.vmem %s10, 1
    %v1386 = vld [vmem:[%s1385] sm:$0x1]
    %v1388 = vlaneseq
    %v1389 = vshrl.u32 %v1388, 7
    %v1390 = vsub.s32 0, %v1389
    %v1391 = vrot.slane %v1386, %v1390
    %1393 = vmatprep.subr.mxu0 0.0
    %1394 = vmatpush1.msra.mxu0 %v1369
    %1395 = vmatprep.subr.mxu0 0.0
    %1396 = vmatpush1.msra.mxu0 %v1370
    %1397 = vmatprep.subr.mxu0 0.0
    %1398 = vmatpush1.msra.mxu0 %v1371
    %1399 = vmatprep.subr.mxu0 0.0
    %1400 = vmatpush1.msra.mxu0 %v1372
    %1401 = vmatprep.subr.mxu0 0.0
    %1402 = vmatpush1.msra.mxu0 %v1373
    %1403 = vmatprep.subr.mxu0 0.0
    %1404 = vmatpush1.msra.mxu0 %v1374
    %1405 = vmatprep.subr.mxu0 0.0
    %1406 = vmatpush1.msra.mxu0 %v1375
    %1407 = vmatprep.subr.mxu0 0.0
    %1408 = vmatpush1.msra.mxu0 %v1376
    %1409 = vmatprep.subr.mxu0 0.0
    %1410 = vmatpush1.msra.mxu0 %v1377
    %1411 = vmatprep.subr.mxu0 0.0
    %1412 = vmatpush1.msra.mxu0 %v1378
    %1413 = vmatprep.subr.mxu0 0.0
    %1414 = vmatpush1.msra.mxu0 %v1379
    %1415 = vmatprep.subr.mxu0 0.0
    %1416 = vmatpush1.msra.mxu0 %v1380
    %1417 = vmatprep.subr.mxu0 0.0
    %1418 = vmatpush1.msra.mxu0 %v1381
    %1419 = vmatprep.subr.mxu0 0.0
    %1420 = vmatpush1.msra.mxu0 %v1382
    %1421 = vmatprep.subr.mxu0 0.0
    %1422 = vmatpush1.msra.mxu0 %v1383
    %1423 = vmatprep.subr.mxu0 0.0
    %1424 = vmatpush1.msra.mxu0 %v1384
    %1425 = vmatprep.subr.mxu0 0.0
    %1426 = vmatpush1.msra.mxu0 0.0
    %1427 = vmatprep.subr.mxu0 0.0
    %1428 = vmatpush1.msra.mxu0 0.0
    %1429 = vmatprep.subr.mxu0 0.0
    %1430 = vmatpush1.msra.mxu0 0.0
    %1431 = vmatprep.subr.mxu0 0.0
    %1432 = vmatpush1.msra.mxu0 0.0
    %1433 = vmatprep.subr.mxu0 0.0
    %1434 = vmatpush1.msra.mxu0 0.0
    %1435 = vmatprep.subr.mxu0 0.0
    %1436 = vmatpush1.msra.mxu0 0.0
    %1437 = vmatprep.subr.mxu0 0.0
    %1438 = vmatpush1.msra.mxu0 0.0
    %1439 = vmatprep.subr.mxu0 0.0
    %1440 = vmatpush1.msra.mxu0 0.0
    %1441 = vmatprep.subr.mxu0 0.0
    %1442 = vmatpush1.msra.mxu0 0.0
    %1443 = vmatprep.subr.mxu0 0.0
    %1444 = vmatpush1.msra.mxu0 0.0
    %1445 = vmatprep.subr.mxu0 0.0
    %1446 = vmatpush1.msra.mxu0 0.0
    %1447 = vmatprep.subr.mxu0 0.0
    %1448 = vmatpush1.msra.mxu0 0.0
    %1449 = vmatprep.subr.mxu0 0.0
    %1450 = vmatpush1.msra.mxu0 0.0
    %1451 = vmatprep.subr.mxu0 0.0
    %1452 = vmatpush1.msra.mxu0 0.0
    %1453 = vmatprep.subr.mxu0 0.0
    %1454 = vmatpush1.msra.mxu0 0.0
    %1455 = vmatprep.subr.mxu0 0.0
    %1456 = vmatpush1.msra.mxu0 0.0
    %1457 = vmatprep.mubr.f32.mxu0 0.0
    %1458 = vmatmul.mubr.f32.gmra.mrb[0].mxu0 %v1366
    %v1459 = vpop.f32.mrb[0].mxu0
    %v1460 = vadd.f32 %v1391, %v1459
    %v1461 = vpop.f32.mrb[0].mxu0
    %1462 = vmatprep.mubr.f32.mxu0 0.0
    %1463 = vmatmul.mubr.f32.gmra.mrb[0].mxu0 %v1367
    %v1464 = vpop.f32.mrb[0].mxu0
    %v1465 = vadd.f32 %v1391, %v1464
    %v1466 = vpop.f32.mrb[0].mxu0
    %1467 = vdwg.mxu0
    %1468 = vst [vmem:[#allocation2] sm:$0xff] %v1460
    %1469 = vst [vmem:[#allocation2 + $0x8] sm:$0xff] %v1465
    %v1470 = vld [vmem:[#allocation2] sm:$0xff]
    %v1471 = vld [vmem:[#allocation2 + $0x8] sm:$0xff]
    %1472 = vst [vmem:[#allocation15] sm:$0xff] %v1470
    %1473 = vst [vmem:[#allocation15 + $0x8] sm:$0xff] %v1471
    // Predicated region
    $region66: #{tpu_custom_call.1} parent=1 // pred_check
      _
    $region67: #{tpu_custom_call.1} parent=1 // pred_check_branch
      %1475 = sbr.rel (0) target = $region69
    $region68: #{tpu_custom_call.1} parent=1 // pred_region
      %s1477 = ssub.s32 256, 256
      %1478 = vsyncadd [#allocation7], %s1477
      %s1479 = sshll.u32 [#allocation15], 4
      %s1480 = int_to_ptr.vmem [resolvable:$true] %s1479
      %1485 = dma.vmem_to_hbm [thread:$0]  %s1480, 256, %s11, [#allocation7], 128, 128, 8
    $region69: #{tpu_custom_call.1} parent=1 // pred_fallthru
      _
    // Predicated region
    $region70: #{tpu_custom_call.1} parent=1 // pred_check
      _
    $region71: #{tpu_custom_call.1} parent=1 // pred_check_branch
      %1487 = sbr.rel (0) target = $region73
    $region72: #{tpu_custom_call.1} parent=1 // pred_region
      %1488 = dma.done [#allocation7], 256
    $region73: #{tpu_custom_call.1} parent=1 // pred_fallthru
      _
    %1489 = vsyncpa [#allocation6], 1
    %1490 = vsyncpa [#allocation14], 1
    %1491 = vsyncpa [#allocation7], 1
    %1492 = vsyncpa [#allocation8], 1
    %1493 = vsyncpa [#allocation10], 1

</llo_original>
